<compile_context>
chip_gen: v6e
topology: v6e:2x2x1
jax: 0.10.0
libtpu: 0.0.40
codegen_flags: <defaults>
</compile_context>

<pallas_src>
import functools

import jax
import jax.numpy as jnp
import numpy as np
from jax.experimental import pallas as pl
from jax.experimental.pallas import tpu as pltpu

EPS = 1e-5


# ---------------------------------------------------------------------------
# In-kernel helpers
# ---------------------------------------------------------------------------
def _shift_lanes(x, off):
    """Cyclic shift along the last (lane) axis: result[:, m] = x[:, m + off]."""
    if off == 0:
        return x
    return jnp.concatenate([x[:, off:], x[:, :off]], axis=1)


def _conv3x3_planar(xp, w_ref, mask_ref, *, dhw):
    """3x3x3 'SAME' conv as a single tap-folded MXU matmul.

    xp:       (Cin, D*H*W) activations (matmul dtype)
    w_ref:    (Cout, 27*Cin) folded weights, taps ordered (kd, kh, kw)
    mask_ref: (27, D*H*W) per-tap validity masks (implements zero padding)
    returns   (Cout, D*H*W) float32
    """
    D, H, W = dhw
    rows = []
    t = 0
    for kd in (-1, 0, 1):
        for kh in (-1, 0, 1):
            for kw in (-1, 0, 1):
                off = kd * H * W + kh * W + kw
                shifted = _shift_lanes(xp, off)
                if off != 0:
                    shifted = shifted * mask_ref[t:t + 1, :]
                rows.append(shifted)
                t += 1
    patches = jnp.concatenate(rows, axis=0)            # (27*Cin, DHW)
    return jnp.dot(w_ref[...], patches, preferred_element_type=jnp.float32)


def _partial_stats(acc):
    """Per-channel partial sum / sum-of-squares of a (C, DHW) f32 slab."""
    s = jnp.sum(acc, axis=1, keepdims=True)
    sq = jnp.sum(acc * acc, axis=1, keepdims=True)
    return jnp.concatenate([s, sq], axis=1)            # (C, 2)


# ---------------------------------------------------------------------------
# Kernels
# ---------------------------------------------------------------------------
def _conv_stats_kernel(x_ref, w_ref, mask_ref, y_ref, stats_ref, *, dhw):
    """y = conv3x3(x) (bias dropped: exact no-op under BN); + partial stats."""
    xp = x_ref[0].astype(w_ref.dtype)
    acc = _conv3x3_planar(xp, w_ref, mask_ref, dhw=dhw)
    stats_ref[...] = _partial_stats(acc)[None]
    y_ref[...] = acc[None].astype(y_ref.dtype)


def _bn_relu_conv_stats_kernel(y1_ref, scale_ref, shift_ref, w_ref, mask_ref,
                               y2_ref, stats_ref, *, dhw):
    """y2 = conv3x3(relu(scale * y1 + shift)); + partial stats of y2."""
    out1 = jnp.maximum(
        y1_ref[0].astype(jnp.float32) * scale_ref[...] + shift_ref[...], 0.0)
    acc = _conv3x3_planar(out1.astype(w_ref.dtype), w_ref, mask_ref, dhw=dhw)
    stats_ref[...] = _partial_stats(acc)[None]
    y2_ref[...] = acc[None].astype(y2_ref.dtype)


def _bn_add_relu_kernel(y2_ref, x_ref, scale_ref, shift_ref, o_ref):
    """out = relu(scale * y2 + shift + x)  (in_ch == out_ch path)."""
    out = (y2_ref[0].astype(jnp.float32) * scale_ref[...] + shift_ref[...]
           + x_ref[0].astype(jnp.float32))
    o_ref[...] = jnp.maximum(out, 0.0)[None].astype(o_ref.dtype)


def _bn_add_relu_proj_kernel(y2_ref, x_ref, scale_ref, shift_ref, w3_ref,
                             b3_ref, o_ref):
    """out = conv1x1(relu(scale * y2 + shift + x))  (in_ch != out_ch path)."""
    out = jnp.maximum(
        y2_ref[0].astype(jnp.float32) * scale_ref[...] + shift_ref[...]
        + x_ref[0].astype(jnp.float32), 0.0)
    proj = jnp.dot(w3_ref[...], out, preferred_element_type=jnp.float32)
    o_ref[...] = (proj + b3_ref[...])[None].astype(o_ref.dtype)


# ---------------------------------------------------------------------------
# Host-side helpers
# ---------------------------------------------------------------------------
def _make_tap_masks(D, H, W):
    """(27, D*H*W) {0,1} masks; tap t valid where (d+kd,h+kh,w+kw) in-bounds."""
    d = np.arange(D)[:, None, None]
    h = np.arange(H)[None, :, None]
    w = np.arange(W)[None, None, :]
    masks = []
    for kd in (-1, 0, 1):
        for kh in (-1, 0, 1):
            for kw in (-1, 0, 1):
                m = ((0 <= d + kd) & (d + kd < D) &
                     (0 <= h + kh) & (h + kh < H) &
                     (0 <= w + kw) & (w + kw < W))
                masks.append(m.reshape(-1))
    return np.stack(masks).astype(np.float32)


def _bn_affine(partial_stats, gamma, beta, count):
    """Fold global batch statistics into per-channel (scale, shift), f32."""
    s = jnp.sum(partial_stats, axis=0)                 # (C, 2)
    mean = s[:, 0] / count
    var = s[:, 1] / count - mean * mean                # biased (training mode)
    scale = gamma * jax.lax.rsqrt(var + EPS)
    shift = beta - mean * scale
    return scale.reshape(-1, 1), shift.reshape(-1, 1)


# ---------------------------------------------------------------------------
# Public entry point
# ---------------------------------------------------------------------------
def resblock3d(x, params, in_ch, out_ch, *, conv_dtype=jnp.bfloat16):
    """x: (N, in_ch, D, H, W) float32 (NCDHW) -> (N, out_ch, D, H, W) float32."""
    N, C, D, H, W = x.shape
    assert C == in_ch
    DHW = D * H * W
    count = N * DHW

    xf = x.reshape(N, in_ch, DHW)                      # metadata-only reshape
    masks = jnp.asarray(_make_tap_masks(D, H, W), dtype=conv_dtype)
    w1 = params["w1"].reshape(27 * in_ch, in_ch).T.astype(conv_dtype)
    w2 = params["w2"].reshape(27 * in_ch, in_ch).T.astype(conv_dtype)

    cparams = pltpu.CompilerParams(
        dimension_semantics=("parallel",),             # megacore-shardable (v7x)
        vmem_limit_bytes=32 * 1024 * 1024)

    def act_spec(c):
        return pl.BlockSpec((1, c, DHW), lambda n: (n, 0, 0))

    def const_spec(shape):
        return pl.BlockSpec(shape, lambda n: (0,) * len(shape))

    stats_spec = pl.BlockSpec((1, in_ch, 2), lambda n: (n, 0, 0))
    stats_shape = jax.ShapeDtypeStruct((N, in_ch, 2), jnp.float32)
    act_shape = jax.ShapeDtypeStruct((N, in_ch, DHW), conv_dtype)

    # TODO(synk): for volumes whose per-sample (C, D*H*W) slab no longer fits
    # VMEM, add a D-tiled grid axis with halo exchange via manual
    # pltpu.make_async_copy double buffering.

    # Pass 1: y1 = conv1(x)  (+ per-sample partial BN1 statistics)
    y1, st1 = pl.pallas_call(
        functools.partial(_conv_stats_kernel, dhw=(D, H, W)),
        grid=(N,),
        in_specs=[act_spec(in_ch), const_spec(w1.shape), const_spec(masks.shape)],
        out_specs=(act_spec(in_ch), stats_spec),
        out_shape=(act_shape, stats_shape),
        compiler_params=cparams,
    )(xf, w1, masks)
    s1, t1 = _bn_affine(st1, params["g1"], params["be1"], count)

    # Pass 2: y2 = conv2(relu(bn1(y1)))  (+ partial BN2 statistics)
    y2, st2 = pl.pallas_call(
        functools.partial(_bn_relu_conv_stats_kernel, dhw=(D, H, W)),
        grid=(N,),
        in_specs=[act_spec(in_ch), const_spec((in_ch, 1)), const_spec((in_ch, 1)),
                  const_spec(w2.shape), const_spec(masks.shape)],
        out_specs=(act_spec(in_ch), stats_spec),
        out_shape=(act_shape, stats_shape),
        compiler_params=cparams,
    )(y1, s1, t1, w2, masks)
    s2, t2 = _bn_affine(st2, params["g2"], params["be2"], count)

    # Pass 3: out = relu(bn2(y2) + x)  (+ optional 1x1x1 projection)
    if in_ch != out_ch:
        w3t = params["w3"].T.astype(jnp.float32)       # (out_ch, in_ch)
        b3 = params["b3"].reshape(out_ch, 1).astype(jnp.float32)
        out = pl.pallas_call(
            _bn_add_relu_proj_kernel,
            grid=(N,),
            in_specs=[act_spec(in_ch), act_spec(in_ch),
                      const_spec((in_ch, 1)), const_spec((in_ch, 1)),
                      const_spec((out_ch, in_ch)), const_spec((out_ch, 1))],
            out_specs=act_spec(out_ch),
            out_shape=jax.ShapeDtypeStruct((N, out_ch, DHW), jnp.float32),
            compiler_params=cparams,
        )(y2, xf, s2, t2, w3t, b3)
    else:
        out = pl.pallas_call(
            _bn_add_relu_kernel,
            grid=(N,),
            in_specs=[act_spec(in_ch), act_spec(in_ch),
                      const_spec((in_ch, 1)), const_spec((in_ch, 1))],
            out_specs=act_spec(in_ch),
            out_shape=jax.ShapeDtypeStruct((N, in_ch, DHW), jnp.float32),
            compiler_params=cparams,
        )(y2, xf, s2, t2)
    return out.reshape(N, out_ch, D, H, W)


# ---------------------------------------------------------------------------
# Pure-JAX reference (mirrors the PyTorch module, NCDHW)
# ---------------------------------------------------------------------------
def resblock3d_ref(x, p, in_ch, out_ch):
    dn = ("NCDHW", "DHWIO", "NCDHW")

    def conv3(v, w, b):
        y = jax.lax.conv_general_dilated(v, w, (1, 1, 1), "SAME",
                                         dimension_numbers=dn)
        return y + b[None, :, None, None, None]

    def bn(y, g, be):
        m = jnp.mean(y, axis=(0, 2, 3, 4), keepdims=True)
        v = jnp.mean((y - m) ** 2, axis=(0, 2, 3, 4), keepdims=True)
        return ((y - m) * jax.lax.rsqrt(v + EPS) * g[None, :, None, None, None]
                + be[None, :, None, None, None])

    out = jax.nn.relu(bn(conv3(x, p["w1"], p["b1"]), p["g1"], p["be1"]))
    out = bn(conv3(out, p["w2"], p["b2"]), p["g2"], p["be2"])
    out = jax.nn.relu(out + x)
    if in_ch != out_ch:
        out = (jnp.einsum("ncdhw,co->nodhw", out, p["w3"])
               + p["b3"][None, :, None, None, None])
    return out


def init_params(key, in_ch, out_ch):
    ks = jax.random.split(key, 10)
    nrm = lambda k, s: 0.1 * jax.random.normal(k, s, dtype=jnp.float32)
    return {
        # conv weights stored as (kd, kh, kw, Cin, Cout)  (DHWIO)
        "w1": nrm(ks[0], (3, 3, 3, in_ch, in_ch)),
        "b1": nrm(ks[1], (in_ch,)),
        "g1": 1.0 + nrm(ks[2], (in_ch,)),
        "be1": nrm(ks[3], (in_ch,)),
        "w2": nrm(ks[4], (3, 3, 3, in_ch, in_ch)),
        "b2": nrm(ks[5], (in_ch,)),
        "g2": 1.0 + nrm(ks[6], (in_ch,)),
        "be2": nrm(ks[7], (in_ch,)),
        # 1x1x1 projection stored as (Cin, Cout)
        "w3": nrm(ks[8], (in_ch, out_ch)),
        "b3": nrm(ks[9], (out_ch,)),
    }


if __name__ == "__main__":
    N, D, H, W = 2, 8, 8, 8
    in_ch, out_ch = 4, 8

    key = jax.random.PRNGKey(0)
    kx, kp, kp2 = jax.random.split(key, 3)
    x = jax.random.normal(kx, (N, in_ch, D, H, W), dtype=jnp.float32)
    params = init_params(kp, in_ch, out_ch)

    ref = jax.block_until_ready(resblock3d_ref(x, params, in_ch, out_ch))

    # Exact path (f32 MXU operands): tight check against the reference.
    run_f32 = jax.jit(functools.partial(resblock3d, in_ch=in_ch, out_ch=out_ch,
                                        conv_dtype=jnp.float32))
    out_f32 = jax.block_until_ready(run_f32(x, params))
    assert out_f32.shape == (N, out_ch, D, H, W), out_f32.shape
    err = float(jnp.max(jnp.abs(out_f32 - ref)))
    assert err < 1e-3, err

    # Default path (bf16 MXU operands, f32 accumulation / BN stats): loose check.
    run_bf16 = jax.jit(functools.partial(resblock3d, in_ch=in_ch, out_ch=out_ch))
    out_bf16 = jax.block_until_ready(run_bf16(x, params))
    err_bf = float(jnp.max(jnp.abs(out_bf16 - ref)))
    assert err_bf < 8e-2, err_bf

    # Identity-channel path (no 1x1 projection), exact operands.
    params2 = init_params(kp2, out_ch, out_ch)
    x2 = jax.random.normal(kx, (N, out_ch, D, H, W), dtype=jnp.float32)
    ref2 = jax.block_until_ready(resblock3d_ref(x2, params2, out_ch, out_ch))
    run2 = jax.jit(functools.partial(resblock3d, in_ch=out_ch, out_ch=out_ch,
                                     conv_dtype=jnp.float32))
    out2 = jax.block_until_ready(run2(x2, params2))
    err2 = float(jnp.max(jnp.abs(out2 - ref2)))
    assert err2 < 1e-3, err2

    print("KERNEL_OK")
</pallas_src>

<mosaic_0001>
module attributes {stable_mosaic.version = 11 : i64} {
  func.func @_conv_stats_kernel(%arg0: i32, %arg1: memref<1x4x512xf32, #tpu.memory_space<vmem>>, %arg2: memref<4x108xf32, #tpu.memory_space<vmem>>, %arg3: memref<27x512xf32, #tpu.memory_space<vmem>>, %arg4: memref<1x4x512xf32, #tpu.memory_space<vmem>>, %arg5: memref<1x4x2xf32, #tpu.memory_space<vmem>>) attributes {dimension_semantics = [#tpu.dimension_semantics<parallel>], iteration_bounds = array<i64: 2>, scalar_prefetch = 0 : i64, scratch_operands = 0 : i64, tpu.core_type = #tpu.core_type<tc>, window_params = [{transform_indices = @transform_0, window_bounds = array<i64: 1, 4, 512>}, {pipeline_mode = #tpu.pipeline_mode<synchronous>, transform_indices = @transform_1, window_bounds = array<i64: 4, 108>}, {pipeline_mode = #tpu.pipeline_mode<synchronous>, transform_indices = @transform_2, window_bounds = array<i64: 27, 512>}, {transform_indices = @transform_3, window_bounds = array<i64: 1, 4, 512>}, {transform_indices = @transform_4, window_bounds = array<i64: 1, 4, 2>}]} {
    %c0 = arith.constant 0 : index
    %c0_0 = arith.constant 0 : index
    %c0_1 = arith.constant 0 : index
    %0 = vector.load %arg1[%c0, %c0_0, %c0_1] : memref<1x4x512xf32, #tpu.memory_space<vmem>>, vector<1x4x512xf32>
    %1 = vector.shape_cast %0 : vector<1x4x512xf32> to vector<4x512xf32>
    %2 = vector.extract_strided_slice %1 {offsets = [0, 439], sizes = [4, 73], strides = [1, 1]} : vector<4x512xf32> to vector<4x73xf32>
    %3 = vector.extract_strided_slice %1 {offsets = [0, 0], sizes = [4, 439], strides = [1, 1]} : vector<4x512xf32> to vector<4x439xf32>
    %4 = tpu.concatenate %2, %3 in 1 : vector<4x73xf32>, vector<4x439xf32> -> vector<4x512xf32>
    %c0_2 = arith.constant 0 : index
    %c0_3 = arith.constant 0 : index
    %5 = vector.load %arg3[%c0_2, %c0_3] : memref<27x512xf32, #tpu.memory_space<vmem>>, vector<1x512xf32>
    %6 = vector.broadcast %5 : vector<1x512xf32> to vector<4x512xf32>
    %7 = arith.mulf %4, %6 : vector<4x512xf32>
    %8 = vector.extract_strided_slice %1 {offsets = [0, 440], sizes = [4, 72], strides = [1, 1]} : vector<4x512xf32> to vector<4x72xf32>
    %9 = vector.extract_strided_slice %1 {offsets = [0, 0], sizes = [4, 440], strides = [1, 1]} : vector<4x512xf32> to vector<4x440xf32>
    %10 = tpu.concatenate %8, %9 in 1 : vector<4x72xf32>, vector<4x440xf32> -> vector<4x512xf32>
    %c1 = arith.constant 1 : index
    %c0_4 = arith.constant 0 : index
    %11 = vector.load %arg3[%c1, %c0_4] : memref<27x512xf32, #tpu.memory_space<vmem>>, vector<1x512xf32>
    %12 = vector.broadcast %11 : vector<1x512xf32> to vector<4x512xf32>
    %13 = arith.mulf %10, %12 : vector<4x512xf32>
    %14 = vector.extract_strided_slice %1 {offsets = [0, 441], sizes = [4, 71], strides = [1, 1]} : vector<4x512xf32> to vector<4x71xf32>
    %15 = vector.extract_strided_slice %1 {offsets = [0, 0], sizes = [4, 441], strides = [1, 1]} : vector<4x512xf32> to vector<4x441xf32>
    %16 = tpu.concatenate %14, %15 in 1 : vector<4x71xf32>, vector<4x441xf32> -> vector<4x512xf32>
    %c2 = arith.constant 2 : index
    %c0_5 = arith.constant 0 : index
    %17 = vector.load %arg3[%c2, %c0_5] : memref<27x512xf32, #tpu.memory_space<vmem>>, vector<1x512xf32>
    %18 = vector.broadcast %17 : vector<1x512xf32> to vector<4x512xf32>
    %19 = arith.mulf %16, %18 : vector<4x512xf32>
    %20 = vector.extract_strided_slice %1 {offsets = [0, 447], sizes = [4, 65], strides = [1, 1]} : vector<4x512xf32> to vector<4x65xf32>
    %21 = vector.extract_strided_slice %1 {offsets = [0, 0], sizes = [4, 447], strides = [1, 1]} : vector<4x512xf32> to vector<4x447xf32>
    %22 = tpu.concatenate %20, %21 in 1 : vector<4x65xf32>, vector<4x447xf32> -> vector<4x512xf32>
    %c3 = arith.constant 3 : index
    %c0_6 = arith.constant 0 : index
    %23 = vector.load %arg3[%c3, %c0_6] : memref<27x512xf32, #tpu.memory_space<vmem>>, vector<1x512xf32>
    %24 = vector.broadcast %23 : vector<1x512xf32> to vector<4x512xf32>
    %25 = arith.mulf %22, %24 : vector<4x512xf32>
    %26 = vector.extract_strided_slice %1 {offsets = [0, 448], sizes = [4, 64], strides = [1, 1]} : vector<4x512xf32> to vector<4x64xf32>
    %27 = vector.extract_strided_slice %1 {offsets = [0, 0], sizes = [4, 448], strides = [1, 1]} : vector<4x512xf32> to vector<4x448xf32>
    %28 = tpu.concatenate %26, %27 in 1 : vector<4x64xf32>, vector<4x448xf32> -> vector<4x512xf32>
    %c4 = arith.constant 4 : index
    %c0_7 = arith.constant 0 : index
    %29 = vector.load %arg3[%c4, %c0_7] : memref<27x512xf32, #tpu.memory_space<vmem>>, vector<1x512xf32>
    %30 = vector.broadcast %29 : vector<1x512xf32> to vector<4x512xf32>
    %31 = arith.mulf %28, %30 : vector<4x512xf32>
    %32 = vector.extract_strided_slice %1 {offsets = [0, 449], sizes = [4, 63], strides = [1, 1]} : vector<4x512xf32> to vector<4x63xf32>
    %33 = vector.extract_strided_slice %1 {offsets = [0, 0], sizes = [4, 449], strides = [1, 1]} : vector<4x512xf32> to vector<4x449xf32>
    %34 = tpu.concatenate %32, %33 in 1 : vector<4x63xf32>, vector<4x449xf32> -> vector<4x512xf32>
    %c5 = arith.constant 5 : index
    %c0_8 = arith.constant 0 : index
    %35 = vector.load %arg3[%c5, %c0_8] : memref<27x512xf32, #tpu.memory_space<vmem>>, vector<1x512xf32>
    %36 = vector.broadcast %35 : vector<1x512xf32> to vector<4x512xf32>
    %37 = arith.mulf %34, %36 : vector<4x512xf32>
    %38 = vector.extract_strided_slice %1 {offsets = [0, 455], sizes = [4, 57], strides = [1, 1]} : vector<4x512xf32> to vector<4x57xf32>
    %39 = vector.extract_strided_slice %1 {offsets = [0, 0], sizes = [4, 455], strides = [1, 1]} : vector<4x512xf32> to vector<4x455xf32>
    %40 = tpu.concatenate %38, %39 in 1 : vector<4x57xf32>, vector<4x455xf32> -> vector<4x512xf32>
    %c6 = arith.constant 6 : index
    %c0_9 = arith.constant 0 : index
    %41 = vector.load %arg3[%c6, %c0_9] : memref<27x512xf32, #tpu.memory_space<vmem>>, vector<1x512xf32>
    %42 = vector.broadcast %41 : vector<1x512xf32> to vector<4x512xf32>
    %43 = arith.mulf %40, %42 : vector<4x512xf32>
    %44 = vector.extract_strided_slice %1 {offsets = [0, 456], sizes = [4, 56], strides = [1, 1]} : vector<4x512xf32> to vector<4x56xf32>
    %45 = vector.extract_strided_slice %1 {offsets = [0, 0], sizes = [4, 456], strides = [1, 1]} : vector<4x512xf32> to vector<4x456xf32>
    %46 = tpu.concatenate %44, %45 in 1 : vector<4x56xf32>, vector<4x456xf32> -> vector<4x512xf32>
    %c7 = arith.constant 7 : index
    %c0_10 = arith.constant 0 : index
    %47 = vector.load %arg3[%c7, %c0_10] : memref<27x512xf32, #tpu.memory_space<vmem>>, vector<1x512xf32>
    %48 = vector.broadcast %47 : vector<1x512xf32> to vector<4x512xf32>
    %49 = arith.mulf %46, %48 : vector<4x512xf32>
    %50 = vector.extract_strided_slice %1 {offsets = [0, 457], sizes = [4, 55], strides = [1, 1]} : vector<4x512xf32> to vector<4x55xf32>
    %51 = vector.extract_strided_slice %1 {offsets = [0, 0], sizes = [4, 457], strides = [1, 1]} : vector<4x512xf32> to vector<4x457xf32>
    %52 = tpu.concatenate %50, %51 in 1 : vector<4x55xf32>, vector<4x457xf32> -> vector<4x512xf32>
    %c8 = arith.constant 8 : index
    %c0_11 = arith.constant 0 : index
    %53 = vector.load %arg3[%c8, %c0_11] : memref<27x512xf32, #tpu.memory_space<vmem>>, vector<1x512xf32>
    %54 = vector.broadcast %53 : vector<1x512xf32> to vector<4x512xf32>
    %55 = arith.mulf %52, %54 : vector<4x512xf32>
    %56 = vector.extract_strided_slice %1 {offsets = [0, 503], sizes = [4, 9], strides = [1, 1]} : vector<4x512xf32> to vector<4x9xf32>
    %57 = vector.extract_strided_slice %1 {offsets = [0, 0], sizes = [4, 503], strides = [1, 1]} : vector<4x512xf32> to vector<4x503xf32>
    %58 = tpu.concatenate %56, %57 in 1 : vector<4x9xf32>, vector<4x503xf32> -> vector<4x512xf32>
    %c9 = arith.constant 9 : index
    %c0_12 = arith.constant 0 : index
    %59 = vector.load %arg3[%c9, %c0_12] : memref<27x512xf32, #tpu.memory_space<vmem>>, vector<1x512xf32>
    %60 = vector.broadcast %59 : vector<1x512xf32> to vector<4x512xf32>
    %61 = arith.mulf %58, %60 : vector<4x512xf32>
    %62 = vector.extract_strided_slice %1 {offsets = [0, 504], sizes = [4, 8], strides = [1, 1]} : vector<4x512xf32> to vector<4x8xf32>
    %63 = vector.extract_strided_slice %1 {offsets = [0, 0], sizes = [4, 504], strides = [1, 1]} : vector<4x512xf32> to vector<4x504xf32>
    %64 = tpu.concatenate %62, %63 in 1 : vector<4x8xf32>, vector<4x504xf32> -> vector<4x512xf32>
    %c10 = arith.constant 10 : index
    %c0_13 = arith.constant 0 : index
    %65 = vector.load %arg3[%c10, %c0_13] : memref<27x512xf32, #tpu.memory_space<vmem>>, vector<1x512xf32>
    %66 = vector.broadcast %65 : vector<1x512xf32> to vector<4x512xf32>
    %67 = arith.mulf %64, %66 : vector<4x512xf32>
    %68 = vector.extract_strided_slice %1 {offsets = [0, 505], sizes = [4, 7], strides = [1, 1]} : vector<4x512xf32> to vector<4x7xf32>
    %69 = vector.extract_strided_slice %1 {offsets = [0, 0], sizes = [4, 505], strides = [1, 1]} : vector<4x512xf32> to vector<4x505xf32>
    %70 = tpu.concatenate %68, %69 in 1 : vector<4x7xf32>, vector<4x505xf32> -> vector<4x512xf32>
    %c11 = arith.constant 11 : index
    %c0_14 = arith.constant 0 : index
    %71 = vector.load %arg3[%c11, %c0_14] : memref<27x512xf32, #tpu.memory_space<vmem>>, vector<1x512xf32>
    %72 = vector.broadcast %71 : vector<1x512xf32> to vector<4x512xf32>
    %73 = arith.mulf %70, %72 : vector<4x512xf32>
    %74 = vector.extract_strided_slice %1 {offsets = [0, 511], sizes = [4, 1], strides = [1, 1]} : vector<4x512xf32> to vector<4x1xf32>
    %75 = vector.extract_strided_slice %1 {offsets = [0, 0], sizes = [4, 511], strides = [1, 1]} : vector<4x512xf32> to vector<4x511xf32>
    %76 = tpu.concatenate %74, %75 in 1 : vector<4x1xf32>, vector<4x511xf32> -> vector<4x512xf32>
    %c12 = arith.constant 12 : index
    %c0_15 = arith.constant 0 : index
    %77 = vector.load %arg3[%c12, %c0_15] : memref<27x512xf32, #tpu.memory_space<vmem>>, vector<1x512xf32>
    %78 = vector.broadcast %77 : vector<1x512xf32> to vector<4x512xf32>
    %79 = arith.mulf %76, %78 : vector<4x512xf32>
    %80 = vector.extract_strided_slice %1 {offsets = [0, 1], sizes = [4, 511], strides = [1, 1]} : vector<4x512xf32> to vector<4x511xf32>
    %81 = vector.extract_strided_slice %1 {offsets = [0, 0], sizes = [4, 1], strides = [1, 1]} : vector<4x512xf32> to vector<4x1xf32>
    %82 = tpu.concatenate %80, %81 in 1 : vector<4x511xf32>, vector<4x1xf32> -> vector<4x512xf32>
    %c14 = arith.constant 14 : index
    %c0_16 = arith.constant 0 : index
    %83 = vector.load %arg3[%c14, %c0_16] : memref<27x512xf32, #tpu.memory_space<vmem>>, vector<1x512xf32>
    %84 = vector.broadcast %83 : vector<1x512xf32> to vector<4x512xf32>
    %85 = arith.mulf %82, %84 : vector<4x512xf32>
    %86 = vector.extract_strided_slice %1 {offsets = [0, 7], sizes = [4, 505], strides = [1, 1]} : vector<4x512xf32> to vector<4x505xf32>
    %87 = vector.extract_strided_slice %1 {offsets = [0, 0], sizes = [4, 7], strides = [1, 1]} : vector<4x512xf32> to vector<4x7xf32>
    %88 = tpu.concatenate %86, %87 in 1 : vector<4x505xf32>, vector<4x7xf32> -> vector<4x512xf32>
    %c15 = arith.constant 15 : index
    %c0_17 = arith.constant 0 : index
    %89 = vector.load %arg3[%c15, %c0_17] : memref<27x512xf32, #tpu.memory_space<vmem>>, vector<1x512xf32>
    %90 = vector.broadcast %89 : vector<1x512xf32> to vector<4x512xf32>
    %91 = arith.mulf %88, %90 : vector<4x512xf32>
    %92 = vector.extract_strided_slice %1 {offsets = [0, 8], sizes = [4, 504], strides = [1, 1]} : vector<4x512xf32> to vector<4x504xf32>
    %93 = vector.extract_strided_slice %1 {offsets = [0, 0], sizes = [4, 8], strides = [1, 1]} : vector<4x512xf32> to vector<4x8xf32>
    %94 = tpu.concatenate %92, %93 in 1 : vector<4x504xf32>, vector<4x8xf32> -> vector<4x512xf32>
    %c16 = arith.constant 16 : index
    %c0_18 = arith.constant 0 : index
    %95 = vector.load %arg3[%c16, %c0_18] : memref<27x512xf32, #tpu.memory_space<vmem>>, vector<1x512xf32>
    %96 = vector.broadcast %95 : vector<1x512xf32> to vector<4x512xf32>
    %97 = arith.mulf %94, %96 : vector<4x512xf32>
    %98 = vector.extract_strided_slice %1 {offsets = [0, 9], sizes = [4, 503], strides = [1, 1]} : vector<4x512xf32> to vector<4x503xf32>
    %99 = vector.extract_strided_slice %1 {offsets = [0, 0], sizes = [4, 9], strides = [1, 1]} : vector<4x512xf32> to vector<4x9xf32>
    %100 = tpu.concatenate %98, %99 in 1 : vector<4x503xf32>, vector<4x9xf32> -> vector<4x512xf32>
    %c17 = arith.constant 17 : index
    %c0_19 = arith.constant 0 : index
    %101 = vector.load %arg3[%c17, %c0_19] : memref<27x512xf32, #tpu.memory_space<vmem>>, vector<1x512xf32>
    %102 = vector.broadcast %101 : vector<1x512xf32> to vector<4x512xf32>
    %103 = arith.mulf %100, %102 : vector<4x512xf32>
    %104 = vector.extract_strided_slice %1 {offsets = [0, 55], sizes = [4, 457], strides = [1, 1]} : vector<4x512xf32> to vector<4x457xf32>
    %105 = vector.extract_strided_slice %1 {offsets = [0, 0], sizes = [4, 55], strides = [1, 1]} : vector<4x512xf32> to vector<4x55xf32>
    %106 = tpu.concatenate %104, %105 in 1 : vector<4x457xf32>, vector<4x55xf32> -> vector<4x512xf32>
    %c18 = arith.constant 18 : index
    %c0_20 = arith.constant 0 : index
    %107 = vector.load %arg3[%c18, %c0_20] : memref<27x512xf32, #tpu.memory_space<vmem>>, vector<1x512xf32>
    %108 = vector.broadcast %107 : vector<1x512xf32> to vector<4x512xf32>
    %109 = arith.mulf %106, %108 : vector<4x512xf32>
    %110 = vector.extract_strided_slice %1 {offsets = [0, 56], sizes = [4, 456], strides = [1, 1]} : vector<4x512xf32> to vector<4x456xf32>
    %111 = vector.extract_strided_slice %1 {offsets = [0, 0], sizes = [4, 56], strides = [1, 1]} : vector<4x512xf32> to vector<4x56xf32>
    %112 = tpu.concatenate %110, %111 in 1 : vector<4x456xf32>, vector<4x56xf32> -> vector<4x512xf32>
    %c19 = arith.constant 19 : index
    %c0_21 = arith.constant 0 : index
    %113 = vector.load %arg3[%c19, %c0_21] : memref<27x512xf32, #tpu.memory_space<vmem>>, vector<1x512xf32>
    %114 = vector.broadcast %113 : vector<1x512xf32> to vector<4x512xf32>
    %115 = arith.mulf %112, %114 : vector<4x512xf32>
    %116 = vector.extract_strided_slice %1 {offsets = [0, 57], sizes = [4, 455], strides = [1, 1]} : vector<4x512xf32> to vector<4x455xf32>
    %117 = vector.extract_strided_slice %1 {offsets = [0, 0], sizes = [4, 57], strides = [1, 1]} : vector<4x512xf32> to vector<4x57xf32>
    %118 = tpu.concatenate %116, %117 in 1 : vector<4x455xf32>, vector<4x57xf32> -> vector<4x512xf32>
    %c20 = arith.constant 20 : index
    %c0_22 = arith.constant 0 : index
    %119 = vector.load %arg3[%c20, %c0_22] : memref<27x512xf32, #tpu.memory_space<vmem>>, vector<1x512xf32>
    %120 = vector.broadcast %119 : vector<1x512xf32> to vector<4x512xf32>
    %121 = arith.mulf %118, %120 : vector<4x512xf32>
    %122 = vector.extract_strided_slice %1 {offsets = [0, 63], sizes = [4, 449], strides = [1, 1]} : vector<4x512xf32> to vector<4x449xf32>
    %123 = vector.extract_strided_slice %1 {offsets = [0, 0], sizes = [4, 63], strides = [1, 1]} : vector<4x512xf32> to vector<4x63xf32>
    %124 = tpu.concatenate %122, %123 in 1 : vector<4x449xf32>, vector<4x63xf32> -> vector<4x512xf32>
    %c21 = arith.constant 21 : index
    %c0_23 = arith.constant 0 : index
    %125 = vector.load %arg3[%c21, %c0_23] : memref<27x512xf32, #tpu.memory_space<vmem>>, vector<1x512xf32>
    %126 = vector.broadcast %125 : vector<1x512xf32> to vector<4x512xf32>
    %127 = arith.mulf %124, %126 : vector<4x512xf32>
    %128 = vector.extract_strided_slice %1 {offsets = [0, 64], sizes = [4, 448], strides = [1, 1]} : vector<4x512xf32> to vector<4x448xf32>
    %129 = vector.extract_strided_slice %1 {offsets = [0, 0], sizes = [4, 64], strides = [1, 1]} : vector<4x512xf32> to vector<4x64xf32>
    %130 = tpu.concatenate %128, %129 in 1 : vector<4x448xf32>, vector<4x64xf32> -> vector<4x512xf32>
    %c22 = arith.constant 22 : index
    %c0_24 = arith.constant 0 : index
    %131 = vector.load %arg3[%c22, %c0_24] : memref<27x512xf32, #tpu.memory_space<vmem>>, vector<1x512xf32>
    %132 = vector.broadcast %131 : vector<1x512xf32> to vector<4x512xf32>
    %133 = arith.mulf %130, %132 : vector<4x512xf32>
    %134 = vector.extract_strided_slice %1 {offsets = [0, 65], sizes = [4, 447], strides = [1, 1]} : vector<4x512xf32> to vector<4x447xf32>
    %135 = vector.extract_strided_slice %1 {offsets = [0, 0], sizes = [4, 65], strides = [1, 1]} : vector<4x512xf32> to vector<4x65xf32>
    %136 = tpu.concatenate %134, %135 in 1 : vector<4x447xf32>, vector<4x65xf32> -> vector<4x512xf32>
    %c23 = arith.constant 23 : index
    %c0_25 = arith.constant 0 : index
    %137 = vector.load %arg3[%c23, %c0_25] : memref<27x512xf32, #tpu.memory_space<vmem>>, vector<1x512xf32>
    %138 = vector.broadcast %137 : vector<1x512xf32> to vector<4x512xf32>
    %139 = arith.mulf %136, %138 : vector<4x512xf32>
    %140 = vector.extract_strided_slice %1 {offsets = [0, 71], sizes = [4, 441], strides = [1, 1]} : vector<4x512xf32> to vector<4x441xf32>
    %141 = vector.extract_strided_slice %1 {offsets = [0, 0], sizes = [4, 71], strides = [1, 1]} : vector<4x512xf32> to vector<4x71xf32>
    %142 = tpu.concatenate %140, %141 in 1 : vector<4x441xf32>, vector<4x71xf32> -> vector<4x512xf32>
    %c24 = arith.constant 24 : index
    %c0_26 = arith.constant 0 : index
    %143 = vector.load %arg3[%c24, %c0_26] : memref<27x512xf32, #tpu.memory_space<vmem>>, vector<1x512xf32>
    %144 = vector.broadcast %143 : vector<1x512xf32> to vector<4x512xf32>
    %145 = arith.mulf %142, %144 : vector<4x512xf32>
    %146 = vector.extract_strided_slice %1 {offsets = [0, 72], sizes = [4, 440], strides = [1, 1]} : vector<4x512xf32> to vector<4x440xf32>
    %147 = vector.extract_strided_slice %1 {offsets = [0, 0], sizes = [4, 72], strides = [1, 1]} : vector<4x512xf32> to vector<4x72xf32>
    %148 = tpu.concatenate %146, %147 in 1 : vector<4x440xf32>, vector<4x72xf32> -> vector<4x512xf32>
    %c25 = arith.constant 25 : index
    %c0_27 = arith.constant 0 : index
    %149 = vector.load %arg3[%c25, %c0_27] : memref<27x512xf32, #tpu.memory_space<vmem>>, vector<1x512xf32>
    %150 = vector.broadcast %149 : vector<1x512xf32> to vector<4x512xf32>
    %151 = arith.mulf %148, %150 : vector<4x512xf32>
    %152 = vector.extract_strided_slice %1 {offsets = [0, 73], sizes = [4, 439], strides = [1, 1]} : vector<4x512xf32> to vector<4x439xf32>
    %153 = vector.extract_strided_slice %1 {offsets = [0, 0], sizes = [4, 73], strides = [1, 1]} : vector<4x512xf32> to vector<4x73xf32>
    %154 = tpu.concatenate %152, %153 in 1 : vector<4x439xf32>, vector<4x73xf32> -> vector<4x512xf32>
    %c26 = arith.constant 26 : index
    %c0_28 = arith.constant 0 : index
    %155 = vector.load %arg3[%c26, %c0_28] : memref<27x512xf32, #tpu.memory_space<vmem>>, vector<1x512xf32>
    %156 = vector.broadcast %155 : vector<1x512xf32> to vector<4x512xf32>
    %157 = arith.mulf %154, %156 : vector<4x512xf32>
    %158 = tpu.concatenate %7, %13, %19, %25, %31, %37, %43, %49, %55, %61, %67, %73, %79, %1, %85, %91 in 0 : vector<4x512xf32>, vector<4x512xf32>, vector<4x512xf32>, vector<4x512xf32>, vector<4x512xf32>, vector<4x512xf32>, vector<4x512xf32>, vector<4x512xf32>, vector<4x512xf32>, vector<4x512xf32>, vector<4x512xf32>, vector<4x512xf32>, vector<4x512xf32>, vector<4x512xf32>, vector<4x512xf32>, vector<4x512xf32> -> vector<64x512xf32>
    %159 = tpu.concatenate %97, %103, %109, %115, %121, %127, %133, %139, %145, %151, %157 in 0 : vector<4x512xf32>, vector<4x512xf32>, vector<4x512xf32>, vector<4x512xf32>, vector<4x512xf32>, vector<4x512xf32>, vector<4x512xf32>, vector<4x512xf32>, vector<4x512xf32>, vector<4x512xf32>, vector<4x512xf32> -> vector<44x512xf32>
    %160 = tpu.concatenate %158, %159 in 0 : vector<64x512xf32>, vector<44x512xf32> -> vector<108x512xf32>
    %c0_29 = arith.constant 0 : index
    %c0_30 = arith.constant 0 : index
    %161 = vector.load %arg2[%c0_29, %c0_30] : memref<4x108xf32, #tpu.memory_space<vmem>>, vector<4x108xf32>
    %cst = arith.constant dense<0.000000e+00> : vector<4x512xf32>
    %162 = tpu.matmul %161, %160, %cst {dimension_numbers = #tpu.dot_dimension_numbers<[1], [0], [0], [1], [0, 0, 1, 1], [], []>} : vector<4x108xf32>, vector<108x512xf32>, vector<4x512xf32> -> vector<4x512xf32>
    %cst_31 = arith.constant dense<0.000000e+00> : vector<4xf32>
    %163 = vector.multi_reduction <add>, %162, %cst_31 [1] : vector<4x512xf32> to vector<4xf32>
    %164 = vector.shape_cast %163 : vector<4xf32> to vector<4x1xf32>
    %165 = arith.mulf %162, %162 : vector<4x512xf32>
    %cst_32 = arith.constant dense<0.000000e+00> : vector<4xf32>
    %166 = vector.multi_reduction <add>, %165, %cst_32 [1] : vector<4x512xf32> to vector<4xf32>
    %167 = vector.shape_cast %166 : vector<4xf32> to vector<4x1xf32>
    %168 = tpu.concatenate %164, %167 in 1 : vector<4x1xf32>, vector<4x1xf32> -> vector<4x2xf32>
    %169 = vector.shape_cast %168 : vector<4x2xf32> to vector<1x4x2xf32>
    %c0_33 = arith.constant 0 : index
    %c0_34 = arith.constant 0 : index
    %c0_35 = arith.constant 0 : index
    %170 = vector.load %arg5[%c0_33, %c0_34, %c0_35] : memref<1x4x2xf32, #tpu.memory_space<vmem>>, vector<1x4x2xf32>
    tpu.vector_store %arg5[%c0_33, %c0_34, %c0_35], %169 {strides = array<i32>} : memref<1x4x2xf32, #tpu.memory_space<vmem>>, vector<1x4x2xf32>,
    %171 = vector.shape_cast %162 : vector<4x512xf32> to vector<1x4x512xf32>
    %c0_36 = arith.constant 0 : index
    %c0_37 = arith.constant 0 : index
    %c0_38 = arith.constant 0 : index
    %172 = vector.load %arg4[%c0_36, %c0_37, %c0_38] : memref<1x4x512xf32, #tpu.memory_space<vmem>>, vector<1x4x512xf32>
    tpu.vector_store %arg4[%c0_36, %c0_37, %c0_38], %171 {strides = array<i32>} : memref<1x4x512xf32, #tpu.memory_space<vmem>>, vector<1x4x512xf32>,
    return
  }
  func.func @transform_0(%arg0: i32) -> (i32, i32, i32) {
    %c0_i32 = arith.constant 0 : i32
    %c0_i32_0 = arith.constant 0 : i32
    %c0_i32_1 = arith.constant 0 : i32
    return %arg0, %c0_i32, %c0_i32_0 : i32, i32, i32
  }
  func.func @transform_1(%arg0: i32) -> (i32, i32) {
    %c0_i32 = arith.constant 0 : i32
    %c0_i32_0 = arith.constant 0 : i32
    %c0_i32_1 = arith.constant 0 : i32
    return %c0_i32, %c0_i32_0 : i32, i32
  }
  func.func @transform_2(%arg0: i32) -> (i32, i32) {
    %c0_i32 = arith.constant 0 : i32
    %c0_i32_0 = arith.constant 0 : i32
    %c0_i32_1 = arith.constant 0 : i32
    return %c0_i32, %c0_i32_0 : i32, i32
  }
  func.func @transform_3(%arg0: i32) -> (i32, i32, i32) {
    %c0_i32 = arith.constant 0 : i32
    %c0_i32_0 = arith.constant 0 : i32
    %c0_i32_1 = arith.constant 0 : i32
    return %arg0, %c0_i32, %c0_i32_0 : i32, i32, i32
  }
  func.func @transform_4(%arg0: i32) -> (i32, i32, i32) {
    %c0_i32 = arith.constant 0 : i32
    %c0_i32_0 = arith.constant 0 : i32
    %c0_i32_1 = arith.constant 0 : i32
    return %arg0, %c0_i32, %c0_i32_0 : i32, i32, i32
  }
}

module attributes {stable_mosaic.version = 11 : i64} {
  func.func @_bn_add_relu_proj_kernel(%arg0: i32, %arg1: memref<1x4x512xf32, #tpu.memory_space<vmem>>, %arg2: memref<1x4x512xf32, #tpu.memory_space<vmem>>, %arg3: memref<4x1xf32, #tpu.memory_space<vmem>>, %arg4: memref<4x1xf32, #tpu.memory_space<vmem>>, %arg5: memref<8x4xf32, #tpu.memory_space<vmem>>, %arg6: memref<8x1xf32, #tpu.memory_space<vmem>>, %arg7: memref<1x8x512xf32, #tpu.memory_space<vmem>>) attributes {dimension_semantics = [#tpu.dimension_semantics<parallel>], iteration_bounds = array<i64: 2>, scalar_prefetch = 0 : i64, scratch_operands = 0 : i64, tpu.core_type = #tpu.core_type<tc>, window_params = [{transform_indices = @transform_0, window_bounds = array<i64: 1, 4, 512>}, {transform_indices = @transform_1, window_bounds = array<i64: 1, 4, 512>}, {pipeline_mode = #tpu.pipeline_mode<synchronous>, transform_indices = @transform_2, window_bounds = array<i64: 4, 1>}, {pipeline_mode = #tpu.pipeline_mode<synchronous>, transform_indices = @transform_3, window_bounds = array<i64: 4, 1>}, {pipeline_mode = #tpu.pipeline_mode<synchronous>, transform_indices = @transform_4, window_bounds = array<i64: 8, 4>}, {pipeline_mode = #tpu.pipeline_mode<synchronous>, transform_indices = @transform_5, window_bounds = array<i64: 8, 1>}, {transform_indices = @transform_6, window_bounds = array<i64: 1, 8, 512>}]} {
    %c0 = arith.constant 0 : index
    %c0_0 = arith.constant 0 : index
    %c0_1 = arith.constant 0 : index
    %0 = vector.load %arg1[%c0, %c0_0, %c0_1] : memref<1x4x512xf32, #tpu.memory_space<vmem>>, vector<1x4x512xf32>
    %1 = vector.shape_cast %0 : vector<1x4x512xf32> to vector<4x512xf32>
    %c0_2 = arith.constant 0 : index
    %c0_3 = arith.constant 0 : index
    %2 = vector.load %arg3[%c0_2, %c0_3] : memref<4x1xf32, #tpu.memory_space<vmem>>, vector<4x1xf32>
    %3 = vector.broadcast %2 : vector<4x1xf32> to vector<4x512xf32>
    %4 = arith.mulf %1, %3 : vector<4x512xf32>
    %c0_4 = arith.constant 0 : index
    %c0_5 = arith.constant 0 : index
    %5 = vector.load %arg4[%c0_4, %c0_5] : memref<4x1xf32, #tpu.memory_space<vmem>>, vector<4x1xf32>
    %6 = vector.broadcast %5 : vector<4x1xf32> to vector<4x512xf32>
    %7 = arith.addf %4, %6 : vector<4x512xf32>
    %c0_6 = arith.constant 0 : index
    %c0_7 = arith.constant 0 : index
    %c0_8 = arith.constant 0 : index
    %8 = vector.load %arg2[%c0_6, %c0_7, %c0_8] : memref<1x4x512xf32, #tpu.memory_space<vmem>>, vector<1x4x512xf32>
    %9 = vector.shape_cast %8 : vector<1x4x512xf32> to vector<4x512xf32>
    %10 = arith.addf %7, %9 : vector<4x512xf32>
    %cst = arith.constant 0.000000e+00 : f32
    %11 = vector.broadcast %cst : f32 to vector<4x512xf32>
    %12 = arith.maximumf %10, %11 : vector<4x512xf32>
    %c0_9 = arith.constant 0 : index
    %c0_10 = arith.constant 0 : index
    %13 = vector.load %arg5[%c0_9, %c0_10] : memref<8x4xf32, #tpu.memory_space<vmem>>, vector<8x4xf32>
    %cst_11 = arith.constant dense<0.000000e+00> : vector<8x512xf32>
    %14 = tpu.matmul %13, %12, %cst_11 {dimension_numbers = #tpu.dot_dimension_numbers<[1], [0], [0], [1], [0, 0, 1, 1], [], []>} : vector<8x4xf32>, vector<4x512xf32>, vector<8x512xf32> -> vector<8x512xf32>
    %c0_12 = arith.constant 0 : index
    %c0_13 = arith.constant 0 : index
    %15 = vector.load %arg6[%c0_12, %c0_13] : memref<8x1xf32, #tpu.memory_space<vmem>>, vector<8x1xf32>
    %16 = vector.broadcast %15 : vector<8x1xf32> to vector<8x512xf32>
    %17 = arith.addf %14, %16 : vector<8x512xf32>
    %18 = vector.shape_cast %17 : vector<8x512xf32> to vector<1x8x512xf32>
    %c0_14 = arith.constant 0 : index
    %c0_15 = arith.constant 0 : index
    %c0_16 = arith.constant 0 : index
    %19 = vector.load %arg7[%c0_14, %c0_15, %c0_16] : memref<1x8x512xf32, #tpu.memory_space<vmem>>, vector<1x8x512xf32>
    tpu.vector_store %arg7[%c0_14, %c0_15, %c0_16], %18 {strides = array<i32>} : memref<1x8x512xf32, #tpu.memory_space<vmem>>, vector<1x8x512xf32>,
    return
  }
  func.func @transform_0(%arg0: i32) -> (i32, i32, i32) {
    %c0_i32 = arith.constant 0 : i32
    %c0_i32_0 = arith.constant 0 : i32
    %c0_i32_1 = arith.constant 0 : i32
    return %arg0, %c0_i32, %c0_i32_0 : i32, i32, i32
  }
  func.func @transform_1(%arg0: i32) -> (i32, i32, i32) {
    %c0_i32 = arith.constant 0 : i32
    %c0_i32_0 = arith.constant 0 : i32
    %c0_i32_1 = arith.constant 0 : i32
    return %arg0, %c0_i32, %c0_i32_0 : i32, i32, i32
  }
  func.func @transform_2(%arg0: i32) -> (i32, i32) {
    %c0_i32 = arith.constant 0 : i32
    %c0_i32_0 = arith.constant 0 : i32
    %c0_i32_1 = arith.constant 0 : i32
    return %c0_i32, %c0_i32_0 : i32, i32
  }
  func.func @transform_3(%arg0: i32) -> (i32, i32) {
    %c0_i32 = arith.constant 0 : i32
    %c0_i32_0 = arith.constant 0 : i32
    %c0_i32_1 = arith.constant 0 : i32
    return %c0_i32, %c0_i32_0 : i32, i32
  }
  func.func @transform_4(%arg0: i32) -> (i32, i32) {
    %c0_i32 = arith.constant 0 : i32
    %c0_i32_0 = arith.constant 0 : i32
    %c0_i32_1 = arith.constant 0 : i32
    return %c0_i32, %c0_i32_0 : i32, i32
  }
  func.func @transform_5(%arg0: i32) -> (i32, i32) {
    %c0_i32 = arith.constant 0 : i32
    %c0_i32_0 = arith.constant 0 : i32
    %c0_i32_1 = arith.constant 0 : i32
    return %c0_i32, %c0_i32_0 : i32, i32
  }
  func.func @transform_6(%arg0: i32) -> (i32, i32, i32) {
    %c0_i32 = arith.constant 0 : i32
    %c0_i32_0 = arith.constant 0 : i32
    %c0_i32_1 = arith.constant 0 : i32
    return %arg0, %c0_i32, %c0_i32_0 : i32, i32, i32
  }
}

module attributes {stable_mosaic.version = 11 : i64} {
  func.func @_bn_relu_conv_stats_kernel(%arg0: i32, %arg1: memref<1x4x512xf32, #tpu.memory_space<vmem>>, %arg2: memref<4x1xf32, #tpu.memory_space<vmem>>, %arg3: memref<4x1xf32, #tpu.memory_space<vmem>>, %arg4: memref<4x108xf32, #tpu.memory_space<vmem>>, %arg5: memref<27x512xf32, #tpu.memory_space<vmem>>, %arg6: memref<1x4x512xf32, #tpu.memory_space<vmem>>, %arg7: memref<1x4x2xf32, #tpu.memory_space<vmem>>) attributes {dimension_semantics = [#tpu.dimension_semantics<parallel>], iteration_bounds = array<i64: 2>, scalar_prefetch = 0 : i64, scratch_operands = 0 : i64, tpu.core_type = #tpu.core_type<tc>, window_params = [{transform_indices = @transform_0, window_bounds = array<i64: 1, 4, 512>}, {pipeline_mode = #tpu.pipeline_mode<synchronous>, transform_indices = @transform_1, window_bounds = array<i64: 4, 1>}, {pipeline_mode = #tpu.pipeline_mode<synchronous>, transform_indices = @transform_2, window_bounds = array<i64: 4, 1>}, {pipeline_mode = #tpu.pipeline_mode<synchronous>, transform_indices = @transform_3, window_bounds = array<i64: 4, 108>}, {pipeline_mode = #tpu.pipeline_mode<synchronous>, transform_indices = @transform_4, window_bounds = array<i64: 27, 512>}, {transform_indices = @transform_5, window_bounds = array<i64: 1, 4, 512>}, {transform_indices = @transform_6, window_bounds = array<i64: 1, 4, 2>}]} {
    %c0 = arith.constant 0 : index
    %c0_0 = arith.constant 0 : index
    %c0_1 = arith.constant 0 : index
    %0 = vector.load %arg1[%c0, %c0_0, %c0_1] : memref<1x4x512xf32, #tpu.memory_space<vmem>>, vector<1x4x512xf32>
    %1 = vector.shape_cast %0 : vector<1x4x512xf32> to vector<4x512xf32>
    %c0_2 = arith.constant 0 : index
    %c0_3 = arith.constant 0 : index
    %2 = vector.load %arg2[%c0_2, %c0_3] : memref<4x1xf32, #tpu.memory_space<vmem>>, vector<4x1xf32>
    %3 = vector.broadcast %2 : vector<4x1xf32> to vector<4x512xf32>
    %4 = arith.mulf %1, %3 : vector<4x512xf32>
    %c0_4 = arith.constant 0 : index
    %c0_5 = arith.constant 0 : index
    %5 = vector.load %arg3[%c0_4, %c0_5] : memref<4x1xf32, #tpu.memory_space<vmem>>, vector<4x1xf32>
    %6 = vector.broadcast %5 : vector<4x1xf32> to vector<4x512xf32>
    %7 = arith.addf %4, %6 : vector<4x512xf32>
    %cst = arith.constant 0.000000e+00 : f32
    %8 = vector.broadcast %cst : f32 to vector<4x512xf32>
    %9 = arith.maximumf %7, %8 : vector<4x512xf32>
    %10 = vector.extract_strided_slice %9 {offsets = [0, 439], sizes = [4, 73], strides = [1, 1]} : vector<4x512xf32> to vector<4x73xf32>
    %11 = vector.extract_strided_slice %9 {offsets = [0, 0], sizes = [4, 439], strides = [1, 1]} : vector<4x512xf32> to vector<4x439xf32>
    %12 = tpu.concatenate %10, %11 in 1 : vector<4x73xf32>, vector<4x439xf32> -> vector<4x512xf32>
    %c0_6 = arith.constant 0 : index
    %c0_7 = arith.constant 0 : index
    %13 = vector.load %arg5[%c0_6, %c0_7] : memref<27x512xf32, #tpu.memory_space<vmem>>, vector<1x512xf32>
    %14 = vector.broadcast %13 : vector<1x512xf32> to vector<4x512xf32>
    %15 = arith.mulf %12, %14 : vector<4x512xf32>
    %16 = vector.extract_strided_slice %9 {offsets = [0, 440], sizes = [4, 72], strides = [1, 1]} : vector<4x512xf32> to vector<4x72xf32>
    %17 = vector.extract_strided_slice %9 {offsets = [0, 0], sizes = [4, 440], strides = [1, 1]} : vector<4x512xf32> to vector<4x440xf32>
    %18 = tpu.concatenate %16, %17 in 1 : vector<4x72xf32>, vector<4x440xf32> -> vector<4x512xf32>
    %c1 = arith.constant 1 : index
    %c0_8 = arith.constant 0 : index
    %19 = vector.load %arg5[%c1, %c0_8] : memref<27x512xf32, #tpu.memory_space<vmem>>, vector<1x512xf32>
    %20 = vector.broadcast %19 : vector<1x512xf32> to vector<4x512xf32>
    %21 = arith.mulf %18, %20 : vector<4x512xf32>
    %22 = vector.extract_strided_slice %9 {offsets = [0, 441], sizes = [4, 71], strides = [1, 1]} : vector<4x512xf32> to vector<4x71xf32>
    %23 = vector.extract_strided_slice %9 {offsets = [0, 0], sizes = [4, 441], strides = [1, 1]} : vector<4x512xf32> to vector<4x441xf32>
    %24 = tpu.concatenate %22, %23 in 1 : vector<4x71xf32>, vector<4x441xf32> -> vector<4x512xf32>
    %c2 = arith.constant 2 : index
    %c0_9 = arith.constant 0 : index
    %25 = vector.load %arg5[%c2, %c0_9] : memref<27x512xf32, #tpu.memory_space<vmem>>, vector<1x512xf32>
    %26 = vector.broadcast %25 : vector<1x512xf32> to vector<4x512xf32>
    %27 = arith.mulf %24, %26 : vector<4x512xf32>
    %28 = vector.extract_strided_slice %9 {offsets = [0, 447], sizes = [4, 65], strides = [1, 1]} : vector<4x512xf32> to vector<4x65xf32>
    %29 = vector.extract_strided_slice %9 {offsets = [0, 0], sizes = [4, 447], strides = [1, 1]} : vector<4x512xf32> to vector<4x447xf32>
    %30 = tpu.concatenate %28, %29 in 1 : vector<4x65xf32>, vector<4x447xf32> -> vector<4x512xf32>
    %c3 = arith.constant 3 : index
    %c0_10 = arith.constant 0 : index
    %31 = vector.load %arg5[%c3, %c0_10] : memref<27x512xf32, #tpu.memory_space<vmem>>, vector<1x512xf32>
    %32 = vector.broadcast %31 : vector<1x512xf32> to vector<4x512xf32>
    %33 = arith.mulf %30, %32 : vector<4x512xf32>
    %34 = vector.extract_strided_slice %9 {offsets = [0, 448], sizes = [4, 64], strides = [1, 1]} : vector<4x512xf32> to vector<4x64xf32>
    %35 = vector.extract_strided_slice %9 {offsets = [0, 0], sizes = [4, 448], strides = [1, 1]} : vector<4x512xf32> to vector<4x448xf32>
    %36 = tpu.concatenate %34, %35 in 1 : vector<4x64xf32>, vector<4x448xf32> -> vector<4x512xf32>
    %c4 = arith.constant 4 : index
    %c0_11 = arith.constant 0 : index
    %37 = vector.load %arg5[%c4, %c0_11] : memref<27x512xf32, #tpu.memory_space<vmem>>, vector<1x512xf32>
    %38 = vector.broadcast %37 : vector<1x512xf32> to vector<4x512xf32>
    %39 = arith.mulf %36, %38 : vector<4x512xf32>
    %40 = vector.extract_strided_slice %9 {offsets = [0, 449], sizes = [4, 63], strides = [1, 1]} : vector<4x512xf32> to vector<4x63xf32>
    %41 = vector.extract_strided_slice %9 {offsets = [0, 0], sizes = [4, 449], strides = [1, 1]} : vector<4x512xf32> to vector<4x449xf32>
    %42 = tpu.concatenate %40, %41 in 1 : vector<4x63xf32>, vector<4x449xf32> -> vector<4x512xf32>
    %c5 = arith.constant 5 : index
    %c0_12 = arith.constant 0 : index
    %43 = vector.load %arg5[%c5, %c0_12] : memref<27x512xf32, #tpu.memory_space<vmem>>, vector<1x512xf32>
    %44 = vector.broadcast %43 : vector<1x512xf32> to vector<4x512xf32>
    %45 = arith.mulf %42, %44 : vector<4x512xf32>
    %46 = vector.extract_strided_slice %9 {offsets = [0, 455], sizes = [4, 57], strides = [1, 1]} : vector<4x512xf32> to vector<4x57xf32>
    %47 = vector.extract_strided_slice %9 {offsets = [0, 0], sizes = [4, 455], strides = [1, 1]} : vector<4x512xf32> to vector<4x455xf32>
    %48 = tpu.concatenate %46, %47 in 1 : vector<4x57xf32>, vector<4x455xf32> -> vector<4x512xf32>
    %c6 = arith.constant 6 : index
    %c0_13 = arith.constant 0 : index
    %49 = vector.load %arg5[%c6, %c0_13] : memref<27x512xf32, #tpu.memory_space<vmem>>, vector<1x512xf32>
    %50 = vector.broadcast %49 : vector<1x512xf32> to vector<4x512xf32>
    %51 = arith.mulf %48, %50 : vector<4x512xf32>
    %52 = vector.extract_strided_slice %9 {offsets = [0, 456], sizes = [4, 56], strides = [1, 1]} : vector<4x512xf32> to vector<4x56xf32>
    %53 = vector.extract_strided_slice %9 {offsets = [0, 0], sizes = [4, 456], strides = [1, 1]} : vector<4x512xf32> to vector<4x456xf32>
    %54 = tpu.concatenate %52, %53 in 1 : vector<4x56xf32>, vector<4x456xf32> -> vector<4x512xf32>
    %c7 = arith.constant 7 : index
    %c0_14 = arith.constant 0 : index
    %55 = vector.load %arg5[%c7, %c0_14] : memref<27x512xf32, #tpu.memory_space<vmem>>, vector<1x512xf32>
    %56 = vector.broadcast %55 : vector<1x512xf32> to vector<4x512xf32>
    %57 = arith.mulf %54, %56 : vector<4x512xf32>
    %58 = vector.extract_strided_slice %9 {offsets = [0, 457], sizes = [4, 55], strides = [1, 1]} : vector<4x512xf32> to vector<4x55xf32>
    %59 = vector.extract_strided_slice %9 {offsets = [0, 0], sizes = [4, 457], strides = [1, 1]} : vector<4x512xf32> to vector<4x457xf32>
    %60 = tpu.concatenate %58, %59 in 1 : vector<4x55xf32>, vector<4x457xf32> -> vector<4x512xf32>
    %c8 = arith.constant 8 : index
    %c0_15 = arith.constant 0 : index
    %61 = vector.load %arg5[%c8, %c0_15] : memref<27x512xf32, #tpu.memory_space<vmem>>, vector<1x512xf32>
    %62 = vector.broadcast %61 : vector<1x512xf32> to vector<4x512xf32>
    %63 = arith.mulf %60, %62 : vector<4x512xf32>
    %64 = vector.extract_strided_slice %9 {offsets = [0, 503], sizes = [4, 9], strides = [1, 1]} : vector<4x512xf32> to vector<4x9xf32>
    %65 = vector.extract_strided_slice %9 {offsets = [0, 0], sizes = [4, 503], strides = [1, 1]} : vector<4x512xf32> to vector<4x503xf32>
    %66 = tpu.concatenate %64, %65 in 1 : vector<4x9xf32>, vector<4x503xf32> -> vector<4x512xf32>
    %c9 = arith.constant 9 : index
    %c0_16 = arith.constant 0 : index
    %67 = vector.load %arg5[%c9, %c0_16] : memref<27x512xf32, #tpu.memory_space<vmem>>, vector<1x512xf32>
    %68 = vector.broadcast %67 : vector<1x512xf32> to vector<4x512xf32>
    %69 = arith.mulf %66, %68 : vector<4x512xf32>
    %70 = vector.extract_strided_slice %9 {offsets = [0, 504], sizes = [4, 8], strides = [1, 1]} : vector<4x512xf32> to vector<4x8xf32>
    %71 = vector.extract_strided_slice %9 {offsets = [0, 0], sizes = [4, 504], strides = [1, 1]} : vector<4x512xf32> to vector<4x504xf32>
    %72 = tpu.concatenate %70, %71 in 1 : vector<4x8xf32>, vector<4x504xf32> -> vector<4x512xf32>
    %c10 = arith.constant 10 : index
    %c0_17 = arith.constant 0 : index
    %73 = vector.load %arg5[%c10, %c0_17] : memref<27x512xf32, #tpu.memory_space<vmem>>, vector<1x512xf32>
    %74 = vector.broadcast %73 : vector<1x512xf32> to vector<4x512xf32>
    %75 = arith.mulf %72, %74 : vector<4x512xf32>
    %76 = vector.extract_strided_slice %9 {offsets = [0, 505], sizes = [4, 7], strides = [1, 1]} : vector<4x512xf32> to vector<4x7xf32>
    %77 = vector.extract_strided_slice %9 {offsets = [0, 0], sizes = [4, 505], strides = [1, 1]} : vector<4x512xf32> to vector<4x505xf32>
    %78 = tpu.concatenate %76, %77 in 1 : vector<4x7xf32>, vector<4x505xf32> -> vector<4x512xf32>
    %c11 = arith.constant 11 : index
    %c0_18 = arith.constant 0 : index
    %79 = vector.load %arg5[%c11, %c0_18] : memref<27x512xf32, #tpu.memory_space<vmem>>, vector<1x512xf32>
    %80 = vector.broadcast %79 : vector<1x512xf32> to vector<4x512xf32>
    %81 = arith.mulf %78, %80 : vector<4x512xf32>
    %82 = vector.extract_strided_slice %9 {offsets = [0, 511], sizes = [4, 1], strides = [1, 1]} : vector<4x512xf32> to vector<4x1xf32>
    %83 = vector.extract_strided_slice %9 {offsets = [0, 0], sizes = [4, 511], strides = [1, 1]} : vector<4x512xf32> to vector<4x511xf32>
    %84 = tpu.concatenate %82, %83 in 1 : vector<4x1xf32>, vector<4x511xf32> -> vector<4x512xf32>
    %c12 = arith.constant 12 : index
    %c0_19 = arith.constant 0 : index
    %85 = vector.load %arg5[%c12, %c0_19] : memref<27x512xf32, #tpu.memory_space<vmem>>, vector<1x512xf32>
    %86 = vector.broadcast %85 : vector<1x512xf32> to vector<4x512xf32>
    %87 = arith.mulf %84, %86 : vector<4x512xf32>
    %88 = vector.extract_strided_slice %9 {offsets = [0, 1], sizes = [4, 511], strides = [1, 1]} : vector<4x512xf32> to vector<4x511xf32>
    %89 = vector.extract_strided_slice %9 {offsets = [0, 0], sizes = [4, 1], strides = [1, 1]} : vector<4x512xf32> to vector<4x1xf32>
    %90 = tpu.concatenate %88, %89 in 1 : vector<4x511xf32>, vector<4x1xf32> -> vector<4x512xf32>
    %c14 = arith.constant 14 : index
    %c0_20 = arith.constant 0 : index
    %91 = vector.load %arg5[%c14, %c0_20] : memref<27x512xf32, #tpu.memory_space<vmem>>, vector<1x512xf32>
    %92 = vector.broadcast %91 : vector<1x512xf32> to vector<4x512xf32>
    %93 = arith.mulf %90, %92 : vector<4x512xf32>
    %94 = vector.extract_strided_slice %9 {offsets = [0, 7], sizes = [4, 505], strides = [1, 1]} : vector<4x512xf32> to vector<4x505xf32>
    %95 = vector.extract_strided_slice %9 {offsets = [0, 0], sizes = [4, 7], strides = [1, 1]} : vector<4x512xf32> to vector<4x7xf32>
    %96 = tpu.concatenate %94, %95 in 1 : vector<4x505xf32>, vector<4x7xf32> -> vector<4x512xf32>
    %c15 = arith.constant 15 : index
    %c0_21 = arith.constant 0 : index
    %97 = vector.load %arg5[%c15, %c0_21] : memref<27x512xf32, #tpu.memory_space<vmem>>, vector<1x512xf32>
    %98 = vector.broadcast %97 : vector<1x512xf32> to vector<4x512xf32>
    %99 = arith.mulf %96, %98 : vector<4x512xf32>
    %100 = vector.extract_strided_slice %9 {offsets = [0, 8], sizes = [4, 504], strides = [1, 1]} : vector<4x512xf32> to vector<4x504xf32>
    %101 = vector.extract_strided_slice %9 {offsets = [0, 0], sizes = [4, 8], strides = [1, 1]} : vector<4x512xf32> to vector<4x8xf32>
    %102 = tpu.concatenate %100, %101 in 1 : vector<4x504xf32>, vector<4x8xf32> -> vector<4x512xf32>
    %c16 = arith.constant 16 : index
    %c0_22 = arith.constant 0 : index
    %103 = vector.load %arg5[%c16, %c0_22] : memref<27x512xf32, #tpu.memory_space<vmem>>, vector<1x512xf32>
    %104 = vector.broadcast %103 : vector<1x512xf32> to vector<4x512xf32>
    %105 = arith.mulf %102, %104 : vector<4x512xf32>
    %106 = vector.extract_strided_slice %9 {offsets = [0, 9], sizes = [4, 503], strides = [1, 1]} : vector<4x512xf32> to vector<4x503xf32>
    %107 = vector.extract_strided_slice %9 {offsets = [0, 0], sizes = [4, 9], strides = [1, 1]} : vector<4x512xf32> to vector<4x9xf32>
    %108 = tpu.concatenate %106, %107 in 1 : vector<4x503xf32>, vector<4x9xf32> -> vector<4x512xf32>
    %c17 = arith.constant 17 : index
    %c0_23 = arith.constant 0 : index
    %109 = vector.load %arg5[%c17, %c0_23] : memref<27x512xf32, #tpu.memory_space<vmem>>, vector<1x512xf32>
    %110 = vector.broadcast %109 : vector<1x512xf32> to vector<4x512xf32>
    %111 = arith.mulf %108, %110 : vector<4x512xf32>
    %112 = vector.extract_strided_slice %9 {offsets = [0, 55], sizes = [4, 457], strides = [1, 1]} : vector<4x512xf32> to vector<4x457xf32>
    %113 = vector.extract_strided_slice %9 {offsets = [0, 0], sizes = [4, 55], strides = [1, 1]} : vector<4x512xf32> to vector<4x55xf32>
    %114 = tpu.concatenate %112, %113 in 1 : vector<4x457xf32>, vector<4x55xf32> -> vector<4x512xf32>
    %c18 = arith.constant 18 : index
    %c0_24 = arith.constant 0 : index
    %115 = vector.load %arg5[%c18, %c0_24] : memref<27x512xf32, #tpu.memory_space<vmem>>, vector<1x512xf32>
    %116 = vector.broadcast %115 : vector<1x512xf32> to vector<4x512xf32>
    %117 = arith.mulf %114, %116 : vector<4x512xf32>
    %118 = vector.extract_strided_slice %9 {offsets = [0, 56], sizes = [4, 456], strides = [1, 1]} : vector<4x512xf32> to vector<4x456xf32>
    %119 = vector.extract_strided_slice %9 {offsets = [0, 0], sizes = [4, 56], strides = [1, 1]} : vector<4x512xf32> to vector<4x56xf32>
    %120 = tpu.concatenate %118, %119 in 1 : vector<4x456xf32>, vector<4x56xf32> -> vector<4x512xf32>
    %c19 = arith.constant 19 : index
    %c0_25 = arith.constant 0 : index
    %121 = vector.load %arg5[%c19, %c0_25] : memref<27x512xf32, #tpu.memory_space<vmem>>, vector<1x512xf32>
    %122 = vector.broadcast %121 : vector<1x512xf32> to vector<4x512xf32>
    %123 = arith.mulf %120, %122 : vector<4x512xf32>
    %124 = vector.extract_strided_slice %9 {offsets = [0, 57], sizes = [4, 455], strides = [1, 1]} : vector<4x512xf32> to vector<4x455xf32>
    %125 = vector.extract_strided_slice %9 {offsets = [0, 0], sizes = [4, 57], strides = [1, 1]} : vector<4x512xf32> to vector<4x57xf32>
    %126 = tpu.concatenate %124, %125 in 1 : vector<4x455xf32>, vector<4x57xf32> -> vector<4x512xf32>
    %c20 = arith.constant 20 : index
    %c0_26 = arith.constant 0 : index
    %127 = vector.load %arg5[%c20, %c0_26] : memref<27x512xf32, #tpu.memory_space<vmem>>, vector<1x512xf32>
    %128 = vector.broadcast %127 : vector<1x512xf32> to vector<4x512xf32>
    %129 = arith.mulf %126, %128 : vector<4x512xf32>
    %130 = vector.extract_strided_slice %9 {offsets = [0, 63], sizes = [4, 449], strides = [1, 1]} : vector<4x512xf32> to vector<4x449xf32>
    %131 = vector.extract_strided_slice %9 {offsets = [0, 0], sizes = [4, 63], strides = [1, 1]} : vector<4x512xf32> to vector<4x63xf32>
    %132 = tpu.concatenate %130, %131 in 1 : vector<4x449xf32>, vector<4x63xf32> -> vector<4x512xf32>
    %c21 = arith.constant 21 : index
    %c0_27 = arith.constant 0 : index
    %133 = vector.load %arg5[%c21, %c0_27] : memref<27x512xf32, #tpu.memory_space<vmem>>, vector<1x512xf32>
    %134 = vector.broadcast %133 : vector<1x512xf32> to vector<4x512xf32>
    %135 = arith.mulf %132, %134 : vector<4x512xf32>
    %136 = vector.extract_strided_slice %9 {offsets = [0, 64], sizes = [4, 448], strides = [1, 1]} : vector<4x512xf32> to vector<4x448xf32>
    %137 = vector.extract_strided_slice %9 {offsets = [0, 0], sizes = [4, 64], strides = [1, 1]} : vector<4x512xf32> to vector<4x64xf32>
    %138 = tpu.concatenate %136, %137 in 1 : vector<4x448xf32>, vector<4x64xf32> -> vector<4x512xf32>
    %c22 = arith.constant 22 : index
    %c0_28 = arith.constant 0 : index
    %139 = vector.load %arg5[%c22, %c0_28] : memref<27x512xf32, #tpu.memory_space<vmem>>, vector<1x512xf32>
    %140 = vector.broadcast %139 : vector<1x512xf32> to vector<4x512xf32>
    %141 = arith.mulf %138, %140 : vector<4x512xf32>
    %142 = vector.extract_strided_slice %9 {offsets = [0, 65], sizes = [4, 447], strides = [1, 1]} : vector<4x512xf32> to vector<4x447xf32>
    %143 = vector.extract_strided_slice %9 {offsets = [0, 0], sizes = [4, 65], strides = [1, 1]} : vector<4x512xf32> to vector<4x65xf32>
    %144 = tpu.concatenate %142, %143 in 1 : vector<4x447xf32>, vector<4x65xf32> -> vector<4x512xf32>
    %c23 = arith.constant 23 : index
    %c0_29 = arith.constant 0 : index
    %145 = vector.load %arg5[%c23, %c0_29] : memref<27x512xf32, #tpu.memory_space<vmem>>, vector<1x512xf32>
    %146 = vector.broadcast %145 : vector<1x512xf32> to vector<4x512xf32>
    %147 = arith.mulf %144, %146 : vector<4x512xf32>
    %148 = vector.extract_strided_slice %9 {offsets = [0, 71], sizes = [4, 441], strides = [1, 1]} : vector<4x512xf32> to vector<4x441xf32>
    %149 = vector.extract_strided_slice %9 {offsets = [0, 0], sizes = [4, 71], strides = [1, 1]} : vector<4x512xf32> to vector<4x71xf32>
    %150 = tpu.concatenate %148, %149 in 1 : vector<4x441xf32>, vector<4x71xf32> -> vector<4x512xf32>
    %c24 = arith.constant 24 : index
    %c0_30 = arith.constant 0 : index
    %151 = vector.load %arg5[%c24, %c0_30] : memref<27x512xf32, #tpu.memory_space<vmem>>, vector<1x512xf32>
    %152 = vector.broadcast %151 : vector<1x512xf32> to vector<4x512xf32>
    %153 = arith.mulf %150, %152 : vector<4x512xf32>
    %154 = vector.extract_strided_slice %9 {offsets = [0, 72], sizes = [4, 440], strides = [1, 1]} : vector<4x512xf32> to vector<4x440xf32>
    %155 = vector.extract_strided_slice %9 {offsets = [0, 0], sizes = [4, 72], strides = [1, 1]} : vector<4x512xf32> to vector<4x72xf32>
    %156 = tpu.concatenate %154, %155 in 1 : vector<4x440xf32>, vector<4x72xf32> -> vector<4x512xf32>
    %c25 = arith.constant 25 : index
    %c0_31 = arith.constant 0 : index
    %157 = vector.load %arg5[%c25, %c0_31] : memref<27x512xf32, #tpu.memory_space<vmem>>, vector<1x512xf32>
    %158 = vector.broadcast %157 : vector<1x512xf32> to vector<4x512xf32>
    %159 = arith.mulf %156, %158 : vector<4x512xf32>
    %160 = vector.extract_strided_slice %9 {offsets = [0, 73], sizes = [4, 439], strides = [1, 1]} : vector<4x512xf32> to vector<4x439xf32>
    %161 = vector.extract_strided_slice %9 {offsets = [0, 0], sizes = [4, 73], strides = [1, 1]} : vector<4x512xf32> to vector<4x73xf32>
    %162 = tpu.concatenate %160, %161 in 1 : vector<4x439xf32>, vector<4x73xf32> -> vector<4x512xf32>
    %c26 = arith.constant 26 : index
    %c0_32 = arith.constant 0 : index
    %163 = vector.load %arg5[%c26, %c0_32] : memref<27x512xf32, #tpu.memory_space<vmem>>, vector<1x512xf32>
    %164 = vector.broadcast %163 : vector<1x512xf32> to vector<4x512xf32>
    %165 = arith.mulf %162, %164 : vector<4x512xf32>
    %166 = tpu.concatenate %15, %21, %27, %33, %39, %45, %51, %57, %63, %69, %75, %81, %87, %9, %93, %99 in 0 : vector<4x512xf32>, vector<4x512xf32>, vector<4x512xf32>, vector<4x512xf32>, vector<4x512xf32>, vector<4x512xf32>, vector<4x512xf32>, vector<4x512xf32>, vector<4x512xf32>, vector<4x512xf32>, vector<4x512xf32>, vector<4x512xf32>, vector<4x512xf32>, vector<4x512xf32>, vector<4x512xf32>, vector<4x512xf32> -> vector<64x512xf32>
    %167 = tpu.concatenate %105, %111, %117, %123, %129, %135, %141, %147, %153, %159, %165 in 0 : vector<4x512xf32>, vector<4x512xf32>, vector<4x512xf32>, vector<4x512xf32>, vector<4x512xf32>, vector<4x512xf32>, vector<4x512xf32>, vector<4x512xf32>, vector<4x512xf32>, vector<4x512xf32>, vector<4x512xf32> -> vector<44x512xf32>
    %168 = tpu.concatenate %166, %167 in 0 : vector<64x512xf32>, vector<44x512xf32> -> vector<108x512xf32>
    %c0_33 = arith.constant 0 : index
    %c0_34 = arith.constant 0 : index
    %169 = vector.load %arg4[%c0_33, %c0_34] : memref<4x108xf32, #tpu.memory_space<vmem>>, vector<4x108xf32>
    %cst_35 = arith.constant dense<0.000000e+00> : vector<4x512xf32>
    %170 = tpu.matmul %169, %168, %cst_35 {dimension_numbers = #tpu.dot_dimension_numbers<[1], [0], [0], [1], [0, 0, 1, 1], [], []>} : vector<4x108xf32>, vector<108x512xf32>, vector<4x512xf32> -> vector<4x512xf32>
    %cst_36 = arith.constant dense<0.000000e+00> : vector<4xf32>
    %171 = vector.multi_reduction <add>, %170, %cst_36 [1] : vector<4x512xf32> to vector<4xf32>
    %172 = vector.shape_cast %171 : vector<4xf32> to vector<4x1xf32>
    %173 = arith.mulf %170, %170 : vector<4x512xf32>
    %cst_37 = arith.constant dense<0.000000e+00> : vector<4xf32>
    %174 = vector.multi_reduction <add>, %173, %cst_37 [1] : vector<4x512xf32> to vector<4xf32>
    %175 = vector.shape_cast %174 : vector<4xf32> to vector<4x1xf32>
    %176 = tpu.concatenate %172, %175 in 1 : vector<4x1xf32>, vector<4x1xf32> -> vector<4x2xf32>
    %177 = vector.shape_cast %176 : vector<4x2xf32> to vector<1x4x2xf32>
    %c0_38 = arith.constant 0 : index
    %c0_39 = arith.constant 0 : index
    %c0_40 = arith.constant 0 : index
    %178 = vector.load %arg7[%c0_38, %c0_39, %c0_40] : memref<1x4x2xf32, #tpu.memory_space<vmem>>, vector<1x4x2xf32>
    tpu.vector_store %arg7[%c0_38, %c0_39, %c0_40], %177 {strides = array<i32>} : memref<1x4x2xf32, #tpu.memory_space<vmem>>, vector<1x4x2xf32>,
    %179 = vector.shape_cast %170 : vector<4x512xf32> to vector<1x4x512xf32>
    %c0_41 = arith.constant 0 : index
    %c0_42 = arith.constant 0 : index
    %c0_43 = arith.constant 0 : index
    %180 = vector.load %arg6[%c0_41, %c0_42, %c0_43] : memref<1x4x512xf32, #tpu.memory_space<vmem>>, vector<1x4x512xf32>
    tpu.vector_store %arg6[%c0_41, %c0_42, %c0_43], %179 {strides = array<i32>} : memref<1x4x512xf32, #tpu.memory_space<vmem>>, vector<1x4x512xf32>,
    return
  }
  func.func @transform_0(%arg0: i32) -> (i32, i32, i32) {
    %c0_i32 = arith.constant 0 : i32
    %c0_i32_0 = arith.constant 0 : i32
    %c0_i32_1 = arith.constant 0 : i32
    return %arg0, %c0_i32, %c0_i32_0 : i32, i32, i32
  }
  func.func @transform_1(%arg0: i32) -> (i32, i32) {
    %c0_i32 = arith.constant 0 : i32
    %c0_i32_0 = arith.constant 0 : i32
    %c0_i32_1 = arith.constant 0 : i32
    return %c0_i32, %c0_i32_0 : i32, i32
  }
  func.func @transform_2(%arg0: i32) -> (i32, i32) {
    %c0_i32 = arith.constant 0 : i32
    %c0_i32_0 = arith.constant 0 : i32
    %c0_i32_1 = arith.constant 0 : i32
    return %c0_i32, %c0_i32_0 : i32, i32
  }
  func.func @transform_3(%arg0: i32) -> (i32, i32) {
    %c0_i32 = arith.constant 0 : i32
    %c0_i32_0 = arith.constant 0 : i32
    %c0_i32_1 = arith.constant 0 : i32
    return %c0_i32, %c0_i32_0 : i32, i32
  }
  func.func @transform_4(%arg0: i32) -> (i32, i32) {
    %c0_i32 = arith.constant 0 : i32
    %c0_i32_0 = arith.constant 0 : i32
    %c0_i32_1 = arith.constant 0 : i32
    return %c0_i32, %c0_i32_0 : i32, i32
  }
  func.func @transform_5(%arg0: i32) -> (i32, i32, i32) {
    %c0_i32 = arith.constant 0 : i32
    %c0_i32_0 = arith.constant 0 : i32
    %c0_i32_1 = arith.constant 0 : i32
    return %arg0, %c0_i32, %c0_i32_0 : i32, i32, i32
  }
  func.func @transform_6(%arg0: i32) -> (i32, i32, i32) {
    %c0_i32 = arith.constant 0 : i32
    %c0_i32_0 = arith.constant 0 : i32
    %c0_i32_1 = arith.constant 0 : i32
    return %arg0, %c0_i32, %c0_i32_0 : i32, i32, i32
  }
}

</mosaic_0001>

<llo_original>
// kernel: resblock3d.5
$region0: #{resblock3d.5}
  #allocation0 [shape = 'u32[]', space=smem, size = 0x4, offset = 0x4, fixed_abs, tag = 'smem constant byte address 0x4 - core index']
  #allocation1 [shape = 'u32[144,128]{1,0:T(1,128)}', space=vmem, size = 0x12000, scoped, tag = 'internal scratch']
  %s0 = inlined_call_operand.vmem [shape: f32[2,4,512], index: 0, kind: input, shape index: {}]
  %s1 = inlined_call_operand.vmem [shape: f32[2,4,512], index: 1, kind: input, shape index: {}]
  %s2 = inlined_call_operand.vmem [shape: f32[4,1], index: 2, kind: input, shape index: {}]
  %s3 = inlined_call_operand.vmem [shape: f32[4,1], index: 3, kind: input, shape index: {}]
  %s4 = inlined_call_operand.vmem [shape: f32[8,4], index: 4, kind: input, shape index: {}]
  %s5 = inlined_call_operand.vmem [shape: f32[8,1], index: 5, kind: input, shape index: {}]
  %s6 = inlined_call_operand.vmem [shape: f32[2,8,512], index: 6, kind: output, shape index: {}]
  %s7 = sld [smem:[#allocation0]]
  $region57: #{resblock3d.5} parent=0
    _
  %s9 = ssub.s32 1, %s7
  %s10 = scalar_select 0, %s9, %s7
  loop: start=0, step=1, limit=4
  $region2: #{resblock3d.5} parent=0 // loop_pre_header
    _
  $region3: #{resblock3d.5} parent=0 // loop_header
    %s12 = sphi 0, %s16
    %p13 = scmp.ge.s32.totalorder %s12, 4
    %s22 = sphi 0, %s24
    %s25 = sphi 0, %s22
    %s26 = sphi 0, %s25
    %s42 = sphi 0, %s26
    %s48 = sphi 0, %s50
    %s51 = sphi 0, %s48
    %s52 = sphi 0, %s51
    %s68 = sphi 0, %s52
    %s72 = sphi 0, %s72
    %s74 = sphi 0, %s72
    %s75 = sphi 0, %s74
    %s89 = sphi 0, %s75
    %s93 = sphi 0, %s93
    %s95 = sphi 0, %s93
    %s96 = sphi 0, %s95
    %s110 = sphi 0, %s96
    %s114 = sphi 0, %s114
    %s116 = sphi 0, %s114
    %s117 = sphi 0, %s116
    %s131 = sphi 0, %s117
    %s135 = sphi 0, %s135
    %s137 = sphi 0, %s135
    %s138 = sphi 0, %s137
    %s152 = sphi 0, %s138
    %s158 = sphi 0, %s160
    %s161 = sphi 0, %s158
    %s162 = sphi 0, %s161
    %s178 = sphi 0, %s162
  $region4: #{resblock3d.5} parent=0 // loop_header_branch
    %15 = sbr.rel (%p13) target = $region8
  $region5: #{resblock3d.5} parent=0 // loop_body
    %s17 = ssub.s32 %s12, 1
    %s18 = ssub.s32 %s12, 2
    %s19 = sadd.s32 %s12, 1
    %s20 = ssub.s32 %s12, %s19
    %p21 = scmp.eq.s32.totalorder %s20, 0
    %s23 = sadd.s32 %s22, 1
    %s24 = scalar_select %p21, %s22, %s23
    %p27 = pneg %p21
    %p28 = scmp.eq.s32.totalorder %s12, 1
    %p29 = por %p27, %p28
    %p30 = scmp.ne.s32.totalorder %s22, %s25
    %p31 = scmp.eq.s32.totalorder %s12, 0
    %p32 = por %p30, %p31
    %p33 = scmp.ne.s32.totalorder %s22, %s25
    %p34 = scmp.eq.s32.totalorder %s17, 1
    %p35 = por %p33, %p34
    %p36 = scmp.ne.s32.totalorder %s25, %s26
    %p37 = scmp.eq.s32.totalorder %s17, 0
    %p38 = por %p36, %p37
    %p39 = scmp.ne.s32.totalorder %s25, %s26
    %p40 = scmp.eq.s32.totalorder %s18, 1
    %p41 = por %p39, %p40
    %p43 = scmp.ne.s32.totalorder %s26, %s42
    %p44 = scmp.eq.s32.totalorder %s18, 0
    %p45 = por %p43, %p44
    %s46 = ssub.s32 %s12, %s19
    %p47 = scmp.eq.s32.totalorder %s46, 0
    %s49 = sadd.s32 %s48, 1
    %s50 = scalar_select %p47, %s48, %s49
    %p53 = pneg %p47
    %p54 = scmp.eq.s32.totalorder %s12, 1
    %p55 = por %p53, %p54
    %p56 = scmp.ne.s32.totalorder %s48, %s51
    %p57 = scmp.eq.s32.totalorder %s12, 0
    %p58 = por %p56, %p57
    %p59 = scmp.ne.s32.totalorder %s48, %s51
    %p60 = scmp.eq.s32.totalorder %s17, 1
    %p61 = por %p59, %p60
    %p62 = scmp.ne.s32.totalorder %s51, %s52
    %p63 = scmp.eq.s32.totalorder %s17, 0
    %p64 = por %p62, %p63
    %p65 = scmp.ne.s32.totalorder %s51, %s52
    %p66 = scmp.eq.s32.totalorder %s18, 1
    %p67 = por %p65, %p66
    %p69 = scmp.ne.s32.totalorder %s52, %s68
    %p70 = scmp.eq.s32.totalorder %s18, 0
    %p71 = por %p69, %p70
    %s73 = sadd.s32 %s72, 1
    %p76 = scmp.eq.s32.totalorder %s12, 1
    %p77 = scmp.ne.s32.totalorder %s72, %s74
    %p78 = scmp.eq.s32.totalorder %s12, 0
    %p79 = por %p77, %p78
    %p80 = scmp.ne.s32.totalorder %s72, %s74
    %p81 = scmp.eq.s32.totalorder %s17, 1
    %p82 = por %p80, %p81
    %p83 = scmp.ne.s32.totalorder %s74, %s75
    %p84 = scmp.eq.s32.totalorder %s17, 0
    %p85 = por %p83, %p84
    %p86 = scmp.ne.s32.totalorder %s74, %s75
    %p87 = scmp.eq.s32.totalorder %s18, 1
    %p88 = por %p86, %p87
    %p90 = scmp.ne.s32.totalorder %s75, %s89
    %p91 = scmp.eq.s32.totalorder %s18, 0
    %p92 = por %p90, %p91
    %s94 = sadd.s32 %s93, 1
    %p97 = scmp.eq.s32.totalorder %s12, 1
    %p98 = scmp.ne.s32.totalorder %s93, %s95
    %p99 = scmp.eq.s32.totalorder %s12, 0
    %p100 = por %p98, %p99
    %p101 = scmp.ne.s32.totalorder %s93, %s95
    %p102 = scmp.eq.s32.totalorder %s17, 1
    %p103 = por %p101, %p102
    %p104 = scmp.ne.s32.totalorder %s95, %s96
    %p105 = scmp.eq.s32.totalorder %s17, 0
    %p106 = por %p104, %p105
    %p107 = scmp.ne.s32.totalorder %s95, %s96
    %p108 = scmp.eq.s32.totalorder %s18, 1
    %p109 = por %p107, %p108
    %p111 = scmp.ne.s32.totalorder %s96, %s110
    %p112 = scmp.eq.s32.totalorder %s18, 0
    %p113 = por %p111, %p112
    %s115 = sadd.s32 %s114, 1
    %p118 = scmp.eq.s32.totalorder %s12, 1
    %p119 = scmp.ne.s32.totalorder %s114, %s116
    %p120 = scmp.eq.s32.totalorder %s12, 0
    %p121 = por %p119, %p120
    %p122 = scmp.ne.s32.totalorder %s114, %s116
    %p123 = scmp.eq.s32.totalorder %s17, 1
    %p124 = por %p122, %p123
    %p125 = scmp.ne.s32.totalorder %s116, %s117
    %p126 = scmp.eq.s32.totalorder %s17, 0
    %p127 = por %p125, %p126
    %p128 = scmp.ne.s32.totalorder %s116, %s117
    %p129 = scmp.eq.s32.totalorder %s18, 1
    %p130 = por %p128, %p129
    %p132 = scmp.ne.s32.totalorder %s117, %s131
    %p133 = scmp.eq.s32.totalorder %s18, 0
    %p134 = por %p132, %p133
    %s136 = sadd.s32 %s135, 1
    %p139 = scmp.eq.s32.totalorder %s12, 1
    %p140 = scmp.ne.s32.totalorder %s135, %s137
    %p141 = scmp.eq.s32.totalorder %s12, 0
    %p142 = por %p140, %p141
    %p143 = scmp.ne.s32.totalorder %s135, %s137
    %p144 = scmp.eq.s32.totalorder %s17, 1
    %p145 = por %p143, %p144
    %p146 = scmp.ne.s32.totalorder %s137, %s138
    %p147 = scmp.eq.s32.totalorder %s17, 0
    %p148 = por %p146, %p147
    %p149 = scmp.ne.s32.totalorder %s137, %s138
    %p150 = scmp.eq.s32.totalorder %s18, 1
    %p151 = por %p149, %p150
    %p153 = scmp.ne.s32.totalorder %s138, %s152
    %p154 = scmp.eq.s32.totalorder %s18, 0
    %p155 = por %p153, %p154
    %s156 = ssub.s32 %s12, %s19
    %p157 = scmp.eq.s32.totalorder %s156, 0
    %s159 = sadd.s32 %s158, 1
    %s160 = scalar_select %p157, %s158, %s159
    %p163 = pneg %p157
    %p164 = scmp.eq.s32.totalorder %s12, 1
    %p165 = por %p163, %p164
    %p166 = scmp.ne.s32.totalorder %s158, %s161
    %p167 = scmp.eq.s32.totalorder %s12, 0
    %p168 = por %p166, %p167
    %p169 = scmp.ne.s32.totalorder %s158, %s161
    %p170 = scmp.eq.s32.totalorder %s17, 1
    %p171 = por %p169, %p170
    %p172 = scmp.ne.s32.totalorder %s161, %s162
    %p173 = scmp.eq.s32.totalorder %s17, 0
    %p174 = por %p172, %p173
    %p175 = scmp.ne.s32.totalorder %s161, %s162
    %p176 = scmp.eq.s32.totalorder %s18, 1
    %p177 = por %p175, %p176
    %p179 = scmp.ne.s32.totalorder %s162, %s178
    %p180 = scmp.eq.s32.totalorder %s18, 0
    %p181 = por %p179, %p180
    %p182 = scmp.le.s32.totalorder 1, %s12
    %p183 = scmp.lt.s32.totalorder %s12, 3
    %p184 = pnand %p182, %p183
    %p185 = pneg %p184
    // Predicated region
    $region9: #{resblock3d.5} parent=5 // pred_check
      _
    $region10: #{resblock3d.5} parent=5 // pred_check_branch
      %187 = sbr.rel (%p184) target = $region12
    $region11: #{resblock3d.5} parent=5 // pred_region
      %s188 = ssub.s32 %s12, 1
      // Predicated region
      $region13: #{resblock3d.5} parent=11 // pred_check
        %p189 = pneg %p85
      $region14: #{resblock3d.5} parent=11 // pred_check_branch
        %191 = sbr.rel (%p189) target = $region16
      $region15: #{resblock3d.5} parent=11 // pred_region
        _
      $region16: #{resblock3d.5} parent=11 // pred_fallthru
        _
      // Predicated region
      $region17: #{resblock3d.5} parent=11 // pred_check
        %p192 = pneg %p106
      $region18: #{resblock3d.5} parent=11 // pred_check_branch
        %194 = sbr.rel (%p192) target = $region20
      $region19: #{resblock3d.5} parent=11 // pred_region
        _
      $region20: #{resblock3d.5} parent=11 // pred_fallthru
        _
      // Predicated region
      $region21: #{resblock3d.5} parent=11 // pred_check
        %p195 = pneg %p127
      $region22: #{resblock3d.5} parent=11 // pred_check_branch
        %197 = sbr.rel (%p195) target = $region24
      $region23: #{resblock3d.5} parent=11 // pred_region
        _
      $region24: #{resblock3d.5} parent=11 // pred_fallthru
        _
      // Predicated region
      $region25: #{resblock3d.5} parent=11 // pred_check
        %p198 = pneg %p148
      $region26: #{resblock3d.5} parent=11 // pred_check_branch
        %200 = sbr.rel (%p198) target = $region28
      $region27: #{resblock3d.5} parent=11 // pred_region
        _
      $region28: #{resblock3d.5} parent=11 // pred_fallthru
        _
    $region12: #{resblock3d.5} parent=5 // pred_fallthru
      _
    %p201 = scmp.lt.s32.totalorder %s12, 2
    // Predicated region
    $region29: #{resblock3d.5} parent=5 // pred_check
      %p202 = pneg %p201
    $region30: #{resblock3d.5} parent=5 // pred_check_branch
      %204 = sbr.rel (%p202) target = $region32
    $region31: #{resblock3d.5} parent=5 // pred_region
      // Predicated region
      $region33: #{resblock3d.5} parent=31 // pred_check
        %p205 = pneg %p32
      $region34: #{resblock3d.5} parent=31 // pred_check_branch
        %207 = sbr.rel (%p205) target = $region36
      $region35: #{resblock3d.5} parent=31 // pred_region
        %p208 = scmp.lt.s32.totalorder %s12, 1
        %s209 = scalar_select %p208, %s12, 1
        %s210 = smul.addr %s209, 4
        %s211 = smul.addr %s210, 4
        %s212 = scalar_lea.vmem %s0, %s211
      $region36: #{resblock3d.5} parent=31 // pred_fallthru
        _
      // Predicated region
      $region37: #{resblock3d.5} parent=31 // pred_check
        %p213 = pneg %p58
      $region38: #{resblock3d.5} parent=31 // pred_check_branch
        %215 = sbr.rel (%p213) target = $region40
      $region39: #{resblock3d.5} parent=31 // pred_region
        %p216 = scmp.lt.s32.totalorder %s12, 1
        %s217 = scalar_select %p216, %s12, 1
        %s218 = smul.addr %s217, 4
        %s219 = smul.addr %s218, 4
        %s220 = scalar_lea.vmem %s1, %s219
      $region40: #{resblock3d.5} parent=31 // pred_fallthru
        _
    $region32: #{resblock3d.5} parent=5 // pred_fallthru
      _
    %p221 = scmp.le.s32.totalorder 1, %s12
    %p222 = scmp.lt.s32.totalorder %s12, 3
    %p223 = pnand %p221, %p222
    %p224 = pneg %p223
    // Predicated region
    $region41: #{resblock3d.5} parent=5 // pred_check
      _
    $region42: #{resblock3d.5} parent=5 // pred_check_branch
      %226 = sbr.rel (%p223) target = $region44
    $region43: #{resblock3d.5} parent=5 // pred_region
      %s227 = ssub.s32 %s12, 1
      %p228 = scmp.lt.s32.totalorder %s17, 1
      %s229 = scalar_select %p228, %s17, 1
      %s230 = smul.addr %s229, 4
      %s231 = smul.addr %s230, 4
      %s232 = scalar_lea.vmem %s0, %s231
      %p233 = pneg %p38
      %p234 = pneg %p35
      %p235 = scmp.lt.s32.totalorder %s17, 1
      %s236 = scalar_select %p235, %s17, 1
      %s237 = smul.addr %s236, 4
      %s238 = smul.addr %s237, 4
      %s239 = scalar_lea.vmem %s1, %s238
      %p240 = pneg %p64
      %p241 = pneg %p61
      %p242 = pneg %p85
      %p243 = pneg %p82
      %p244 = pneg %p106
      %p245 = pneg %p103
      %p246 = pneg %p127
      %p247 = pneg %p124
      %p248 = pneg %p148
      %p249 = pneg %p145
      %p250 = pneg %p174
      %p251 = pneg %p171
      %p252 = scmp.lt.s32.totalorder %s17, 1
      %s253 = scalar_select %p252, %s17, 1
      %s254 = smul.addr %s253, 4
      %s255 = smul.addr %s254, 8
      %s256 = scalar_lea.vmem %s6, %s255
      %p257 = scmp.lt.s32.totalorder %s17, 1
      %s258 = scalar_select %p257, %s17, 1
      %s259 = smul.addr %s258, 4
      %s260 = smul.addr %s259, 4
      %s261 = scalar_lea.vmem %s0, %s260
      %p262 = scmp.lt.s32.totalorder %s17, 1
      %s263 = scalar_select %p262, %s17, 1
      %s264 = smul.addr %s263, 4
      %s265 = smul.addr %s264, 4
      %s266 = scalar_lea.vmem %s1, %s265
      %p267 = scmp.lt.s32.totalorder %s17, 1
      %s268 = scalar_select %p267, %s17, 1
      %s269 = smul.addr %s268, 4
      %s270 = smul.addr %s269, 8
      %s271 = scalar_lea.vmem %s6, %s270
      %v272 = vld [vmem:[%s261] sm:$0xff]
      %v273 = vld [vmem:[%s261 + $0x8] sm:$0xff]
      %v274 = vld [vmem:[%s2] sm:$0xf]
      %276 = vset.pattern.permute.xlu0 0
      %277 = vperm.xlu0 %276, %v274
      %v278 = vpop.permute.xlu0 %277
      %v280 = vunpack.c.l.s4 839922192
      %v281 = vunpack.c.0.s8 %v280
      %v282 = vlaneseq
      %v283 = vshrl.u32 %v282, 7
      %v284 = vsub.s32 %v281, %v283
      %v285 = vrot.slane %v278, %v284
      %v287 = vmul.f32 %v272, %v285
      %v288 = vmul.f32 %v273, %v285
      %v289 = vld [vmem:[%s3] sm:$0xf]
      %291 = vset.pattern.permute.xlu0 0
      %292 = vperm.xlu0 %291, %v289
      %v293 = vpop.permute.xlu0 %292
      %v295 = vunpack.c.l.s4 839922192
      %v296 = vunpack.c.0.s8 %v295
      %v297 = vlaneseq
      %v298 = vshrl.u32 %v297, 7
      %v299 = vsub.s32 %v296, %v298
      %v300 = vrot.slane %v293, %v299
      %v302 = vadd.f32 %v287, %v300
      %v303 = vadd.f32 %v288, %v300
      %v304 = vld [vmem:[%s266] sm:$0xff]
      %v305 = vld [vmem:[%s266 + $0x8] sm:$0xff]
      %v306 = vadd.f32 %v302, %v304
      %v307 = vadd.f32 %v303, %v305
      %v308 = vmax.f32 %v306, 0.0
      %v309 = vmax.f32 %v307, 0.0
      %v310 = vld [vmem:[%s4] sm:$0xff]
      %v311 = vld [vmem:[%s5] sm:$0xff]
      %313 = vset.pattern.permute.xlu0 0
      %314 = vperm.xlu0 %313, %v311
      %v315 = vpop.permute.xlu0 %314
      %v319 = vcombine.high %v308, %v308
      %v320 = vcombine.high %v309, %v309
      %vm321 = vcmask 31744
      %v323 = vsel %vm321, %v310, 0
      %vm325 = vcmask 1043456
      %v326 = vsel %vm325, %v308, 0
      %v328 = vsel %vm325, %v319, 0
      %v330 = vsel %vm325, %v309, 0
      %v332 = vsel %vm325, %v320, 0
      %334 = vmatprep.subr.mxu0 0.0
      %335 = vmatpush1.msra.mxu0 0.0
      %336 = vmatprep.subr.mxu0 0.0
      %337 = vmatpush1.msra.mxu0 0.0
      %338 = vmatprep.subr.mxu0 0.0
      %339 = vmatpush1.msra.mxu0 0.0
      %340 = vmatprep.subr.mxu0 0.0
      %341 = vmatpush1.msra.mxu0 0.0
      %342 = vmatprep.subr.mxu0 0.0
      %343 = vmatpush1.msra.mxu0 0.0
      %344 = vmatprep.subr.mxu0 0.0
      %345 = vmatpush1.msra.mxu0 0.0
      %346 = vmatprep.subr.mxu0 0.0
      %347 = vmatpush1.msra.mxu0 0.0
      %348 = vmatprep.subr.mxu0 0.0
      %349 = vmatpush1.msra.mxu0 0.0
      %350 = vmatprep.subr.mxu0 0.0
      %351 = vmatpush1.msra.mxu0 0.0
      %352 = vmatprep.subr.mxu0 0.0
      %353 = vmatpush1.msra.mxu0 0.0
      %354 = vmatprep.subr.mxu0 0.0
      %355 = vmatpush1.msra.mxu0 0.0
      %356 = vmatprep.subr.mxu0 0.0
      %357 = vmatpush1.msra.mxu0 0.0
      %358 = vmatprep.subr.mxu0 0.0
      %359 = vmatpush1.msra.mxu0 0.0
      %360 = vmatprep.subr.mxu0 0.0
      %361 = vmatpush1.msra.mxu0 0.0
      %362 = vmatprep.subr.mxu0 0.0
      %363 = vmatpush1.msra.mxu0 0.0
      %364 = vmatprep.subr.mxu0 %v328
      %365 = vmatpush1.msra.mxu0 %v326
      %366 = vmatprep.subr.mxu0 0.0
      %367 = vmatpush2.msra.mxu0 0.0
      %368 = vmatprep.subr.mxu0 0.0
      %369 = vmatpush2.msra.mxu0 0.0
      %370 = vmatprep.subr.mxu0 0.0
      %371 = vmatpush2.msra.mxu0 0.0
      %372 = vmatprep.subr.mxu0 0.0
      %373 = vmatpush2.msra.mxu0 0.0
      %374 = vmatprep.subr.mxu0 0.0
      %375 = vmatpush2.msra.mxu0 0.0
      %376 = vmatprep.subr.mxu0 0.0
      %377 = vmatpush2.msra.mxu0 0.0
      %378 = vmatprep.subr.mxu0 0.0
      %379 = vmatpush2.msra.mxu0 0.0
      %380 = vmatprep.subr.mxu0 0.0
      %381 = vmatpush2.msra.mxu0 0.0
      %382 = vmatprep.subr.mxu0 0.0
      %383 = vmatpush2.msra.mxu0 0.0
      %384 = vmatprep.subr.mxu0 0.0
      %385 = vmatpush2.msra.mxu0 0.0
      %386 = vmatprep.subr.mxu0 0.0
      %387 = vmatpush2.msra.mxu0 0.0
      %388 = vmatprep.subr.mxu0 0.0
      %389 = vmatpush2.msra.mxu0 0.0
      %390 = vmatprep.subr.mxu0 0.0
      %391 = vmatpush2.msra.mxu0 0.0
      %392 = vmatprep.subr.mxu0 0.0
      %393 = vmatpush2.msra.mxu0 0.0
      %394 = vmatprep.subr.mxu0 0.0
      %395 = vmatpush2.msra.mxu0 0.0
      %396 = vmatprep.subr.mxu0 0.0
      %397 = vmatpush2.msra.mxu0 0.0
      %398 = vmatprep.mubr.f32.mxu0 0.0
      %399 = vmatmul.mubr.f32.gmra.mxu0 %v323
      %v400 = vpop.f32.mrf.mxu0
      %v401 = vadd.f32 %v315, %v400
      %v402 = vpop.f32.mrf.mxu0
      %v403 = vadd.f32 %v315, %v402
      %404 = vdwg.mxu0
      %405 = vmatprep.subr.mxu0 0.0
      %406 = vmatpush1.msra.mxu0 0.0
      %407 = vmatprep.subr.mxu0 0.0
      %408 = vmatpush1.msra.mxu0 0.0
      %409 = vmatprep.subr.mxu0 0.0
      %410 = vmatpush1.msra.mxu0 0.0
      %411 = vmatprep.subr.mxu0 0.0
      %412 = vmatpush1.msra.mxu0 0.0
      %413 = vmatprep.subr.mxu0 0.0
      %414 = vmatpush1.msra.mxu0 0.0
      %415 = vmatprep.subr.mxu0 0.0
      %416 = vmatpush1.msra.mxu0 0.0
      %417 = vmatprep.subr.mxu0 0.0
      %418 = vmatpush1.msra.mxu0 0.0
      %419 = vmatprep.subr.mxu0 0.0
      %420 = vmatpush1.msra.mxu0 0.0
      %421 = vmatprep.subr.mxu0 0.0
      %422 = vmatpush1.msra.mxu0 0.0
      %423 = vmatprep.subr.mxu0 0.0
      %424 = vmatpush1.msra.mxu0 0.0
      %425 = vmatprep.subr.mxu0 0.0
      %426 = vmatpush1.msra.mxu0 0.0
      %427 = vmatprep.subr.mxu0 0.0
      %428 = vmatpush1.msra.mxu0 0.0
      %429 = vmatprep.subr.mxu0 0.0
      %430 = vmatpush1.msra.mxu0 0.0
      %431 = vmatprep.subr.mxu0 0.0
      %432 = vmatpush1.msra.mxu0 0.0
      %433 = vmatprep.subr.mxu0 0.0
      %434 = vmatpush1.msra.mxu0 0.0
      %435 = vmatprep.subr.mxu0 %v332
      %436 = vmatpush1.msra.mxu0 %v330
      %437 = vmatprep.subr.mxu0 0.0
      %438 = vmatpush2.msra.mxu0 0.0
      %439 = vmatprep.subr.mxu0 0.0
      %440 = vmatpush2.msra.mxu0 0.0
      %441 = vmatprep.subr.mxu0 0.0
      %442 = vmatpush2.msra.mxu0 0.0
      %443 = vmatprep.subr.mxu0 0.0
      %444 = vmatpush2.msra.mxu0 0.0
      %445 = vmatprep.subr.mxu0 0.0
      %446 = vmatpush2.msra.mxu0 0.0
      %447 = vmatprep.subr.mxu0 0.0
      %448 = vmatpush2.msra.mxu0 0.0
      %449 = vmatprep.subr.mxu0 0.0
      %450 = vmatpush2.msra.mxu0 0.0
      %451 = vmatprep.subr.mxu0 0.0
      %452 = vmatpush2.msra.mxu0 0.0
      %453 = vmatprep.subr.mxu0 0.0
      %454 = vmatpush2.msra.mxu0 0.0
      %455 = vmatprep.subr.mxu0 0.0
      %456 = vmatpush2.msra.mxu0 0.0
      %457 = vmatprep.subr.mxu0 0.0
      %458 = vmatpush2.msra.mxu0 0.0
      %459 = vmatprep.subr.mxu0 0.0
      %460 = vmatpush2.msra.mxu0 0.0
      %461 = vmatprep.subr.mxu0 0.0
      %462 = vmatpush2.msra.mxu0 0.0
      %463 = vmatprep.subr.mxu0 0.0
      %464 = vmatpush2.msra.mxu0 0.0
      %465 = vmatprep.subr.mxu0 0.0
      %466 = vmatpush2.msra.mxu0 0.0
      %467 = vmatprep.subr.mxu0 0.0
      %468 = vmatpush2.msra.mxu0 0.0
      %469 = vmatprep.mubr.f32.mxu0 0.0
      %470 = vmatmul.mubr.f32.gmra.mxu0 %v323
      %v471 = vpop.f32.mrf.mxu0
      %v472 = vadd.f32 %v315, %v471
      %v473 = vpop.f32.mrf.mxu0
      %v474 = vadd.f32 %v315, %v473
      %475 = vdwg.mxu0
      %476 = vst [vmem:[%s271] sm:$0xff] %v401
      %477 = vst [vmem:[%s271 + $0x8] sm:$0xff] %v403
      %478 = vst [vmem:[%s271 + $0x10] sm:$0xff] %v472
      %479 = vst [vmem:[%s271 + $0x18] sm:$0xff] %v474
      %p480 = scmp.lt.s32.totalorder %s17, 1
      %s481 = scalar_select %p480, %s17, 1
      %s482 = smul.addr %s481, 4
      %s483 = smul.addr %s482, 8
      %s484 = scalar_lea.vmem %s6, %s483
      // Predicated region
      $region45: #{resblock3d.5} parent=43 // pred_check
        %p485 = pneg %p171
      $region46: #{resblock3d.5} parent=43 // pred_check_branch
        %487 = sbr.rel (%p485) target = $region48
      $region47: #{resblock3d.5} parent=43 // pred_region
        _
      $region48: #{resblock3d.5} parent=43 // pred_fallthru
        _
    $region44: #{resblock3d.5} parent=5 // pred_fallthru
      _
    %p488 = scmp.le.s32.totalorder 2, %s12
    // Predicated region
    $region49: #{resblock3d.5} parent=5 // pred_check
      %p489 = pneg %p488
    $region50: #{resblock3d.5} parent=5 // pred_check_branch
      %491 = sbr.rel (%p489) target = $region52
    $region51: #{resblock3d.5} parent=5 // pred_region
      %s492 = ssub.s32 %s12, 2
      // Predicated region
      $region53: #{resblock3d.5} parent=51 // pred_check
        %p493 = pneg %p177
      $region54: #{resblock3d.5} parent=51 // pred_check_branch
        %495 = sbr.rel (%p493) target = $region56
      $region55: #{resblock3d.5} parent=51 // pred_region
        %p496 = scmp.lt.s32.totalorder %s18, 1
        %s497 = scalar_select %p496, %s18, 1
        %s498 = smul.addr %s497, 4
        %s499 = smul.addr %s498, 8
        %s500 = scalar_lea.vmem %s6, %s499
      $region56: #{resblock3d.5} parent=51 // pred_fallthru
        _
    $region52: #{resblock3d.5} parent=5 // pred_fallthru
      _
  $region6: #{resblock3d.5} parent=0 // loop_footer
    %s16 = sadd.s32 1, %s12
  $region7: #{resblock3d.5} parent=0 // loop_footer_branch
    %11 = sbr.rel target = $region3
  $region8: #{resblock3d.5} parent=0 // loop_exit
    _

// kernel: resblock3d.3
$region0: #{resblock3d.3}
  #allocation0 [shape = 'u32[]', space=smem, size = 0x4, offset = 0x4, fixed_abs, tag = 'smem constant byte address 0x4 - core index']
  #allocation1 [shape = 'u32[144,128]{1,0:T(1,128)}', space=vmem, size = 0x12000, scoped, tag = 'internal scratch']
  %s0 = inlined_call_operand.vmem [shape: f32[2,4,512], index: 0, kind: input, shape index: {}]
  %s1 = inlined_call_operand.vmem [shape: f32[4,108], index: 1, kind: input, shape index: {}]
  %s2 = inlined_call_operand.vmem [shape: f32[27,512], index: 2, kind: input, shape index: {}]
  %s3 = inlined_call_operand.vmem [shape: f32[2,4,512], index: 3, kind: output, shape index: {0}]
  %s4 = inlined_call_operand.vmem [shape: f32[2,4,2], index: 4, kind: output, shape index: {1}]
  %5 = xla_tuple %s3, %s4
  %s6 = sld [smem:[#allocation0]]
  $region53: #{resblock3d.3} parent=0
    _
  %s8 = ssub.s32 1, %s6
  %s9 = scalar_select 0, %s8, %s6
  loop: start=0, step=1, limit=4
  $region2: #{resblock3d.3} parent=0 // loop_pre_header
    _
  $region3: #{resblock3d.3} parent=0 // loop_header
    %s11 = sphi 0, %s15
    %p12 = scmp.ge.s32.totalorder %s11, 4
    %s21 = sphi 0, %s23
    %s24 = sphi 0, %s21
    %s25 = sphi 0, %s24
    %s41 = sphi 0, %s25
    %s45 = sphi 0, %s45
    %s47 = sphi 0, %s45
    %s48 = sphi 0, %s47
    %s62 = sphi 0, %s48
    %s66 = sphi 0, %s66
    %s68 = sphi 0, %s66
    %s69 = sphi 0, %s68
    %s83 = sphi 0, %s69
    %s89 = sphi 0, %s91
    %s92 = sphi 0, %s89
    %s93 = sphi 0, %s92
    %s109 = sphi 0, %s93
    %s115 = sphi 0, %s117
    %s118 = sphi 0, %s115
    %s119 = sphi 0, %s118
    %s135 = sphi 0, %s119
  $region4: #{resblock3d.3} parent=0 // loop_header_branch
    %14 = sbr.rel (%p12) target = $region8
  $region5: #{resblock3d.3} parent=0 // loop_body
    %s16 = ssub.s32 %s11, 1
    %s17 = ssub.s32 %s11, 2
    %s18 = sadd.s32 %s11, 1
    %s19 = ssub.s32 %s11, %s18
    %p20 = scmp.eq.s32.totalorder %s19, 0
    %s22 = sadd.s32 %s21, 1
    %s23 = scalar_select %p20, %s21, %s22
    %p26 = pneg %p20
    %p27 = scmp.eq.s32.totalorder %s11, 1
    %p28 = por %p26, %p27
    %p29 = scmp.ne.s32.totalorder %s21, %s24
    %p30 = scmp.eq.s32.totalorder %s11, 0
    %p31 = por %p29, %p30
    %p32 = scmp.ne.s32.totalorder %s21, %s24
    %p33 = scmp.eq.s32.totalorder %s16, 1
    %p34 = por %p32, %p33
    %p35 = scmp.ne.s32.totalorder %s24, %s25
    %p36 = scmp.eq.s32.totalorder %s16, 0
    %p37 = por %p35, %p36
    %p38 = scmp.ne.s32.totalorder %s24, %s25
    %p39 = scmp.eq.s32.totalorder %s17, 1
    %p40 = por %p38, %p39
    %p42 = scmp.ne.s32.totalorder %s25, %s41
    %p43 = scmp.eq.s32.totalorder %s17, 0
    %p44 = por %p42, %p43
    %s46 = sadd.s32 %s45, 1
    %p49 = scmp.eq.s32.totalorder %s11, 1
    %p50 = scmp.ne.s32.totalorder %s45, %s47
    %p51 = scmp.eq.s32.totalorder %s11, 0
    %p52 = por %p50, %p51
    %p53 = scmp.ne.s32.totalorder %s45, %s47
    %p54 = scmp.eq.s32.totalorder %s16, 1
    %p55 = por %p53, %p54
    %p56 = scmp.ne.s32.totalorder %s47, %s48
    %p57 = scmp.eq.s32.totalorder %s16, 0
    %p58 = por %p56, %p57
    %p59 = scmp.ne.s32.totalorder %s47, %s48
    %p60 = scmp.eq.s32.totalorder %s17, 1
    %p61 = por %p59, %p60
    %p63 = scmp.ne.s32.totalorder %s48, %s62
    %p64 = scmp.eq.s32.totalorder %s17, 0
    %p65 = por %p63, %p64
    %s67 = sadd.s32 %s66, 1
    %p70 = scmp.eq.s32.totalorder %s11, 1
    %p71 = scmp.ne.s32.totalorder %s66, %s68
    %p72 = scmp.eq.s32.totalorder %s11, 0
    %p73 = por %p71, %p72
    %p74 = scmp.ne.s32.totalorder %s66, %s68
    %p75 = scmp.eq.s32.totalorder %s16, 1
    %p76 = por %p74, %p75
    %p77 = scmp.ne.s32.totalorder %s68, %s69
    %p78 = scmp.eq.s32.totalorder %s16, 0
    %p79 = por %p77, %p78
    %p80 = scmp.ne.s32.totalorder %s68, %s69
    %p81 = scmp.eq.s32.totalorder %s17, 1
    %p82 = por %p80, %p81
    %p84 = scmp.ne.s32.totalorder %s69, %s83
    %p85 = scmp.eq.s32.totalorder %s17, 0
    %p86 = por %p84, %p85
    %s87 = ssub.s32 %s11, %s18
    %p88 = scmp.eq.s32.totalorder %s87, 0
    %s90 = sadd.s32 %s89, 1
    %s91 = scalar_select %p88, %s89, %s90
    %p94 = pneg %p88
    %p95 = scmp.eq.s32.totalorder %s11, 1
    %p96 = por %p94, %p95
    %p97 = scmp.ne.s32.totalorder %s89, %s92
    %p98 = scmp.eq.s32.totalorder %s11, 0
    %p99 = por %p97, %p98
    %p100 = scmp.ne.s32.totalorder %s89, %s92
    %p101 = scmp.eq.s32.totalorder %s16, 1
    %p102 = por %p100, %p101
    %p103 = scmp.ne.s32.totalorder %s92, %s93
    %p104 = scmp.eq.s32.totalorder %s16, 0
    %p105 = por %p103, %p104
    %p106 = scmp.ne.s32.totalorder %s92, %s93
    %p107 = scmp.eq.s32.totalorder %s17, 1
    %p108 = por %p106, %p107
    %p110 = scmp.ne.s32.totalorder %s93, %s109
    %p111 = scmp.eq.s32.totalorder %s17, 0
    %p112 = por %p110, %p111
    %s113 = ssub.s32 %s11, %s18
    %p114 = scmp.eq.s32.totalorder %s113, 0
    %s116 = sadd.s32 %s115, 1
    %s117 = scalar_select %p114, %s115, %s116
    %p120 = pneg %p114
    %p121 = scmp.eq.s32.totalorder %s11, 1
    %p122 = por %p120, %p121
    %p123 = scmp.ne.s32.totalorder %s115, %s118
    %p124 = scmp.eq.s32.totalorder %s11, 0
    %p125 = por %p123, %p124
    %p126 = scmp.ne.s32.totalorder %s115, %s118
    %p127 = scmp.eq.s32.totalorder %s16, 1
    %p128 = por %p126, %p127
    %p129 = scmp.ne.s32.totalorder %s118, %s119
    %p130 = scmp.eq.s32.totalorder %s16, 0
    %p131 = por %p129, %p130
    %p132 = scmp.ne.s32.totalorder %s118, %s119
    %p133 = scmp.eq.s32.totalorder %s17, 1
    %p134 = por %p132, %p133
    %p136 = scmp.ne.s32.totalorder %s119, %s135
    %p137 = scmp.eq.s32.totalorder %s17, 0
    %p138 = por %p136, %p137
    %p139 = scmp.le.s32.totalorder 1, %s11
    %p140 = scmp.lt.s32.totalorder %s11, 3
    %p141 = pnand %p139, %p140
    %p142 = pneg %p141
    // Predicated region
    $region9: #{resblock3d.3} parent=5 // pred_check
      _
    $region10: #{resblock3d.3} parent=5 // pred_check_branch
      %144 = sbr.rel (%p141) target = $region12
    $region11: #{resblock3d.3} parent=5 // pred_region
      %s145 = ssub.s32 %s11, 1
      // Predicated region
      $region13: #{resblock3d.3} parent=11 // pred_check
        %p146 = pneg %p58
      $region14: #{resblock3d.3} parent=11 // pred_check_branch
        %148 = sbr.rel (%p146) target = $region16
      $region15: #{resblock3d.3} parent=11 // pred_region
        _
      $region16: #{resblock3d.3} parent=11 // pred_fallthru
        _
      // Predicated region
      $region17: #{resblock3d.3} parent=11 // pred_check
        %p149 = pneg %p79
      $region18: #{resblock3d.3} parent=11 // pred_check_branch
        %151 = sbr.rel (%p149) target = $region20
      $region19: #{resblock3d.3} parent=11 // pred_region
        _
      $region20: #{resblock3d.3} parent=11 // pred_fallthru
        _
    $region12: #{resblock3d.3} parent=5 // pred_fallthru
      _
    %p152 = scmp.lt.s32.totalorder %s11, 2
    // Predicated region
    $region21: #{resblock3d.3} parent=5 // pred_check
      %p153 = pneg %p152
    $region22: #{resblock3d.3} parent=5 // pred_check_branch
      %155 = sbr.rel (%p153) target = $region24
    $region23: #{resblock3d.3} parent=5 // pred_region
      // Predicated region
      $region25: #{resblock3d.3} parent=23 // pred_check
        %p156 = pneg %p31
      $region26: #{resblock3d.3} parent=23 // pred_check_branch
        %158 = sbr.rel (%p156) target = $region28
      $region27: #{resblock3d.3} parent=23 // pred_region
        %p159 = scmp.lt.s32.totalorder %s11, 1
        %s160 = scalar_select %p159, %s11, 1
        %s161 = smul.addr %s160, 4
        %s162 = smul.addr %s161, 4
        %s163 = scalar_lea.vmem %s0, %s162
      $region28: #{resblock3d.3} parent=23 // pred_fallthru
        _
    $region24: #{resblock3d.3} parent=5 // pred_fallthru
      _
    %p164 = scmp.le.s32.totalorder 1, %s11
    %p165 = scmp.lt.s32.totalorder %s11, 3
    %p166 = pnand %p164, %p165
    %p167 = pneg %p166
    // Predicated region
    $region29: #{resblock3d.3} parent=5 // pred_check
      _
    $region30: #{resblock3d.3} parent=5 // pred_check_branch
      %169 = sbr.rel (%p166) target = $region32
    $region31: #{resblock3d.3} parent=5 // pred_region
      %s170 = ssub.s32 %s11, 1
      %p171 = scmp.lt.s32.totalorder %s16, 1
      %s172 = scalar_select %p171, %s16, 1
      %s173 = smul.addr %s172, 4
      %s174 = smul.addr %s173, 4
      %s175 = scalar_lea.vmem %s0, %s174
      %p176 = pneg %p37
      %p177 = pneg %p34
      %p178 = pneg %p58
      %p179 = pneg %p55
      %p180 = pneg %p79
      %p181 = pneg %p76
      %p182 = pneg %p105
      %p183 = pneg %p102
      %p184 = scmp.lt.s32.totalorder %s16, 1
      %s185 = scalar_select %p184, %s16, 1
      %s186 = smul.addr %s185, 4
      %s187 = smul.addr %s186, 4
      %s188 = scalar_lea.vmem %s3, %s187
      %p189 = pneg %p131
      %p190 = pneg %p128
      %p191 = scmp.lt.s32.totalorder %s16, 1
      %s192 = scalar_select %p191, %s16, 1
      %s193 = smul.addr %s192, 4
      %s194 = scalar_lea.vmem %s4, %s193
      %p195 = scmp.lt.s32.totalorder %s16, 1
      %s196 = scalar_select %p195, %s16, 1
      %s197 = smul.addr %s196, 4
      %s198 = smul.addr %s197, 4
      %s199 = scalar_lea.vmem %s0, %s198
      %p200 = scmp.lt.s32.totalorder %s16, 1
      %s201 = scalar_select %p200, %s16, 1
      %s202 = smul.addr %s201, 4
      %s203 = smul.addr %s202, 4
      %s204 = scalar_lea.vmem %s3, %s203
      %p205 = scmp.lt.s32.totalorder %s16, 1
      %s206 = scalar_select %p205, %s16, 1
      %s207 = smul.addr %s206, 4
      %s208 = scalar_lea.vmem %s4, %s207
      %v209 = vld [vmem:[%s199] sm:$0xff]
      %v210 = vld [vmem:[%s199 + $0x8] sm:$0xff]
      %v212 = vcombine.high %v210, %v210
      %213 = vrot.lane.b32.xlu0 %v212, 73
      %v214 = vpop.permute.xlu0 %213
      %v217 = vcombine.high %v209, %v209
      %218 = vrot.lane.b32.xlu0 %v209, 73
      %v219 = vpop.permute.xlu0 %218
      %220 = vrot.lane.b32.xlu0 %v217, 73
      %v221 = vpop.permute.xlu0 %220
      %222 = vrot.lane.b32.xlu0 %v210, 73
      %v223 = vpop.permute.xlu0 %222
      %vm224 = vcmask 596992
      %v225 = vsel %vm224, %v219, %v221
      %v226 = vsel %vm224, %v221, %v223
      %v227 = vsel %vm224, %v223, %v214
      %v232 = vsel %vm224, %v214, %v219
      %v233 = vld [vmem:[%s2] ss:$8 sm:$0xf]
      %v235 = vlaneseq
      %v236 = vshrl.u32 %v235, 7
      %v237 = vsub.s32 0, %v236
      %v238 = vrot.slane %v233, %v237
      %v239 = vlaneseq
      %v240 = vshrl.u32 %v239, 7
      %v241 = vsub.s32 1, %v240
      %v242 = vrot.slane %v233, %v241
      %v243 = vlaneseq
      %v244 = vshrl.u32 %v243, 7
      %v245 = vsub.s32 2, %v244
      %v246 = vrot.slane %v233, %v245
      %v247 = vlaneseq
      %v248 = vshrl.u32 %v247, 7
      %v249 = vsub.s32 3, %v248
      %v250 = vrot.slane %v233, %v249
      %v255 = vmul.f32 %v232, %v238
      %v256 = vmul.f32 %v225, %v242
      %v257 = vmul.f32 %v226, %v246
      %v258 = vmul.f32 %v227, %v250
      %259 = vrot.lane.b32.xlu0 %v212, 72
      %v260 = vpop.permute.xlu0 %259
      %262 = vrot.lane.b32.xlu0 %v209, 72
      %v263 = vpop.permute.xlu0 %262
      %264 = vrot.lane.b32.xlu0 %v217, 72
      %v265 = vpop.permute.xlu0 %264
      %266 = vrot.lane.b32.xlu0 %v210, 72
      %v267 = vpop.permute.xlu0 %266
      %vm268 = vcmask 588800
      %v269 = vsel %vm268, %v263, %v265
      %v270 = vsel %vm268, %v265, %v267
      %v271 = vsel %vm268, %v267, %v260
      %v276 = vsel %vm268, %v260, %v263
      %s277 = scalar_lea.vmem %s2, 1
      %v278 = vld [vmem:[%s277] ss:$8 sm:$0xf]
      %v280 = vlaneseq
      %v281 = vshrl.u32 %v280, 7
      %v282 = vsub.s32 0, %v281
      %v283 = vrot.slane %v278, %v282
      %v284 = vlaneseq
      %v285 = vshrl.u32 %v284, 7
      %v286 = vsub.s32 1, %v285
      %v287 = vrot.slane %v278, %v286
      %v288 = vlaneseq
      %v289 = vshrl.u32 %v288, 7
      %v290 = vsub.s32 2, %v289
      %v291 = vrot.slane %v278, %v290
      %v292 = vlaneseq
      %v293 = vshrl.u32 %v292, 7
      %v294 = vsub.s32 3, %v293
      %v295 = vrot.slane %v278, %v294
      %v300 = vmul.f32 %v276, %v283
      %v301 = vmul.f32 %v269, %v287
      %v302 = vmul.f32 %v270, %v291
      %v303 = vmul.f32 %v271, %v295
      %304 = vrot.lane.b32.xlu0 %v212, 71
      %v305 = vpop.permute.xlu0 %304
      %307 = vrot.lane.b32.xlu0 %v209, 71
      %v308 = vpop.permute.xlu0 %307
      %309 = vrot.lane.b32.xlu0 %v217, 71
      %v310 = vpop.permute.xlu0 %309
      %311 = vrot.lane.b32.xlu0 %v210, 71
      %v312 = vpop.permute.xlu0 %311
      %vm313 = vcmask 580608
      %v314 = vsel %vm313, %v308, %v310
      %v315 = vsel %vm313, %v310, %v312
      %v316 = vsel %vm313, %v312, %v305
      %v321 = vsel %vm313, %v305, %v308
      %s322 = scalar_lea.vmem %s2, 2
      %v323 = vld [vmem:[%s322] ss:$8 sm:$0xf]
      %v325 = vlaneseq
      %v326 = vshrl.u32 %v325, 7
      %v327 = vsub.s32 0, %v326
      %v328 = vrot.slane %v323, %v327
      %v329 = vlaneseq
      %v330 = vshrl.u32 %v329, 7
      %v331 = vsub.s32 1, %v330
      %v332 = vrot.slane %v323, %v331
      %v333 = vlaneseq
      %v334 = vshrl.u32 %v333, 7
      %v335 = vsub.s32 2, %v334
      %v336 = vrot.slane %v323, %v335
      %v337 = vlaneseq
      %v338 = vshrl.u32 %v337, 7
      %v339 = vsub.s32 3, %v338
      %v340 = vrot.slane %v323, %v339
      %v345 = vmul.f32 %v321, %v328
      %v346 = vmul.f32 %v314, %v332
      %v347 = vmul.f32 %v315, %v336
      %v348 = vmul.f32 %v316, %v340
      %349 = vrot.lane.b32.xlu0 %v212, 65
      %v350 = vpop.permute.xlu0 %349
      %352 = vrot.lane.b32.xlu0 %v209, 65
      %v353 = vpop.permute.xlu0 %352
      %354 = vrot.lane.b32.xlu0 %v217, 65
      %v355 = vpop.permute.xlu0 %354
      %356 = vrot.lane.b32.xlu0 %v210, 65
      %v357 = vpop.permute.xlu0 %356
      %vm358 = vcmask 531456
      %v359 = vsel %vm358, %v353, %v355
      %v360 = vsel %vm358, %v355, %v357
      %v361 = vsel %vm358, %v357, %v350
      %v366 = vsel %vm358, %v350, %v353
      %s367 = scalar_lea.vmem %s2, 3
      %v368 = vld [vmem:[%s367] ss:$8 sm:$0xf]
      %v370 = vlaneseq
      %v371 = vshrl.u32 %v370, 7
      %v372 = vsub.s32 0, %v371
      %v373 = vrot.slane %v368, %v372
      %v374 = vlaneseq
      %v375 = vshrl.u32 %v374, 7
      %v376 = vsub.s32 1, %v375
      %v377 = vrot.slane %v368, %v376
      %v378 = vlaneseq
      %v379 = vshrl.u32 %v378, 7
      %v380 = vsub.s32 2, %v379
      %v381 = vrot.slane %v368, %v380
      %v382 = vlaneseq
      %v383 = vshrl.u32 %v382, 7
      %v384 = vsub.s32 3, %v383
      %v385 = vrot.slane %v368, %v384
      %v390 = vmul.f32 %v366, %v373
      %v391 = vmul.f32 %v359, %v377
      %v392 = vmul.f32 %v360, %v381
      %v393 = vmul.f32 %v361, %v385
      %394 = vrot.lane.b32.xlu0 %v212, 64
      %v395 = vpop.permute.xlu0 %394
      %397 = vrot.lane.b32.xlu0 %v209, 64
      %v398 = vpop.permute.xlu0 %397
      %399 = vrot.lane.b32.xlu0 %v217, 64
      %v400 = vpop.permute.xlu0 %399
      %401 = vrot.lane.b32.xlu0 %v210, 64
      %v402 = vpop.permute.xlu0 %401
      %vm403 = vcmask 523264
      %v404 = vsel %vm403, %v398, %v400
      %v405 = vsel %vm403, %v400, %v402
      %v406 = vsel %vm403, %v402, %v395
      %v411 = vsel %vm403, %v395, %v398
      %s412 = scalar_lea.vmem %s2, 4
      %v413 = vld [vmem:[%s412] ss:$8 sm:$0xf]
      %v415 = vlaneseq
      %v416 = vshrl.u32 %v415, 7
      %v417 = vsub.s32 0, %v416
      %v418 = vrot.slane %v413, %v417
      %v419 = vlaneseq
      %v420 = vshrl.u32 %v419, 7
      %v421 = vsub.s32 1, %v420
      %v422 = vrot.slane %v413, %v421
      %v423 = vlaneseq
      %v424 = vshrl.u32 %v423, 7
      %v425 = vsub.s32 2, %v424
      %v426 = vrot.slane %v413, %v425
      %v427 = vlaneseq
      %v428 = vshrl.u32 %v427, 7
      %v429 = vsub.s32 3, %v428
      %v430 = vrot.slane %v413, %v429
      %v435 = vmul.f32 %v411, %v418
      %v436 = vmul.f32 %v404, %v422
      %v437 = vmul.f32 %v405, %v426
      %v438 = vmul.f32 %v406, %v430
      %439 = vrot.lane.b32.xlu0 %v212, 63
      %v440 = vpop.permute.xlu0 %439
      %442 = vrot.lane.b32.xlu0 %v209, 63
      %v443 = vpop.permute.xlu0 %442
      %444 = vrot.lane.b32.xlu0 %v217, 63
      %v445 = vpop.permute.xlu0 %444
      %446 = vrot.lane.b32.xlu0 %v210, 63
      %v447 = vpop.permute.xlu0 %446
      %vm448 = vcmask 515072
      %v449 = vsel %vm448, %v443, %v445
      %v450 = vsel %vm448, %v445, %v447
      %v451 = vsel %vm448, %v447, %v440
      %v456 = vsel %vm448, %v440, %v443
      %s457 = scalar_lea.vmem %s2, 5
      %v458 = vld [vmem:[%s457] ss:$8 sm:$0xf]
      %v460 = vlaneseq
      %v461 = vshrl.u32 %v460, 7
      %v462 = vsub.s32 0, %v461
      %v463 = vrot.slane %v458, %v462
      %v464 = vlaneseq
      %v465 = vshrl.u32 %v464, 7
      %v466 = vsub.s32 1, %v465
      %v467 = vrot.slane %v458, %v466
      %v468 = vlaneseq
      %v469 = vshrl.u32 %v468, 7
      %v470 = vsub.s32 2, %v469
      %v471 = vrot.slane %v458, %v470
      %v472 = vlaneseq
      %v473 = vshrl.u32 %v472, 7
      %v474 = vsub.s32 3, %v473
      %v475 = vrot.slane %v458, %v474
      %v480 = vmul.f32 %v456, %v463
      %v481 = vmul.f32 %v449, %v467
      %v482 = vmul.f32 %v450, %v471
      %v483 = vmul.f32 %v451, %v475
      %484 = vrot.lane.b32.xlu0 %v212, 57
      %v485 = vpop.permute.xlu0 %484
      %487 = vrot.lane.b32.xlu0 %v209, 57
      %v488 = vpop.permute.xlu0 %487
      %489 = vrot.lane.b32.xlu0 %v217, 57
      %v490 = vpop.permute.xlu0 %489
      %491 = vrot.lane.b32.xlu0 %v210, 57
      %v492 = vpop.permute.xlu0 %491
      %vm493 = vcmask 465920
      %v494 = vsel %vm493, %v488, %v490
      %v495 = vsel %vm493, %v490, %v492
      %v496 = vsel %vm493, %v492, %v485
      %v501 = vsel %vm493, %v485, %v488
      %s502 = scalar_lea.vmem %s2, 6
      %v503 = vld [vmem:[%s502] ss:$8 sm:$0xf]
      %v505 = vlaneseq
      %v506 = vshrl.u32 %v505, 7
      %v507 = vsub.s32 0, %v506
      %v508 = vrot.slane %v503, %v507
      %v509 = vlaneseq
      %v510 = vshrl.u32 %v509, 7
      %v511 = vsub.s32 1, %v510
      %v512 = vrot.slane %v503, %v511
      %v513 = vlaneseq
      %v514 = vshrl.u32 %v513, 7
      %v515 = vsub.s32 2, %v514
      %v516 = vrot.slane %v503, %v515
      %v517 = vlaneseq
      %v518 = vshrl.u32 %v517, 7
      %v519 = vsub.s32 3, %v518
      %v520 = vrot.slane %v503, %v519
      %v525 = vmul.f32 %v501, %v508
      %v526 = vmul.f32 %v494, %v512
      %v527 = vmul.f32 %v495, %v516
      %v528 = vmul.f32 %v496, %v520
      %529 = vrot.lane.b32.xlu0 %v212, 56
      %v530 = vpop.permute.xlu0 %529
      %532 = vrot.lane.b32.xlu0 %v209, 56
      %v533 = vpop.permute.xlu0 %532
      %534 = vrot.lane.b32.xlu0 %v217, 56
      %v535 = vpop.permute.xlu0 %534
      %536 = vrot.lane.b32.xlu0 %v210, 56
      %v537 = vpop.permute.xlu0 %536
      %vm538 = vcmask 457728
      %v539 = vsel %vm538, %v533, %v535
      %v540 = vsel %vm538, %v535, %v537
      %v541 = vsel %vm538, %v537, %v530
      %v546 = vsel %vm538, %v530, %v533
      %s547 = scalar_lea.vmem %s2, 7
      %v548 = vld [vmem:[%s547] ss:$8 sm:$0xf]
      %v550 = vlaneseq
      %v551 = vshrl.u32 %v550, 7
      %v552 = vsub.s32 0, %v551
      %v553 = vrot.slane %v548, %v552
      %v554 = vlaneseq
      %v555 = vshrl.u32 %v554, 7
      %v556 = vsub.s32 1, %v555
      %v557 = vrot.slane %v548, %v556
      %v558 = vlaneseq
      %v559 = vshrl.u32 %v558, 7
      %v560 = vsub.s32 2, %v559
      %v561 = vrot.slane %v548, %v560
      %v562 = vlaneseq
      %v563 = vshrl.u32 %v562, 7
      %v564 = vsub.s32 3, %v563
      %v565 = vrot.slane %v548, %v564
      %v570 = vmul.f32 %v546, %v553
      %v571 = vmul.f32 %v539, %v557
      %v572 = vmul.f32 %v540, %v561
      %v573 = vmul.f32 %v541, %v565
      %574 = vrot.lane.b32.xlu0 %v212, 55
      %v575 = vpop.permute.xlu0 %574
      %577 = vrot.lane.b32.xlu0 %v209, 55
      %v578 = vpop.permute.xlu0 %577
      %579 = vrot.lane.b32.xlu0 %v217, 55
      %v580 = vpop.permute.xlu0 %579
      %581 = vrot.lane.b32.xlu0 %v210, 55
      %v582 = vpop.permute.xlu0 %581
      %vm583 = vcmask 449536
      %v584 = vsel %vm583, %v578, %v580
      %v585 = vsel %vm583, %v580, %v582
      %v586 = vsel %vm583, %v582, %v575
      %v591 = vsel %vm583, %v575, %v578
      %s592 = scalar_lea.vmem %s2, 32
      %v593 = vld [vmem:[%s592] ss:$8 sm:$0xf]
      %v595 = vlaneseq
      %v596 = vshrl.u32 %v595, 7
      %v597 = vsub.s32 0, %v596
      %v598 = vrot.slane %v593, %v597
      %v599 = vlaneseq
      %v600 = vshrl.u32 %v599, 7
      %v601 = vsub.s32 1, %v600
      %v602 = vrot.slane %v593, %v601
      %v603 = vlaneseq
      %v604 = vshrl.u32 %v603, 7
      %v605 = vsub.s32 2, %v604
      %v606 = vrot.slane %v593, %v605
      %v607 = vlaneseq
      %v608 = vshrl.u32 %v607, 7
      %v609 = vsub.s32 3, %v608
      %v610 = vrot.slane %v593, %v609
      %v615 = vmul.f32 %v591, %v598
      %v616 = vmul.f32 %v584, %v602
      %v617 = vmul.f32 %v585, %v606
      %v618 = vmul.f32 %v586, %v610
      %619 = vrot.lane.b32.xlu0 %v212, 9
      %v620 = vpop.permute.xlu0 %619
      %622 = vrot.lane.b32.xlu0 %v209, 9
      %v623 = vpop.permute.xlu0 %622
      %624 = vrot.lane.b32.xlu0 %v217, 9
      %v625 = vpop.permute.xlu0 %624
      %626 = vrot.lane.b32.xlu0 %v210, 9
      %v627 = vpop.permute.xlu0 %626
      %vm628 = vcmask 72704
      %v629 = vsel %vm628, %v623, %v625
      %v630 = vsel %vm628, %v625, %v627
      %v631 = vsel %vm628, %v627, %v620
      %v636 = vsel %vm628, %v620, %v623
      %s637 = scalar_lea.vmem %s2, 33
      %v638 = vld [vmem:[%s637] ss:$8 sm:$0xf]
      %v640 = vlaneseq
      %v641 = vshrl.u32 %v640, 7
      %v642 = vsub.s32 0, %v641
      %v643 = vrot.slane %v638, %v642
      %v644 = vlaneseq
      %v645 = vshrl.u32 %v644, 7
      %v646 = vsub.s32 1, %v645
      %v647 = vrot.slane %v638, %v646
      %v648 = vlaneseq
      %v649 = vshrl.u32 %v648, 7
      %v650 = vsub.s32 2, %v649
      %v651 = vrot.slane %v638, %v650
      %v652 = vlaneseq
      %v653 = vshrl.u32 %v652, 7
      %v654 = vsub.s32 3, %v653
      %v655 = vrot.slane %v638, %v654
      %v660 = vmul.f32 %v636, %v643
      %v661 = vmul.f32 %v629, %v647
      %v662 = vmul.f32 %v630, %v651
      %v663 = vmul.f32 %v631, %v655
      %664 = vrot.lane.b32.xlu0 %v212, 8
      %v665 = vpop.permute.xlu0 %664
      %667 = vrot.lane.b32.xlu0 %v209, 8
      %v668 = vpop.permute.xlu0 %667
      %669 = vrot.lane.b32.xlu0 %v217, 8
      %v670 = vpop.permute.xlu0 %669
      %671 = vrot.lane.b32.xlu0 %v210, 8
      %v672 = vpop.permute.xlu0 %671
      %vm673 = vcmask 64512
      %v674 = vsel %vm673, %v668, %v670
      %v675 = vsel %vm673, %v670, %v672
      %v676 = vsel %vm673, %v672, %v665
      %v681 = vsel %vm673, %v665, %v668
      %s682 = scalar_lea.vmem %s2, 34
      %v683 = vld [vmem:[%s682] ss:$8 sm:$0xf]
      %v685 = vlaneseq
      %v686 = vshrl.u32 %v685, 7
      %v687 = vsub.s32 0, %v686
      %v688 = vrot.slane %v683, %v687
      %v689 = vlaneseq
      %v690 = vshrl.u32 %v689, 7
      %v691 = vsub.s32 1, %v690
      %v692 = vrot.slane %v683, %v691
      %v693 = vlaneseq
      %v694 = vshrl.u32 %v693, 7
      %v695 = vsub.s32 2, %v694
      %v696 = vrot.slane %v683, %v695
      %v697 = vlaneseq
      %v698 = vshrl.u32 %v697, 7
      %v699 = vsub.s32 3, %v698
      %v700 = vrot.slane %v683, %v699
      %v705 = vmul.f32 %v681, %v688
      %v706 = vmul.f32 %v674, %v692
      %v707 = vmul.f32 %v675, %v696
      %v708 = vmul.f32 %v676, %v700
      %709 = vrot.lane.b32.xlu0 %v212, 7
      %v710 = vpop.permute.xlu0 %709
      %712 = vrot.lane.b32.xlu0 %v209, 7
      %v713 = vpop.permute.xlu0 %712
      %714 = vrot.lane.b32.xlu0 %v217, 7
      %v715 = vpop.permute.xlu0 %714
      %716 = vrot.lane.b32.xlu0 %v210, 7
      %v717 = vpop.permute.xlu0 %716
      %vm718 = vcmask 56320
      %v719 = vsel %vm718, %v713, %v715
      %v720 = vsel %vm718, %v715, %v717
      %v721 = vsel %vm718, %v717, %v710
      %v726 = vsel %vm718, %v710, %v713
      %s727 = scalar_lea.vmem %s2, 35
      %v728 = vld [vmem:[%s727] ss:$8 sm:$0xf]
      %v730 = vlaneseq
      %v731 = vshrl.u32 %v730, 7
      %v732 = vsub.s32 0, %v731
      %v733 = vrot.slane %v728, %v732
      %v734 = vlaneseq
      %v735 = vshrl.u32 %v734, 7
      %v736 = vsub.s32 1, %v735
      %v737 = vrot.slane %v728, %v736
      %v738 = vlaneseq
      %v739 = vshrl.u32 %v738, 7
      %v740 = vsub.s32 2, %v739
      %v741 = vrot.slane %v728, %v740
      %v742 = vlaneseq
      %v743 = vshrl.u32 %v742, 7
      %v744 = vsub.s32 3, %v743
      %v745 = vrot.slane %v728, %v744
      %v750 = vmul.f32 %v726, %v733
      %v751 = vmul.f32 %v719, %v737
      %v752 = vmul.f32 %v720, %v741
      %v753 = vmul.f32 %v721, %v745
      %754 = vrot.lane.b32.xlu0 %v212, 1
      %v755 = vpop.permute.xlu0 %754
      %757 = vrot.lane.b32.xlu0 %v209, 1
      %v758 = vpop.permute.xlu0 %757
      %759 = vrot.lane.b32.xlu0 %v217, 1
      %v760 = vpop.permute.xlu0 %759
      %761 = vrot.lane.b32.xlu0 %v210, 1
      %v762 = vpop.permute.xlu0 %761
      %vm763 = vcmask 7168
      %v764 = vsel %vm763, %v758, %v760
      %v765 = vsel %vm763, %v760, %v762
      %v766 = vsel %vm763, %v762, %v755
      %v771 = vsel %vm763, %v755, %v758
      %s772 = scalar_lea.vmem %s2, 36
      %v773 = vld [vmem:[%s772] ss:$8 sm:$0xf]
      %v775 = vlaneseq
      %v776 = vshrl.u32 %v775, 7
      %v777 = vsub.s32 0, %v776
      %v778 = vrot.slane %v773, %v777
      %v779 = vlaneseq
      %v780 = vshrl.u32 %v779, 7
      %v781 = vsub.s32 1, %v780
      %v782 = vrot.slane %v773, %v781
      %v783 = vlaneseq
      %v784 = vshrl.u32 %v783, 7
      %v785 = vsub.s32 2, %v784
      %v786 = vrot.slane %v773, %v785
      %v787 = vlaneseq
      %v788 = vshrl.u32 %v787, 7
      %v789 = vsub.s32 3, %v788
      %v790 = vrot.slane %v773, %v789
      %v795 = vmul.f32 %v771, %v778
      %v796 = vmul.f32 %v764, %v782
      %v797 = vmul.f32 %v765, %v786
      %v798 = vmul.f32 %v766, %v790
      %799 = vrot.lane.b32.xlu0 %v209, 127
      %v800 = vpop.permute.xlu0 %799
      %801 = vrot.lane.b32.xlu0 %v217, 127
      %v802 = vpop.permute.xlu0 %801
      %803 = vrot.lane.b32.xlu0 %v210, 127
      %v804 = vpop.permute.xlu0 %803
      %805 = vrot.lane.b32.xlu0 %v212, 127
      %v806 = vpop.permute.xlu0 %805
      %vm807 = vcmask 1039360
      %v808 = vsel %vm807, %v800, %v802
      %v809 = vsel %vm807, %v802, %v804
      %v810 = vsel %vm807, %v804, %v806
      %v816 = vsel %vm807, %v806, %v800
      %s817 = scalar_lea.vmem %s2, 38
      %v818 = vld [vmem:[%s817] ss:$8 sm:$0xf]
      %v820 = vlaneseq
      %v821 = vshrl.u32 %v820, 7
      %v822 = vsub.s32 0, %v821
      %v823 = vrot.slane %v818, %v822
      %v824 = vlaneseq
      %v825 = vshrl.u32 %v824, 7
      %v826 = vsub.s32 1, %v825
      %v827 = vrot.slane %v818, %v826
      %v828 = vlaneseq
      %v829 = vshrl.u32 %v828, 7
      %v830 = vsub.s32 2, %v829
      %v831 = vrot.slane %v818, %v830
      %v832 = vlaneseq
      %v833 = vshrl.u32 %v832, 7
      %v834 = vsub.s32 3, %v833
      %v835 = vrot.slane %v818, %v834
      %v840 = vmul.f32 %v808, %v823
      %v841 = vmul.f32 %v809, %v827
      %v842 = vmul.f32 %v810, %v831
      %v843 = vmul.f32 %v816, %v835
      %844 = vrot.lane.b32.xlu0 %v209, 121
      %v845 = vpop.permute.xlu0 %844
      %846 = vrot.lane.b32.xlu0 %v217, 121
      %v847 = vpop.permute.xlu0 %846
      %848 = vrot.lane.b32.xlu0 %v210, 121
      %v849 = vpop.permute.xlu0 %848
      %850 = vrot.lane.b32.xlu0 %v212, 121
      %v851 = vpop.permute.xlu0 %850
      %vm852 = vcmask 990208
      %v853 = vsel %vm852, %v845, %v847
      %v854 = vsel %vm852, %v847, %v849
      %v855 = vsel %vm852, %v849, %v851
      %v861 = vsel %vm852, %v851, %v845
      %s862 = scalar_lea.vmem %s2, 39
      %v863 = vld [vmem:[%s862] ss:$8 sm:$0xf]
      %v865 = vlaneseq
      %v866 = vshrl.u32 %v865, 7
      %v867 = vsub.s32 0, %v866
      %v868 = vrot.slane %v863, %v867
      %v869 = vlaneseq
      %v870 = vshrl.u32 %v869, 7
      %v871 = vsub.s32 1, %v870
      %v872 = vrot.slane %v863, %v871
      %v873 = vlaneseq
      %v874 = vshrl.u32 %v873, 7
      %v875 = vsub.s32 2, %v874
      %v876 = vrot.slane %v863, %v875
      %v877 = vlaneseq
      %v878 = vshrl.u32 %v877, 7
      %v879 = vsub.s32 3, %v878
      %v880 = vrot.slane %v863, %v879
      %v885 = vmul.f32 %v853, %v868
      %v886 = vmul.f32 %v854, %v872
      %v887 = vmul.f32 %v855, %v876
      %v888 = vmul.f32 %v861, %v880
      %889 = vrot.lane.b32.xlu0 %v209, 120
      %v890 = vpop.permute.xlu0 %889
      %891 = vrot.lane.b32.xlu0 %v217, 120
      %v892 = vpop.permute.xlu0 %891
      %893 = vrot.lane.b32.xlu0 %v210, 120
      %v894 = vpop.permute.xlu0 %893
      %895 = vrot.lane.b32.xlu0 %v212, 120
      %v896 = vpop.permute.xlu0 %895
      %vm897 = vcmask 982016
      %v898 = vsel %vm897, %v890, %v892
      %v899 = vsel %vm897, %v892, %v894
      %v900 = vsel %vm897, %v894, %v896
      %v906 = vsel %vm897, %v896, %v890
      %s907 = scalar_lea.vmem %s2, 64
      %v908 = vld [vmem:[%s907] ss:$8 sm:$0xf]
      %v910 = vlaneseq
      %v911 = vshrl.u32 %v910, 7
      %v912 = vsub.s32 0, %v911
      %v913 = vrot.slane %v908, %v912
      %v914 = vlaneseq
      %v915 = vshrl.u32 %v914, 7
      %v916 = vsub.s32 1, %v915
      %v917 = vrot.slane %v908, %v916
      %v918 = vlaneseq
      %v919 = vshrl.u32 %v918, 7
      %v920 = vsub.s32 2, %v919
      %v921 = vrot.slane %v908, %v920
      %v922 = vlaneseq
      %v923 = vshrl.u32 %v922, 7
      %v924 = vsub.s32 3, %v923
      %v925 = vrot.slane %v908, %v924
      %v930 = vmul.f32 %v898, %v913
      %v931 = vmul.f32 %v899, %v917
      %v932 = vmul.f32 %v900, %v921
      %v933 = vmul.f32 %v906, %v925
      %934 = vrot.lane.b32.xlu0 %v209, 119
      %v935 = vpop.permute.xlu0 %934
      %936 = vrot.lane.b32.xlu0 %v217, 119
      %v937 = vpop.permute.xlu0 %936
      %938 = vrot.lane.b32.xlu0 %v210, 119
      %v939 = vpop.permute.xlu0 %938
      %940 = vrot.lane.b32.xlu0 %v212, 119
      %v941 = vpop.permute.xlu0 %940
      %vm942 = vcmask 973824
      %v943 = vsel %vm942, %v935, %v937
      %v944 = vsel %vm942, %v937, %v939
      %v945 = vsel %vm942, %v939, %v941
      %v951 = vsel %vm942, %v941, %v935
      %s952 = scalar_lea.vmem %s2, 65
      %v953 = vld [vmem:[%s952] ss:$8 sm:$0xf]
      %v955 = vlaneseq
      %v956 = vshrl.u32 %v955, 7
      %v957 = vsub.s32 0, %v956
      %v958 = vrot.slane %v953, %v957
      %v959 = vlaneseq
      %v960 = vshrl.u32 %v959, 7
      %v961 = vsub.s32 1, %v960
      %v962 = vrot.slane %v953, %v961
      %v963 = vlaneseq
      %v964 = vshrl.u32 %v963, 7
      %v965 = vsub.s32 2, %v964
      %v966 = vrot.slane %v953, %v965
      %v967 = vlaneseq
      %v968 = vshrl.u32 %v967, 7
      %v969 = vsub.s32 3, %v968
      %v970 = vrot.slane %v953, %v969
      %v975 = vmul.f32 %v943, %v958
      %v976 = vmul.f32 %v944, %v962
      %v977 = vmul.f32 %v945, %v966
      %v978 = vmul.f32 %v951, %v970
      %s979 = scalar_lea.vmem %s2, 66
      %v980 = vld [vmem:[%s979] ss:$8 sm:$0xf]
      %v982 = vlaneseq
      %v983 = vshrl.u32 %v982, 7
      %v984 = vsub.s32 0, %v983
      %v985 = vrot.slane %v980, %v984
      %v986 = vlaneseq
      %v987 = vshrl.u32 %v986, 7
      %v988 = vsub.s32 1, %v987
      %v989 = vrot.slane %v980, %v988
      %v990 = vlaneseq
      %v991 = vshrl.u32 %v990, 7
      %v992 = vsub.s32 2, %v991
      %v993 = vrot.slane %v980, %v992
      %v994 = vlaneseq
      %v995 = vshrl.u32 %v994, 7
      %v996 = vsub.s32 3, %v995
      %v997 = vrot.slane %v980, %v996
      %v1002 = vmul.f32 %v225, %v985
      %v1003 = vmul.f32 %v226, %v989
      %v1004 = vmul.f32 %v227, %v993
      %v1005 = vmul.f32 %v232, %v997
      %s1006 = scalar_lea.vmem %s2, 67
      %v1007 = vld [vmem:[%s1006] ss:$8 sm:$0xf]
      %v1009 = vlaneseq
      %v1010 = vshrl.u32 %v1009, 7
      %v1011 = vsub.s32 0, %v1010
      %v1012 = vrot.slane %v1007, %v1011
      %v1013 = vlaneseq
      %v1014 = vshrl.u32 %v1013, 7
      %v1015 = vsub.s32 1, %v1014
      %v1016 = vrot.slane %v1007, %v1015
      %v1017 = vlaneseq
      %v1018 = vshrl.u32 %v1017, 7
      %v1019 = vsub.s32 2, %v1018
      %v1020 = vrot.slane %v1007, %v1019
      %v1021 = vlaneseq
      %v1022 = vshrl.u32 %v1021, 7
      %v1023 = vsub.s32 3, %v1022
      %v1024 = vrot.slane %v1007, %v1023
      %v1029 = vmul.f32 %v269, %v1012
      %v1030 = vmul.f32 %v270, %v1016
      %v1031 = vmul.f32 %v271, %v1020
      %v1032 = vmul.f32 %v276, %v1024
      %s1033 = scalar_lea.vmem %s2, 68
      %v1034 = vld [vmem:[%s1033] ss:$8 sm:$0xf]
      %v1036 = vlaneseq
      %v1037 = vshrl.u32 %v1036, 7
      %v1038 = vsub.s32 0, %v1037
      %v1039 = vrot.slane %v1034, %v1038
      %v1040 = vlaneseq
      %v1041 = vshrl.u32 %v1040, 7
      %v1042 = vsub.s32 1, %v1041
      %v1043 = vrot.slane %v1034, %v1042
      %v1044 = vlaneseq
      %v1045 = vshrl.u32 %v1044, 7
      %v1046 = vsub.s32 2, %v1045
      %v1047 = vrot.slane %v1034, %v1046
      %v1048 = vlaneseq
      %v1049 = vshrl.u32 %v1048, 7
      %v1050 = vsub.s32 3, %v1049
      %v1051 = vrot.slane %v1034, %v1050
      %v1056 = vmul.f32 %v314, %v1039
      %v1057 = vmul.f32 %v315, %v1043
      %v1058 = vmul.f32 %v316, %v1047
      %v1059 = vmul.f32 %v321, %v1051
      %s1060 = scalar_lea.vmem %s2, 69
      %v1061 = vld [vmem:[%s1060] ss:$8 sm:$0xf]
      %v1063 = vlaneseq
      %v1064 = vshrl.u32 %v1063, 7
      %v1065 = vsub.s32 0, %v1064
      %v1066 = vrot.slane %v1061, %v1065
      %v1067 = vlaneseq
      %v1068 = vshrl.u32 %v1067, 7
      %v1069 = vsub.s32 1, %v1068
      %v1070 = vrot.slane %v1061, %v1069
      %v1071 = vlaneseq
      %v1072 = vshrl.u32 %v1071, 7
      %v1073 = vsub.s32 2, %v1072
      %v1074 = vrot.slane %v1061, %v1073
      %v1075 = vlaneseq
      %v1076 = vshrl.u32 %v1075, 7
      %v1077 = vsub.s32 3, %v1076
      %v1078 = vrot.slane %v1061, %v1077
      %v1083 = vmul.f32 %v359, %v1066
      %v1084 = vmul.f32 %v360, %v1070
      %v1085 = vmul.f32 %v361, %v1074
      %v1086 = vmul.f32 %v366, %v1078
      %s1087 = scalar_lea.vmem %s2, 70
      %v1088 = vld [vmem:[%s1087] ss:$8 sm:$0xf]
      %v1090 = vlaneseq
      %v1091 = vshrl.u32 %v1090, 7
      %v1092 = vsub.s32 0, %v1091
      %v1093 = vrot.slane %v1088, %v1092
      %v1094 = vlaneseq
      %v1095 = vshrl.u32 %v1094, 7
      %v1096 = vsub.s32 1, %v1095
      %v1097 = vrot.slane %v1088, %v1096
      %v1098 = vlaneseq
      %v1099 = vshrl.u32 %v1098, 7
      %v1100 = vsub.s32 2, %v1099
      %v1101 = vrot.slane %v1088, %v1100
      %v1102 = vlaneseq
      %v1103 = vshrl.u32 %v1102, 7
      %v1104 = vsub.s32 3, %v1103
      %v1105 = vrot.slane %v1088, %v1104
      %v1110 = vmul.f32 %v404, %v1093
      %v1111 = vmul.f32 %v405, %v1097
      %v1112 = vmul.f32 %v406, %v1101
      %v1113 = vmul.f32 %v411, %v1105
      %s1114 = scalar_lea.vmem %s2, 71
      %v1115 = vld [vmem:[%s1114] ss:$8 sm:$0xf]
      %v1117 = vlaneseq
      %v1118 = vshrl.u32 %v1117, 7
      %v1119 = vsub.s32 0, %v1118
      %v1120 = vrot.slane %v1115, %v1119
      %v1121 = vlaneseq
      %v1122 = vshrl.u32 %v1121, 7
      %v1123 = vsub.s32 1, %v1122
      %v1124 = vrot.slane %v1115, %v1123
      %v1125 = vlaneseq
      %v1126 = vshrl.u32 %v1125, 7
      %v1127 = vsub.s32 2, %v1126
      %v1128 = vrot.slane %v1115, %v1127
      %v1129 = vlaneseq
      %v1130 = vshrl.u32 %v1129, 7
      %v1131 = vsub.s32 3, %v1130
      %v1132 = vrot.slane %v1115, %v1131
      %v1137 = vmul.f32 %v449, %v1120
      %v1138 = vmul.f32 %v450, %v1124
      %v1139 = vmul.f32 %v451, %v1128
      %v1140 = vmul.f32 %v456, %v1132
      %s1141 = scalar_lea.vmem %s2, 96
      %v1142 = vld [vmem:[%s1141] ss:$8 sm:$0xf]
      %v1144 = vlaneseq
      %v1145 = vshrl.u32 %v1144, 7
      %v1146 = vsub.s32 0, %v1145
      %v1147 = vrot.slane %v1142, %v1146
      %v1148 = vlaneseq
      %v1149 = vshrl.u32 %v1148, 7
      %v1150 = vsub.s32 1, %v1149
      %v1151 = vrot.slane %v1142, %v1150
      %v1152 = vlaneseq
      %v1153 = vshrl.u32 %v1152, 7
      %v1154 = vsub.s32 2, %v1153
      %v1155 = vrot.slane %v1142, %v1154
      %v1156 = vlaneseq
      %v1157 = vshrl.u32 %v1156, 7
      %v1158 = vsub.s32 3, %v1157
      %v1159 = vrot.slane %v1142, %v1158
      %v1164 = vmul.f32 %v494, %v1147
      %v1165 = vmul.f32 %v495, %v1151
      %v1166 = vmul.f32 %v496, %v1155
      %v1167 = vmul.f32 %v501, %v1159
      %s1168 = scalar_lea.vmem %s2, 97
      %v1169 = vld [vmem:[%s1168] ss:$8 sm:$0xf]
      %v1171 = vlaneseq
      %v1172 = vshrl.u32 %v1171, 7
      %v1173 = vsub.s32 0, %v1172
      %v1174 = vrot.slane %v1169, %v1173
      %v1175 = vlaneseq
      %v1176 = vshrl.u32 %v1175, 7
      %v1177 = vsub.s32 1, %v1176
      %v1178 = vrot.slane %v1169, %v1177
      %v1179 = vlaneseq
      %v1180 = vshrl.u32 %v1179, 7
      %v1181 = vsub.s32 2, %v1180
      %v1182 = vrot.slane %v1169, %v1181
      %v1183 = vlaneseq
      %v1184 = vshrl.u32 %v1183, 7
      %v1185 = vsub.s32 3, %v1184
      %v1186 = vrot.slane %v1169, %v1185
      %v1191 = vmul.f32 %v539, %v1174
      %v1192 = vmul.f32 %v540, %v1178
      %v1193 = vmul.f32 %v541, %v1182
      %v1194 = vmul.f32 %v546, %v1186
      %s1195 = scalar_lea.vmem %s2, 98
      %v1196 = vld [vmem:[%s1195] ss:$8 sm:$0xf]
      %v1198 = vlaneseq
      %v1199 = vshrl.u32 %v1198, 7
      %v1200 = vsub.s32 0, %v1199
      %v1201 = vrot.slane %v1196, %v1200
      %v1202 = vlaneseq
      %v1203 = vshrl.u32 %v1202, 7
      %v1204 = vsub.s32 1, %v1203
      %v1205 = vrot.slane %v1196, %v1204
      %v1206 = vlaneseq
      %v1207 = vshrl.u32 %v1206, 7
      %v1208 = vsub.s32 2, %v1207
      %v1209 = vrot.slane %v1196, %v1208
      %v1210 = vlaneseq
      %v1211 = vshrl.u32 %v1210, 7
      %v1212 = vsub.s32 3, %v1211
      %v1213 = vrot.slane %v1196, %v1212
      %v1218 = vmul.f32 %v584, %v1201
      %v1219 = vmul.f32 %v585, %v1205
      %v1220 = vmul.f32 %v586, %v1209
      %v1221 = vmul.f32 %v591, %v1213
      %v1226 = vrot.slane %v300, 4
      %v1227 = vrot.slane %v301, 4
      %v1228 = vrot.slane %v302, 4
      %v1229 = vrot.slane %v303, 4
      %v1238 = vrot.slane %v390, 4
      %v1239 = vrot.slane %v391, 4
      %v1240 = vrot.slane %v392, 4
      %v1241 = vrot.slane %v393, 4
      %v1250 = vrot.slane %v480, 4
      %v1251 = vrot.slane %v481, 4
      %v1252 = vrot.slane %v482, 4
      %v1253 = vrot.slane %v483, 4
      %v1262 = vrot.slane %v570, 4
      %v1263 = vrot.slane %v571, 4
      %v1264 = vrot.slane %v572, 4
      %v1265 = vrot.slane %v573, 4
      %v1274 = vrot.slane %v660, 4
      %v1275 = vrot.slane %v661, 4
      %v1276 = vrot.slane %v662, 4
      %v1277 = vrot.slane %v663, 4
      %v1286 = vrot.slane %v750, 4
      %v1287 = vrot.slane %v751, 4
      %v1288 = vrot.slane %v752, 4
      %v1289 = vrot.slane %v753, 4
      %v1294 = vcombine.low %v209, %v209
      %v1295 = vcombine.low %v210, %v210
      %v1302 = vrot.slane %v885, 4
      %v1303 = vrot.slane %v886, 4
      %v1304 = vrot.slane %v887, 4
      %v1305 = vrot.slane %v888, 4
      %vm1310 = vcmask 1043456
      %v1311 = vsel %vm1310, %v255, %v1226
      %v1312 = vsel %vm1310, %v256, %v1227
      %v1313 = vsel %vm1310, %v257, %v1228
      %v1314 = vsel %vm1310, %v258, %v1229
      %v1315 = vsel %vm1310, %v345, %v1238
      %v1316 = vsel %vm1310, %v346, %v1239
      %v1317 = vsel %vm1310, %v347, %v1240
      %v1318 = vsel %vm1310, %v348, %v1241
      %v1319 = vsel %vm1310, %v435, %v1250
      %v1320 = vsel %vm1310, %v436, %v1251
      %v1321 = vsel %vm1310, %v437, %v1252
      %v1322 = vsel %vm1310, %v438, %v1253
      %v1323 = vsel %vm1310, %v525, %v1262
      %v1324 = vsel %vm1310, %v526, %v1263
      %v1325 = vsel %vm1310, %v527, %v1264
      %v1326 = vsel %vm1310, %v528, %v1265
      %v1327 = vsel %vm1310, %v615, %v1274
      %v1328 = vsel %vm1310, %v616, %v1275
      %v1329 = vsel %vm1310, %v617, %v1276
      %v1330 = vsel %vm1310, %v618, %v1277
      %v1331 = vsel %vm1310, %v705, %v1286
      %v1332 = vsel %vm1310, %v706, %v1287
      %v1333 = vsel %vm1310, %v707, %v1288
      %v1334 = vsel %vm1310, %v708, %v1289
      %v1335 = vsel %vm1310, %v795, %v1294
      %v1336 = vsel %vm1310, %v796, %v209
      %v1337 = vsel %vm1310, %v797, %v1295
      %v1338 = vsel %vm1310, %v798, %v210
      %v1339 = vsel %vm1310, %v840, %v1302
      %v1340 = vsel %vm1310, %v841, %v1303
      %v1341 = vsel %vm1310, %v842, %v1304
      %v1342 = vsel %vm1310, %v843, %v1305
      %v1347 = vrot.slane %v975, 4
      %v1348 = vrot.slane %v976, 4
      %v1349 = vrot.slane %v977, 4
      %v1350 = vrot.slane %v978, 4
      %v1359 = vrot.slane %v1029, 4
      %v1360 = vrot.slane %v1030, 4
      %v1361 = vrot.slane %v1031, 4
      %v1362 = vrot.slane %v1032, 4
      %v1371 = vrot.slane %v1083, 4
      %v1372 = vrot.slane %v1084, 4
      %v1373 = vrot.slane %v1085, 4
      %v1374 = vrot.slane %v1086, 4
      %v1383 = vrot.slane %v1137, 4
      %v1384 = vrot.slane %v1138, 4
      %v1385 = vrot.slane %v1139, 4
      %v1386 = vrot.slane %v1140, 4
      %v1395 = vrot.slane %v1191, 4
      %v1396 = vrot.slane %v1192, 4
      %v1397 = vrot.slane %v1193, 4
      %v1398 = vrot.slane %v1194, 4
      %v1403 = vsel %vm1310, %v930, %v1347
      %v1404 = vsel %vm1310, %v931, %v1348
      %v1405 = vsel %vm1310, %v932, %v1349
      %v1406 = vsel %vm1310, %v933, %v1350
      %v1407 = vsel %vm1310, %v1002, %v1359
      %v1408 = vsel %vm1310, %v1003, %v1360
      %v1409 = vsel %vm1310, %v1004, %v1361
      %v1410 = vsel %vm1310, %v1005, %v1362
      %v1411 = vsel %vm1310, %v1056, %v1371
      %v1412 = vsel %vm1310, %v1057, %v1372
      %v1413 = vsel %vm1310, %v1058, %v1373
      %v1414 = vsel %vm1310, %v1059, %v1374
      %v1415 = vsel %vm1310, %v1110, %v1383
      %v1416 = vsel %vm1310, %v1111, %v1384
      %v1417 = vsel %vm1310, %v1112, %v1385
      %v1418 = vsel %vm1310, %v1113, %v1386
      %v1419 = vsel %vm1310, %v1164, %v1395
      %v1420 = vsel %vm1310, %v1165, %v1396
      %v1421 = vsel %vm1310, %v1166, %v1397
      %v1422 = vsel %vm1310, %v1167, %v1398
      %v1423 = vld [vmem:[%s1] sm:$0xf]
      %vm1424 = vcmask 883712
      %v1426 = vsel %vm1424, %v1423, 0
      %v1429 = vsel %vm1310, %v1218, 0
      %v1432 = vsel %vm1310, %v1219, 0
      %v1435 = vsel %vm1310, %v1220, 0
      %v1438 = vsel %vm1310, %v1221, 0
      %1440 = vmatprep.subr.mxu0 0.0
      %1441 = vmatpush1.msra.mxu0 0.0
      %1442 = vmatprep.subr.mxu0 0.0
      %1443 = vmatpush1.msra.mxu0 0.0
      %1444 = vmatprep.subr.mxu0 %v1432
      %1445 = vmatpush1.msra.mxu0 %v1429
      %1446 = vmatprep.subr.mxu0 %v1420
      %1447 = vmatpush1.msra.mxu0 %v1419
      %1448 = vmatprep.subr.mxu0 %v1416
      %1449 = vmatpush1.msra.mxu0 %v1415
      %1450 = vmatprep.subr.mxu0 %v1412
      %1451 = vmatpush1.msra.mxu0 %v1411
      %1452 = vmatprep.subr.mxu0 %v1408
      %1453 = vmatpush1.msra.mxu0 %v1407
      %1454 = vmatprep.subr.mxu0 %v1404
      %1455 = vmatpush1.msra.mxu0 %v1403
      %1456 = vmatprep.subr.mxu0 %v1340
      %1457 = vmatpush1.msra.mxu0 %v1339
      %1458 = vmatprep.subr.mxu0 %v1336
      %1459 = vmatpush1.msra.mxu0 %v1335
      %1460 = vmatprep.subr.mxu0 %v1332
      %1461 = vmatpush1.msra.mxu0 %v1331
      %1462 = vmatprep.subr.mxu0 %v1328
      %1463 = vmatpush1.msra.mxu0 %v1327
      %1464 = vmatprep.subr.mxu0 %v1324
      %1465 = vmatpush1.msra.mxu0 %v1323
      %1466 = vmatprep.subr.mxu0 %v1320
      %1467 = vmatpush1.msra.mxu0 %v1319
      %1468 = vmatprep.subr.mxu0 %v1316
      %1469 = vmatpush1.msra.mxu0 %v1315
      %1470 = vmatprep.subr.mxu0 %v1312
      %1471 = vmatpush1.msra.mxu0 %v1311
      %1472 = vmatprep.subr.mxu0 0.0
      %1473 = vmatpush2.msra.mxu0 0.0
      %1474 = vmatprep.subr.mxu0 0.0
      %1475 = vmatpush2.msra.mxu0 0.0
      %1476 = vmatprep.subr.mxu0 0.0
      %1477 = vmatpush2.msra.mxu0 0.0
      %1478 = vmatprep.subr.mxu0 0.0
      %1479 = vmatpush2.msra.mxu0 0.0
      %1480 = vmatprep.subr.mxu0 0.0
      %1481 = vmatpush2.msra.mxu0 0.0
      %1482 = vmatprep.subr.mxu0 0.0
      %1483 = vmatpush2.msra.mxu0 0.0
      %1484 = vmatprep.subr.mxu0 0.0
      %1485 = vmatpush2.msra.mxu0 0.0
      %1486 = vmatprep.subr.mxu0 0.0
      %1487 = vmatpush2.msra.mxu0 0.0
      %1488 = vmatprep.subr.mxu0 0.0
      %1489 = vmatpush2.msra.mxu0 0.0
      %1490 = vmatprep.subr.mxu0 0.0
      %1491 = vmatpush2.msra.mxu0 0.0
      %1492 = vmatprep.subr.mxu0 0.0
      %1493 = vmatpush2.msra.mxu0 0.0
      %1494 = vmatprep.subr.mxu0 0.0
      %1495 = vmatpush2.msra.mxu0 0.0
      %1496 = vmatprep.subr.mxu0 0.0
      %1497 = vmatpush2.msra.mxu0 0.0
      %1498 = vmatprep.subr.mxu0 0.0
      %1499 = vmatpush2.msra.mxu0 0.0
      %1500 = vmatprep.subr.mxu0 0.0
      %1501 = vmatpush2.msra.mxu0 0.0
      %1502 = vmatprep.subr.mxu0 0.0
      %1503 = vmatpush2.msra.mxu0 0.0
      %1504 = vmatprep.mubr.f32.mxu0 0.0
      %1505 = vmatmul.mubr.f32.gmra.mxu0 %v1426
      %v1506 = vpop.f32.mrf.mxu0
      %v1507 = vadd.f32 0.0, %v1506
      %v1508 = vpop.f32.mrf.mxu0
      %v1509 = vadd.f32 0.0, %v1508
      %1510 = vdwg.mxu0
      %1511 = vmatprep.subr.mxu0 0.0
      %1512 = vmatpush1.msra.mxu0 0.0
      %1513 = vmatprep.subr.mxu0 0.0
      %1514 = vmatpush1.msra.mxu0 0.0
      %1515 = vmatprep.subr.mxu0 %v1438
      %1516 = vmatpush1.msra.mxu0 %v1435
      %1517 = vmatprep.subr.mxu0 %v1422
      %1518 = vmatpush1.msra.mxu0 %v1421
      %1519 = vmatprep.subr.mxu0 %v1418
      %1520 = vmatpush1.msra.mxu0 %v1417
      %1521 = vmatprep.subr.mxu0 %v1414
      %1522 = vmatpush1.msra.mxu0 %v1413
      %1523 = vmatprep.subr.mxu0 %v1410
      %1524 = vmatpush1.msra.mxu0 %v1409
      %1525 = vmatprep.subr.mxu0 %v1406
      %1526 = vmatpush1.msra.mxu0 %v1405
      %1527 = vmatprep.subr.mxu0 %v1342
      %1528 = vmatpush1.msra.mxu0 %v1341
      %1529 = vmatprep.subr.mxu0 %v1338
      %1530 = vmatpush1.msra.mxu0 %v1337
      %1531 = vmatprep.subr.mxu0 %v1334
      %1532 = vmatpush1.msra.mxu0 %v1333
      %1533 = vmatprep.subr.mxu0 %v1330
      %1534 = vmatpush1.msra.mxu0 %v1329
      %1535 = vmatprep.subr.mxu0 %v1326
      %1536 = vmatpush1.msra.mxu0 %v1325
      %1537 = vmatprep.subr.mxu0 %v1322
      %1538 = vmatpush1.msra.mxu0 %v1321
      %1539 = vmatprep.subr.mxu0 %v1318
      %1540 = vmatpush1.msra.mxu0 %v1317
      %1541 = vmatprep.subr.mxu0 %v1314
      %1542 = vmatpush1.msra.mxu0 %v1313
      %1543 = vmatprep.subr.mxu0 0.0
      %1544 = vmatpush2.msra.mxu0 0.0
      %1545 = vmatprep.subr.mxu0 0.0
      %1546 = vmatpush2.msra.mxu0 0.0
      %1547 = vmatprep.subr.mxu0 0.0
      %1548 = vmatpush2.msra.mxu0 0.0
      %1549 = vmatprep.subr.mxu0 0.0
      %1550 = vmatpush2.msra.mxu0 0.0
      %1551 = vmatprep.subr.mxu0 0.0
      %1552 = vmatpush2.msra.mxu0 0.0
      %1553 = vmatprep.subr.mxu0 0.0
      %1554 = vmatpush2.msra.mxu0 0.0
      %1555 = vmatprep.subr.mxu0 0.0
      %1556 = vmatpush2.msra.mxu0 0.0
      %1557 = vmatprep.subr.mxu0 0.0
      %1558 = vmatpush2.msra.mxu0 0.0
      %1559 = vmatprep.subr.mxu0 0.0
      %1560 = vmatpush2.msra.mxu0 0.0
      %1561 = vmatprep.subr.mxu0 0.0
      %1562 = vmatpush2.msra.mxu0 0.0
      %1563 = vmatprep.subr.mxu0 0.0
      %1564 = vmatpush2.msra.mxu0 0.0
      %1565 = vmatprep.subr.mxu0 0.0
      %1566 = vmatpush2.msra.mxu0 0.0
      %1567 = vmatprep.subr.mxu0 0.0
      %1568 = vmatpush2.msra.mxu0 0.0
      %1569 = vmatprep.subr.mxu0 0.0
      %1570 = vmatpush2.msra.mxu0 0.0
      %1571 = vmatprep.subr.mxu0 0.0
      %1572 = vmatpush2.msra.mxu0 0.0
      %1573 = vmatprep.subr.mxu0 0.0
      %1574 = vmatpush2.msra.mxu0 0.0
      %1575 = vmatprep.mubr.f32.mxu0 0.0
      %1576 = vmatmul.mubr.f32.gmra.mxu0 %v1426
      %v1577 = vpop.f32.mrf.mxu0
      %v1578 = vadd.f32 0.0, %v1577
      %v1579 = vpop.f32.mrf.mxu0
      %v1580 = vadd.f32 0.0, %v1579
      %1581 = vdwg.mxu0
      %v1582 = vsel %vm1310, %v1507, 0.0
      %v1583 = vsel %vm1310, %v1509, 0.0
      %v1584 = vadd.f32 %v1582, %v1583
      %v1585 = vsel %vm1310, %v1578, 0.0
      %v1586 = vadd.f32 %v1584, %v1585
      %v1587 = vsel %vm1310, %v1580, 0.0
      %v1588 = vadd.f32 %v1586, %v1587
      %1589 = vadd.xlane.f32.xlu0 %v1588
      %v1590 = vpop.xlane.xlu0 %1589
      %v1591 = vmul.f32 %v1507, %v1507
      %v1592 = vmul.f32 %v1509, %v1509
      %v1593 = vmul.f32 %v1578, %v1578
      %v1594 = vmul.f32 %v1580, %v1580
      %v1595 = vsel %vm1310, %v1591, 0.0
      %v1596 = vsel %vm1310, %v1592, 0.0
      %v1597 = vadd.f32 %v1595, %v1596
      %v1598 = vsel %vm1310, %v1593, 0.0
      %v1599 = vadd.f32 %v1597, %v1598
      %v1600 = vsel %vm1310, %v1594, 0.0
      %v1601 = vadd.f32 %v1599, %v1600
      %1602 = vadd.xlane.f32.xlu0 %v1601
      %v1603 = vpop.xlane.xlu0 %1602
      %v1604 = vsel %vm763, %v1590, %v1603
      %vm1605 = vcmask 11264
      %1606 = vst.msk [vmem:[%s208] sm:$0xf] %vm1605, %v1604
      %v1611 = vcombine.low %v1507, %v1509
      %v1612 = vcombine.low %v1578, %v1580
      %1615 = vst [vmem:[%s204] sm:$0xff] %v1611
      %1616 = vst [vmem:[%s204 + $0x8] sm:$0xff] %v1612
      %p1617 = scmp.lt.s32.totalorder %s16, 1
      %s1618 = scalar_select %p1617, %s16, 1
      %s1619 = smul.addr %s1618, 4
      %s1620 = smul.addr %s1619, 4
      %s1621 = scalar_lea.vmem %s3, %s1620
      %p1622 = scmp.lt.s32.totalorder %s16, 1
      %s1623 = scalar_select %p1622, %s16, 1
      %s1624 = smul.addr %s1623, 4
      %s1625 = scalar_lea.vmem %s4, %s1624
      // Predicated region
      $region33: #{resblock3d.3} parent=31 // pred_check
        %p1626 = pneg %p102
      $region34: #{resblock3d.3} parent=31 // pred_check_branch
        %1628 = sbr.rel (%p1626) target = $region36
      $region35: #{resblock3d.3} parent=31 // pred_region
        _
      $region36: #{resblock3d.3} parent=31 // pred_fallthru
        _
      // Predicated region
      $region37: #{resblock3d.3} parent=31 // pred_check
        %p1629 = pneg %p128
      $region38: #{resblock3d.3} parent=31 // pred_check_branch
        %1631 = sbr.rel (%p1629) target = $region40
      $region39: #{resblock3d.3} parent=31 // pred_region
        _
      $region40: #{resblock3d.3} parent=31 // pred_fallthru
        _
    $region32: #{resblock3d.3} parent=5 // pred_fallthru
      _
    %p1632 = scmp.le.s32.totalorder 2, %s11
    // Predicated region
    $region41: #{resblock3d.3} parent=5 // pred_check
      %p1633 = pneg %p1632
    $region42: #{resblock3d.3} parent=5 // pred_check_branch
      %1635 = sbr.rel (%p1633) target = $region44
    $region43: #{resblock3d.3} parent=5 // pred_region
      %s1636 = ssub.s32 %s11, 2
      // Predicated region
      $region45: #{resblock3d.3} parent=43 // pred_check
        %p1637 = pneg %p108
      $region46: #{resblock3d.3} parent=43 // pred_check_branch
        %1639 = sbr.rel (%p1637) target = $region48
      $region47: #{resblock3d.3} parent=43 // pred_region
        %p1640 = scmp.lt.s32.totalorder %s17, 1
        %s1641 = scalar_select %p1640, %s17, 1
        %s1642 = smul.addr %s1641, 4
        %s1643 = smul.addr %s1642, 4
        %s1644 = scalar_lea.vmem %s3, %s1643
      $region48: #{resblock3d.3} parent=43 // pred_fallthru
        _
      // Predicated region
      $region49: #{resblock3d.3} parent=43 // pred_check
        %p1645 = pneg %p134
      $region50: #{resblock3d.3} parent=43 // pred_check_branch
        %1647 = sbr.rel (%p1645) target = $region52
      $region51: #{resblock3d.3} parent=43 // pred_region
        %p1648 = scmp.lt.s32.totalorder %s17, 1
        %s1649 = scalar_select %p1648, %s17, 1
        %s1650 = smul.addr %s1649, 4
        %s1651 = scalar_lea.vmem %s4, %s1650
      $region52: #{resblock3d.3} parent=43 // pred_fallthru
        _
    $region44: #{resblock3d.3} parent=5 // pred_fallthru
      _
  $region6: #{resblock3d.3} parent=0 // loop_footer
    %s15 = sadd.s32 1, %s11
  $region7: #{resblock3d.3} parent=0 // loop_footer_branch
    %10 = sbr.rel target = $region3
  $region8: #{resblock3d.3} parent=0 // loop_exit
    _

// kernel: resblock3d.4
$region0: #{resblock3d.4}
  #allocation0 [shape = 'u32[]', space=smem, size = 0x4, offset = 0x4, fixed_abs, tag = 'smem constant byte address 0x4 - core index']
  #allocation1 [shape = 'u32[144,128]{1,0:T(1,128)}', space=vmem, size = 0x12000, scoped, tag = 'internal scratch']
  %s0 = inlined_call_operand.vmem [shape: f32[2,4,512], index: 0, kind: input, shape index: {}]
  %s1 = inlined_call_operand.vmem [shape: f32[4,1], index: 1, kind: input, shape index: {}]
  %s2 = inlined_call_operand.vmem [shape: f32[4,1], index: 2, kind: input, shape index: {}]
  %s3 = inlined_call_operand.vmem [shape: f32[4,108], index: 3, kind: input, shape index: {}]
  %s4 = inlined_call_operand.vmem [shape: f32[27,512], index: 4, kind: input, shape index: {}]
  %s5 = inlined_call_operand.vmem [shape: f32[2,4,512], index: 5, kind: output, shape index: {0}]
  %s6 = inlined_call_operand.vmem [shape: f32[2,4,2], index: 6, kind: output, shape index: {1}]
  %7 = xla_tuple %s5, %s6
  %s8 = sld [smem:[#allocation0]]
  $region61: #{resblock3d.4} parent=0
    _
  %s10 = ssub.s32 1, %s8
  %s11 = scalar_select 0, %s10, %s8
  loop: start=0, step=1, limit=4
  $region2: #{resblock3d.4} parent=0 // loop_pre_header
    _
  $region3: #{resblock3d.4} parent=0 // loop_header
    %s13 = sphi 0, %s17
    %p14 = scmp.ge.s32.totalorder %s13, 4
    %s23 = sphi 0, %s25
    %s26 = sphi 0, %s23
    %s27 = sphi 0, %s26
    %s43 = sphi 0, %s27
    %s47 = sphi 0, %s47
    %s49 = sphi 0, %s47
    %s50 = sphi 0, %s49
    %s64 = sphi 0, %s50
    %s68 = sphi 0, %s68
    %s70 = sphi 0, %s68
    %s71 = sphi 0, %s70
    %s85 = sphi 0, %s71
    %s89 = sphi 0, %s89
    %s91 = sphi 0, %s89
    %s92 = sphi 0, %s91
    %s106 = sphi 0, %s92
    %s110 = sphi 0, %s110
    %s112 = sphi 0, %s110
    %s113 = sphi 0, %s112
    %s127 = sphi 0, %s113
    %s133 = sphi 0, %s135
    %s136 = sphi 0, %s133
    %s137 = sphi 0, %s136
    %s153 = sphi 0, %s137
    %s159 = sphi 0, %s161
    %s162 = sphi 0, %s159
    %s163 = sphi 0, %s162
    %s179 = sphi 0, %s163
  $region4: #{resblock3d.4} parent=0 // loop_header_branch
    %16 = sbr.rel (%p14) target = $region8
  $region5: #{resblock3d.4} parent=0 // loop_body
    %s18 = ssub.s32 %s13, 1
    %s19 = ssub.s32 %s13, 2
    %s20 = sadd.s32 %s13, 1
    %s21 = ssub.s32 %s13, %s20
    %p22 = scmp.eq.s32.totalorder %s21, 0
    %s24 = sadd.s32 %s23, 1
    %s25 = scalar_select %p22, %s23, %s24
    %p28 = pneg %p22
    %p29 = scmp.eq.s32.totalorder %s13, 1
    %p30 = por %p28, %p29
    %p31 = scmp.ne.s32.totalorder %s23, %s26
    %p32 = scmp.eq.s32.totalorder %s13, 0
    %p33 = por %p31, %p32
    %p34 = scmp.ne.s32.totalorder %s23, %s26
    %p35 = scmp.eq.s32.totalorder %s18, 1
    %p36 = por %p34, %p35
    %p37 = scmp.ne.s32.totalorder %s26, %s27
    %p38 = scmp.eq.s32.totalorder %s18, 0
    %p39 = por %p37, %p38
    %p40 = scmp.ne.s32.totalorder %s26, %s27
    %p41 = scmp.eq.s32.totalorder %s19, 1
    %p42 = por %p40, %p41
    %p44 = scmp.ne.s32.totalorder %s27, %s43
    %p45 = scmp.eq.s32.totalorder %s19, 0
    %p46 = por %p44, %p45
    %s48 = sadd.s32 %s47, 1
    %p51 = scmp.eq.s32.totalorder %s13, 1
    %p52 = scmp.ne.s32.totalorder %s47, %s49
    %p53 = scmp.eq.s32.totalorder %s13, 0
    %p54 = por %p52, %p53
    %p55 = scmp.ne.s32.totalorder %s47, %s49
    %p56 = scmp.eq.s32.totalorder %s18, 1
    %p57 = por %p55, %p56
    %p58 = scmp.ne.s32.totalorder %s49, %s50
    %p59 = scmp.eq.s32.totalorder %s18, 0
    %p60 = por %p58, %p59
    %p61 = scmp.ne.s32.totalorder %s49, %s50
    %p62 = scmp.eq.s32.totalorder %s19, 1
    %p63 = por %p61, %p62
    %p65 = scmp.ne.s32.totalorder %s50, %s64
    %p66 = scmp.eq.s32.totalorder %s19, 0
    %p67 = por %p65, %p66
    %s69 = sadd.s32 %s68, 1
    %p72 = scmp.eq.s32.totalorder %s13, 1
    %p73 = scmp.ne.s32.totalorder %s68, %s70
    %p74 = scmp.eq.s32.totalorder %s13, 0
    %p75 = por %p73, %p74
    %p76 = scmp.ne.s32.totalorder %s68, %s70
    %p77 = scmp.eq.s32.totalorder %s18, 1
    %p78 = por %p76, %p77
    %p79 = scmp.ne.s32.totalorder %s70, %s71
    %p80 = scmp.eq.s32.totalorder %s18, 0
    %p81 = por %p79, %p80
    %p82 = scmp.ne.s32.totalorder %s70, %s71
    %p83 = scmp.eq.s32.totalorder %s19, 1
    %p84 = por %p82, %p83
    %p86 = scmp.ne.s32.totalorder %s71, %s85
    %p87 = scmp.eq.s32.totalorder %s19, 0
    %p88 = por %p86, %p87
    %s90 = sadd.s32 %s89, 1
    %p93 = scmp.eq.s32.totalorder %s13, 1
    %p94 = scmp.ne.s32.totalorder %s89, %s91
    %p95 = scmp.eq.s32.totalorder %s13, 0
    %p96 = por %p94, %p95
    %p97 = scmp.ne.s32.totalorder %s89, %s91
    %p98 = scmp.eq.s32.totalorder %s18, 1
    %p99 = por %p97, %p98
    %p100 = scmp.ne.s32.totalorder %s91, %s92
    %p101 = scmp.eq.s32.totalorder %s18, 0
    %p102 = por %p100, %p101
    %p103 = scmp.ne.s32.totalorder %s91, %s92
    %p104 = scmp.eq.s32.totalorder %s19, 1
    %p105 = por %p103, %p104
    %p107 = scmp.ne.s32.totalorder %s92, %s106
    %p108 = scmp.eq.s32.totalorder %s19, 0
    %p109 = por %p107, %p108
    %s111 = sadd.s32 %s110, 1
    %p114 = scmp.eq.s32.totalorder %s13, 1
    %p115 = scmp.ne.s32.totalorder %s110, %s112
    %p116 = scmp.eq.s32.totalorder %s13, 0
    %p117 = por %p115, %p116
    %p118 = scmp.ne.s32.totalorder %s110, %s112
    %p119 = scmp.eq.s32.totalorder %s18, 1
    %p120 = por %p118, %p119
    %p121 = scmp.ne.s32.totalorder %s112, %s113
    %p122 = scmp.eq.s32.totalorder %s18, 0
    %p123 = por %p121, %p122
    %p124 = scmp.ne.s32.totalorder %s112, %s113
    %p125 = scmp.eq.s32.totalorder %s19, 1
    %p126 = por %p124, %p125
    %p128 = scmp.ne.s32.totalorder %s113, %s127
    %p129 = scmp.eq.s32.totalorder %s19, 0
    %p130 = por %p128, %p129
    %s131 = ssub.s32 %s13, %s20
    %p132 = scmp.eq.s32.totalorder %s131, 0
    %s134 = sadd.s32 %s133, 1
    %s135 = scalar_select %p132, %s133, %s134
    %p138 = pneg %p132
    %p139 = scmp.eq.s32.totalorder %s13, 1
    %p140 = por %p138, %p139
    %p141 = scmp.ne.s32.totalorder %s133, %s136
    %p142 = scmp.eq.s32.totalorder %s13, 0
    %p143 = por %p141, %p142
    %p144 = scmp.ne.s32.totalorder %s133, %s136
    %p145 = scmp.eq.s32.totalorder %s18, 1
    %p146 = por %p144, %p145
    %p147 = scmp.ne.s32.totalorder %s136, %s137
    %p148 = scmp.eq.s32.totalorder %s18, 0
    %p149 = por %p147, %p148
    %p150 = scmp.ne.s32.totalorder %s136, %s137
    %p151 = scmp.eq.s32.totalorder %s19, 1
    %p152 = por %p150, %p151
    %p154 = scmp.ne.s32.totalorder %s137, %s153
    %p155 = scmp.eq.s32.totalorder %s19, 0
    %p156 = por %p154, %p155
    %s157 = ssub.s32 %s13, %s20
    %p158 = scmp.eq.s32.totalorder %s157, 0
    %s160 = sadd.s32 %s159, 1
    %s161 = scalar_select %p158, %s159, %s160
    %p164 = pneg %p158
    %p165 = scmp.eq.s32.totalorder %s13, 1
    %p166 = por %p164, %p165
    %p167 = scmp.ne.s32.totalorder %s159, %s162
    %p168 = scmp.eq.s32.totalorder %s13, 0
    %p169 = por %p167, %p168
    %p170 = scmp.ne.s32.totalorder %s159, %s162
    %p171 = scmp.eq.s32.totalorder %s18, 1
    %p172 = por %p170, %p171
    %p173 = scmp.ne.s32.totalorder %s162, %s163
    %p174 = scmp.eq.s32.totalorder %s18, 0
    %p175 = por %p173, %p174
    %p176 = scmp.ne.s32.totalorder %s162, %s163
    %p177 = scmp.eq.s32.totalorder %s19, 1
    %p178 = por %p176, %p177
    %p180 = scmp.ne.s32.totalorder %s163, %s179
    %p181 = scmp.eq.s32.totalorder %s19, 0
    %p182 = por %p180, %p181
    %p183 = scmp.le.s32.totalorder 1, %s13
    %p184 = scmp.lt.s32.totalorder %s13, 3
    %p185 = pnand %p183, %p184
    %p186 = pneg %p185
    // Predicated region
    $region9: #{resblock3d.4} parent=5 // pred_check
      _
    $region10: #{resblock3d.4} parent=5 // pred_check_branch
      %188 = sbr.rel (%p185) target = $region12
    $region11: #{resblock3d.4} parent=5 // pred_region
      %s189 = ssub.s32 %s13, 1
      // Predicated region
      $region13: #{resblock3d.4} parent=11 // pred_check
        %p190 = pneg %p60
      $region14: #{resblock3d.4} parent=11 // pred_check_branch
        %192 = sbr.rel (%p190) target = $region16
      $region15: #{resblock3d.4} parent=11 // pred_region
        _
      $region16: #{resblock3d.4} parent=11 // pred_fallthru
        _
      // Predicated region
      $region17: #{resblock3d.4} parent=11 // pred_check
        %p193 = pneg %p81
      $region18: #{resblock3d.4} parent=11 // pred_check_branch
        %195 = sbr.rel (%p193) target = $region20
      $region19: #{resblock3d.4} parent=11 // pred_region
        _
      $region20: #{resblock3d.4} parent=11 // pred_fallthru
        _
      // Predicated region
      $region21: #{resblock3d.4} parent=11 // pred_check
        %p196 = pneg %p102
      $region22: #{resblock3d.4} parent=11 // pred_check_branch
        %198 = sbr.rel (%p196) target = $region24
      $region23: #{resblock3d.4} parent=11 // pred_region
        _
      $region24: #{resblock3d.4} parent=11 // pred_fallthru
        _
      // Predicated region
      $region25: #{resblock3d.4} parent=11 // pred_check
        %p199 = pneg %p123
      $region26: #{resblock3d.4} parent=11 // pred_check_branch
        %201 = sbr.rel (%p199) target = $region28
      $region27: #{resblock3d.4} parent=11 // pred_region
        _
      $region28: #{resblock3d.4} parent=11 // pred_fallthru
        _
    $region12: #{resblock3d.4} parent=5 // pred_fallthru
      _
    %p202 = scmp.lt.s32.totalorder %s13, 2
    // Predicated region
    $region29: #{resblock3d.4} parent=5 // pred_check
      %p203 = pneg %p202
    $region30: #{resblock3d.4} parent=5 // pred_check_branch
      %205 = sbr.rel (%p203) target = $region32
    $region31: #{resblock3d.4} parent=5 // pred_region
      // Predicated region
      $region33: #{resblock3d.4} parent=31 // pred_check
        %p206 = pneg %p33
      $region34: #{resblock3d.4} parent=31 // pred_check_branch
        %208 = sbr.rel (%p206) target = $region36
      $region35: #{resblock3d.4} parent=31 // pred_region
        %p209 = scmp.lt.s32.totalorder %s13, 1
        %s210 = scalar_select %p209, %s13, 1
        %s211 = smul.addr %s210, 4
        %s212 = smul.addr %s211, 4
        %s213 = scalar_lea.vmem %s0, %s212
      $region36: #{resblock3d.4} parent=31 // pred_fallthru
        _
    $region32: #{resblock3d.4} parent=5 // pred_fallthru
      _
    %p214 = scmp.le.s32.totalorder 1, %s13
    %p215 = scmp.lt.s32.totalorder %s13, 3
    %p216 = pnand %p214, %p215
    %p217 = pneg %p216
    // Predicated region
    $region37: #{resblock3d.4} parent=5 // pred_check
      _
    $region38: #{resblock3d.4} parent=5 // pred_check_branch
      %219 = sbr.rel (%p216) target = $region40
    $region39: #{resblock3d.4} parent=5 // pred_region
      %s220 = ssub.s32 %s13, 1
      %p221 = scmp.lt.s32.totalorder %s18, 1
      %s222 = scalar_select %p221, %s18, 1
      %s223 = smul.addr %s222, 4
      %s224 = smul.addr %s223, 4
      %s225 = scalar_lea.vmem %s0, %s224
      %p226 = pneg %p39
      %p227 = pneg %p36
      %p228 = pneg %p60
      %p229 = pneg %p57
      %p230 = pneg %p81
      %p231 = pneg %p78
      %p232 = pneg %p102
      %p233 = pneg %p99
      %p234 = pneg %p123
      %p235 = pneg %p120
      %p236 = pneg %p149
      %p237 = pneg %p146
      %p238 = scmp.lt.s32.totalorder %s18, 1
      %s239 = scalar_select %p238, %s18, 1
      %s240 = smul.addr %s239, 4
      %s241 = smul.addr %s240, 4
      %s242 = scalar_lea.vmem %s5, %s241
      %p243 = pneg %p175
      %p244 = pneg %p172
      %p245 = scmp.lt.s32.totalorder %s18, 1
      %s246 = scalar_select %p245, %s18, 1
      %s247 = smul.addr %s246, 4
      %s248 = scalar_lea.vmem %s6, %s247
      %p249 = scmp.lt.s32.totalorder %s18, 1
      %s250 = scalar_select %p249, %s18, 1
      %s251 = smul.addr %s250, 4
      %s252 = smul.addr %s251, 4
      %s253 = scalar_lea.vmem %s0, %s252
      %p254 = scmp.lt.s32.totalorder %s18, 1
      %s255 = scalar_select %p254, %s18, 1
      %s256 = smul.addr %s255, 4
      %s257 = smul.addr %s256, 4
      %s258 = scalar_lea.vmem %s5, %s257
      %p259 = scmp.lt.s32.totalorder %s18, 1
      %s260 = scalar_select %p259, %s18, 1
      %s261 = smul.addr %s260, 4
      %s262 = scalar_lea.vmem %s6, %s261
      %v263 = vld [vmem:[%s253] sm:$0xff]
      %v264 = vld [vmem:[%s253 + $0x8] sm:$0xff]
      %v265 = vld [vmem:[%s1] sm:$0xf]
      %267 = vset.pattern.permute.xlu0 0
      %268 = vperm.xlu0 %267, %v265
      %v269 = vpop.permute.xlu0 %268
      %v271 = vunpack.c.l.s4 839922192
      %v272 = vunpack.c.0.s8 %v271
      %v273 = vlaneseq
      %v274 = vshrl.u32 %v273, 7
      %v275 = vsub.s32 %v272, %v274
      %v276 = vrot.slane %v269, %v275
      %v278 = vmul.f32 %v263, %v276
      %v279 = vmul.f32 %v264, %v276
      %v280 = vld [vmem:[%s2] sm:$0xf]
      %282 = vset.pattern.permute.xlu0 0
      %283 = vperm.xlu0 %282, %v280
      %v284 = vpop.permute.xlu0 %283
      %v286 = vunpack.c.l.s4 839922192
      %v287 = vunpack.c.0.s8 %v286
      %v288 = vlaneseq
      %v289 = vshrl.u32 %v288, 7
      %v290 = vsub.s32 %v287, %v289
      %v291 = vrot.slane %v284, %v290
      %v293 = vadd.f32 %v278, %v291
      %v294 = vadd.f32 %v279, %v291
      %v295 = vmax.f32 %v293, 0.0
      %v296 = vmax.f32 %v294, 0.0
      %v298 = vcombine.high %v296, %v296
      %299 = vrot.lane.b32.xlu0 %v298, 73
      %v300 = vpop.permute.xlu0 %299
      %v303 = vcombine.high %v295, %v295
      %304 = vrot.lane.b32.xlu0 %v295, 73
      %v305 = vpop.permute.xlu0 %304
      %306 = vrot.lane.b32.xlu0 %v303, 73
      %v307 = vpop.permute.xlu0 %306
      %308 = vrot.lane.b32.xlu0 %v296, 73
      %v309 = vpop.permute.xlu0 %308
      %vm310 = vcmask 596992
      %v311 = vsel %vm310, %v305, %v307
      %v312 = vsel %vm310, %v307, %v309
      %v313 = vsel %vm310, %v309, %v300
      %v318 = vsel %vm310, %v300, %v305
      %v319 = vld [vmem:[%s4] ss:$8 sm:$0xf]
      %v321 = vlaneseq
      %v322 = vshrl.u32 %v321, 7
      %v323 = vsub.s32 0, %v322
      %v324 = vrot.slane %v319, %v323
      %v325 = vlaneseq
      %v326 = vshrl.u32 %v325, 7
      %v327 = vsub.s32 1, %v326
      %v328 = vrot.slane %v319, %v327
      %v329 = vlaneseq
      %v330 = vshrl.u32 %v329, 7
      %v331 = vsub.s32 2, %v330
      %v332 = vrot.slane %v319, %v331
      %v333 = vlaneseq
      %v334 = vshrl.u32 %v333, 7
      %v335 = vsub.s32 3, %v334
      %v336 = vrot.slane %v319, %v335
      %v341 = vmul.f32 %v318, %v324
      %v342 = vmul.f32 %v311, %v328
      %v343 = vmul.f32 %v312, %v332
      %v344 = vmul.f32 %v313, %v336
      %345 = vrot.lane.b32.xlu0 %v298, 72
      %v346 = vpop.permute.xlu0 %345
      %348 = vrot.lane.b32.xlu0 %v295, 72
      %v349 = vpop.permute.xlu0 %348
      %350 = vrot.lane.b32.xlu0 %v303, 72
      %v351 = vpop.permute.xlu0 %350
      %352 = vrot.lane.b32.xlu0 %v296, 72
      %v353 = vpop.permute.xlu0 %352
      %vm354 = vcmask 588800
      %v355 = vsel %vm354, %v349, %v351
      %v356 = vsel %vm354, %v351, %v353
      %v357 = vsel %vm354, %v353, %v346
      %v362 = vsel %vm354, %v346, %v349
      %s363 = scalar_lea.vmem %s4, 1
      %v364 = vld [vmem:[%s363] ss:$8 sm:$0xf]
      %v366 = vlaneseq
      %v367 = vshrl.u32 %v366, 7
      %v368 = vsub.s32 0, %v367
      %v369 = vrot.slane %v364, %v368
      %v370 = vlaneseq
      %v371 = vshrl.u32 %v370, 7
      %v372 = vsub.s32 1, %v371
      %v373 = vrot.slane %v364, %v372
      %v374 = vlaneseq
      %v375 = vshrl.u32 %v374, 7
      %v376 = vsub.s32 2, %v375
      %v377 = vrot.slane %v364, %v376
      %v378 = vlaneseq
      %v379 = vshrl.u32 %v378, 7
      %v380 = vsub.s32 3, %v379
      %v381 = vrot.slane %v364, %v380
      %v386 = vmul.f32 %v362, %v369
      %v387 = vmul.f32 %v355, %v373
      %v388 = vmul.f32 %v356, %v377
      %v389 = vmul.f32 %v357, %v381
      %390 = vrot.lane.b32.xlu0 %v298, 71
      %v391 = vpop.permute.xlu0 %390
      %393 = vrot.lane.b32.xlu0 %v295, 71
      %v394 = vpop.permute.xlu0 %393
      %395 = vrot.lane.b32.xlu0 %v303, 71
      %v396 = vpop.permute.xlu0 %395
      %397 = vrot.lane.b32.xlu0 %v296, 71
      %v398 = vpop.permute.xlu0 %397
      %vm399 = vcmask 580608
      %v400 = vsel %vm399, %v394, %v396
      %v401 = vsel %vm399, %v396, %v398
      %v402 = vsel %vm399, %v398, %v391
      %v407 = vsel %vm399, %v391, %v394
      %s408 = scalar_lea.vmem %s4, 2
      %v409 = vld [vmem:[%s408] ss:$8 sm:$0xf]
      %v411 = vlaneseq
      %v412 = vshrl.u32 %v411, 7
      %v413 = vsub.s32 0, %v412
      %v414 = vrot.slane %v409, %v413
      %v415 = vlaneseq
      %v416 = vshrl.u32 %v415, 7
      %v417 = vsub.s32 1, %v416
      %v418 = vrot.slane %v409, %v417
      %v419 = vlaneseq
      %v420 = vshrl.u32 %v419, 7
      %v421 = vsub.s32 2, %v420
      %v422 = vrot.slane %v409, %v421
      %v423 = vlaneseq
      %v424 = vshrl.u32 %v423, 7
      %v425 = vsub.s32 3, %v424
      %v426 = vrot.slane %v409, %v425
      %v431 = vmul.f32 %v407, %v414
      %v432 = vmul.f32 %v400, %v418
      %v433 = vmul.f32 %v401, %v422
      %v434 = vmul.f32 %v402, %v426
      %435 = vrot.lane.b32.xlu0 %v298, 65
      %v436 = vpop.permute.xlu0 %435
      %438 = vrot.lane.b32.xlu0 %v295, 65
      %v439 = vpop.permute.xlu0 %438
      %440 = vrot.lane.b32.xlu0 %v303, 65
      %v441 = vpop.permute.xlu0 %440
      %442 = vrot.lane.b32.xlu0 %v296, 65
      %v443 = vpop.permute.xlu0 %442
      %vm444 = vcmask 531456
      %v445 = vsel %vm444, %v439, %v441
      %v446 = vsel %vm444, %v441, %v443
      %v447 = vsel %vm444, %v443, %v436
      %v452 = vsel %vm444, %v436, %v439
      %s453 = scalar_lea.vmem %s4, 3
      %v454 = vld [vmem:[%s453] ss:$8 sm:$0xf]
      %v456 = vlaneseq
      %v457 = vshrl.u32 %v456, 7
      %v458 = vsub.s32 0, %v457
      %v459 = vrot.slane %v454, %v458
      %v460 = vlaneseq
      %v461 = vshrl.u32 %v460, 7
      %v462 = vsub.s32 1, %v461
      %v463 = vrot.slane %v454, %v462
      %v464 = vlaneseq
      %v465 = vshrl.u32 %v464, 7
      %v466 = vsub.s32 2, %v465
      %v467 = vrot.slane %v454, %v466
      %v468 = vlaneseq
      %v469 = vshrl.u32 %v468, 7
      %v470 = vsub.s32 3, %v469
      %v471 = vrot.slane %v454, %v470
      %v476 = vmul.f32 %v452, %v459
      %v477 = vmul.f32 %v445, %v463
      %v478 = vmul.f32 %v446, %v467
      %v479 = vmul.f32 %v447, %v471
      %480 = vrot.lane.b32.xlu0 %v298, 64
      %v481 = vpop.permute.xlu0 %480
      %483 = vrot.lane.b32.xlu0 %v295, 64
      %v484 = vpop.permute.xlu0 %483
      %485 = vrot.lane.b32.xlu0 %v303, 64
      %v486 = vpop.permute.xlu0 %485
      %487 = vrot.lane.b32.xlu0 %v296, 64
      %v488 = vpop.permute.xlu0 %487
      %vm489 = vcmask 523264
      %v490 = vsel %vm489, %v484, %v486
      %v491 = vsel %vm489, %v486, %v488
      %v492 = vsel %vm489, %v488, %v481
      %v497 = vsel %vm489, %v481, %v484
      %s498 = scalar_lea.vmem %s4, 4
      %v499 = vld [vmem:[%s498] ss:$8 sm:$0xf]
      %v501 = vlaneseq
      %v502 = vshrl.u32 %v501, 7
      %v503 = vsub.s32 0, %v502
      %v504 = vrot.slane %v499, %v503
      %v505 = vlaneseq
      %v506 = vshrl.u32 %v505, 7
      %v507 = vsub.s32 1, %v506
      %v508 = vrot.slane %v499, %v507
      %v509 = vlaneseq
      %v510 = vshrl.u32 %v509, 7
      %v511 = vsub.s32 2, %v510
      %v512 = vrot.slane %v499, %v511
      %v513 = vlaneseq
      %v514 = vshrl.u32 %v513, 7
      %v515 = vsub.s32 3, %v514
      %v516 = vrot.slane %v499, %v515
      %v521 = vmul.f32 %v497, %v504
      %v522 = vmul.f32 %v490, %v508
      %v523 = vmul.f32 %v491, %v512
      %v524 = vmul.f32 %v492, %v516
      %525 = vrot.lane.b32.xlu0 %v298, 63
      %v526 = vpop.permute.xlu0 %525
      %528 = vrot.lane.b32.xlu0 %v295, 63
      %v529 = vpop.permute.xlu0 %528
      %530 = vrot.lane.b32.xlu0 %v303, 63
      %v531 = vpop.permute.xlu0 %530
      %532 = vrot.lane.b32.xlu0 %v296, 63
      %v533 = vpop.permute.xlu0 %532
      %vm534 = vcmask 515072
      %v535 = vsel %vm534, %v529, %v531
      %v536 = vsel %vm534, %v531, %v533
      %v537 = vsel %vm534, %v533, %v526
      %v542 = vsel %vm534, %v526, %v529
      %s543 = scalar_lea.vmem %s4, 5
      %v544 = vld [vmem:[%s543] ss:$8 sm:$0xf]
      %v546 = vlaneseq
      %v547 = vshrl.u32 %v546, 7
      %v548 = vsub.s32 0, %v547
      %v549 = vrot.slane %v544, %v548
      %v550 = vlaneseq
      %v551 = vshrl.u32 %v550, 7
      %v552 = vsub.s32 1, %v551
      %v553 = vrot.slane %v544, %v552
      %v554 = vlaneseq
      %v555 = vshrl.u32 %v554, 7
      %v556 = vsub.s32 2, %v555
      %v557 = vrot.slane %v544, %v556
      %v558 = vlaneseq
      %v559 = vshrl.u32 %v558, 7
      %v560 = vsub.s32 3, %v559
      %v561 = vrot.slane %v544, %v560
      %v566 = vmul.f32 %v542, %v549
      %v567 = vmul.f32 %v535, %v553
      %v568 = vmul.f32 %v536, %v557
      %v569 = vmul.f32 %v537, %v561
      %570 = vrot.lane.b32.xlu0 %v298, 57
      %v571 = vpop.permute.xlu0 %570
      %573 = vrot.lane.b32.xlu0 %v295, 57
      %v574 = vpop.permute.xlu0 %573
      %575 = vrot.lane.b32.xlu0 %v303, 57
      %v576 = vpop.permute.xlu0 %575
      %577 = vrot.lane.b32.xlu0 %v296, 57
      %v578 = vpop.permute.xlu0 %577
      %vm579 = vcmask 465920
      %v580 = vsel %vm579, %v574, %v576
      %v581 = vsel %vm579, %v576, %v578
      %v582 = vsel %vm579, %v578, %v571
      %v587 = vsel %vm579, %v571, %v574
      %s588 = scalar_lea.vmem %s4, 6
      %v589 = vld [vmem:[%s588] ss:$8 sm:$0xf]
      %v591 = vlaneseq
      %v592 = vshrl.u32 %v591, 7
      %v593 = vsub.s32 0, %v592
      %v594 = vrot.slane %v589, %v593
      %v595 = vlaneseq
      %v596 = vshrl.u32 %v595, 7
      %v597 = vsub.s32 1, %v596
      %v598 = vrot.slane %v589, %v597
      %v599 = vlaneseq
      %v600 = vshrl.u32 %v599, 7
      %v601 = vsub.s32 2, %v600
      %v602 = vrot.slane %v589, %v601
      %v603 = vlaneseq
      %v604 = vshrl.u32 %v603, 7
      %v605 = vsub.s32 3, %v604
      %v606 = vrot.slane %v589, %v605
      %v611 = vmul.f32 %v587, %v594
      %v612 = vmul.f32 %v580, %v598
      %v613 = vmul.f32 %v581, %v602
      %v614 = vmul.f32 %v582, %v606
      %615 = vrot.lane.b32.xlu0 %v298, 56
      %v616 = vpop.permute.xlu0 %615
      %618 = vrot.lane.b32.xlu0 %v295, 56
      %v619 = vpop.permute.xlu0 %618
      %620 = vrot.lane.b32.xlu0 %v303, 56
      %v621 = vpop.permute.xlu0 %620
      %622 = vrot.lane.b32.xlu0 %v296, 56
      %v623 = vpop.permute.xlu0 %622
      %vm624 = vcmask 457728
      %v625 = vsel %vm624, %v619, %v621
      %v626 = vsel %vm624, %v621, %v623
      %v627 = vsel %vm624, %v623, %v616
      %v632 = vsel %vm624, %v616, %v619
      %s633 = scalar_lea.vmem %s4, 7
      %v634 = vld [vmem:[%s633] ss:$8 sm:$0xf]
      %v636 = vlaneseq
      %v637 = vshrl.u32 %v636, 7
      %v638 = vsub.s32 0, %v637
      %v639 = vrot.slane %v634, %v638
      %v640 = vlaneseq
      %v641 = vshrl.u32 %v640, 7
      %v642 = vsub.s32 1, %v641
      %v643 = vrot.slane %v634, %v642
      %v644 = vlaneseq
      %v645 = vshrl.u32 %v644, 7
      %v646 = vsub.s32 2, %v645
      %v647 = vrot.slane %v634, %v646
      %v648 = vlaneseq
      %v649 = vshrl.u32 %v648, 7
      %v650 = vsub.s32 3, %v649
      %v651 = vrot.slane %v634, %v650
      %v656 = vmul.f32 %v632, %v639
      %v657 = vmul.f32 %v625, %v643
      %v658 = vmul.f32 %v626, %v647
      %v659 = vmul.f32 %v627, %v651
      %660 = vrot.lane.b32.xlu0 %v298, 55
      %v661 = vpop.permute.xlu0 %660
      %663 = vrot.lane.b32.xlu0 %v295, 55
      %v664 = vpop.permute.xlu0 %663
      %665 = vrot.lane.b32.xlu0 %v303, 55
      %v666 = vpop.permute.xlu0 %665
      %667 = vrot.lane.b32.xlu0 %v296, 55
      %v668 = vpop.permute.xlu0 %667
      %vm669 = vcmask 449536
      %v670 = vsel %vm669, %v664, %v666
      %v671 = vsel %vm669, %v666, %v668
      %v672 = vsel %vm669, %v668, %v661
      %v677 = vsel %vm669, %v661, %v664
      %s678 = scalar_lea.vmem %s4, 32
      %v679 = vld [vmem:[%s678] ss:$8 sm:$0xf]
      %v681 = vlaneseq
      %v682 = vshrl.u32 %v681, 7
      %v683 = vsub.s32 0, %v682
      %v684 = vrot.slane %v679, %v683
      %v685 = vlaneseq
      %v686 = vshrl.u32 %v685, 7
      %v687 = vsub.s32 1, %v686
      %v688 = vrot.slane %v679, %v687
      %v689 = vlaneseq
      %v690 = vshrl.u32 %v689, 7
      %v691 = vsub.s32 2, %v690
      %v692 = vrot.slane %v679, %v691
      %v693 = vlaneseq
      %v694 = vshrl.u32 %v693, 7
      %v695 = vsub.s32 3, %v694
      %v696 = vrot.slane %v679, %v695
      %v701 = vmul.f32 %v677, %v684
      %v702 = vmul.f32 %v670, %v688
      %v703 = vmul.f32 %v671, %v692
      %v704 = vmul.f32 %v672, %v696
      %705 = vrot.lane.b32.xlu0 %v298, 9
      %v706 = vpop.permute.xlu0 %705
      %708 = vrot.lane.b32.xlu0 %v295, 9
      %v709 = vpop.permute.xlu0 %708
      %710 = vrot.lane.b32.xlu0 %v303, 9
      %v711 = vpop.permute.xlu0 %710
      %712 = vrot.lane.b32.xlu0 %v296, 9
      %v713 = vpop.permute.xlu0 %712
      %vm714 = vcmask 72704
      %v715 = vsel %vm714, %v709, %v711
      %v716 = vsel %vm714, %v711, %v713
      %v717 = vsel %vm714, %v713, %v706
      %v722 = vsel %vm714, %v706, %v709
      %s723 = scalar_lea.vmem %s4, 33
      %v724 = vld [vmem:[%s723] ss:$8 sm:$0xf]
      %v726 = vlaneseq
      %v727 = vshrl.u32 %v726, 7
      %v728 = vsub.s32 0, %v727
      %v729 = vrot.slane %v724, %v728
      %v730 = vlaneseq
      %v731 = vshrl.u32 %v730, 7
      %v732 = vsub.s32 1, %v731
      %v733 = vrot.slane %v724, %v732
      %v734 = vlaneseq
      %v735 = vshrl.u32 %v734, 7
      %v736 = vsub.s32 2, %v735
      %v737 = vrot.slane %v724, %v736
      %v738 = vlaneseq
      %v739 = vshrl.u32 %v738, 7
      %v740 = vsub.s32 3, %v739
      %v741 = vrot.slane %v724, %v740
      %v746 = vmul.f32 %v722, %v729
      %v747 = vmul.f32 %v715, %v733
      %v748 = vmul.f32 %v716, %v737
      %v749 = vmul.f32 %v717, %v741
      %750 = vrot.lane.b32.xlu0 %v298, 8
      %v751 = vpop.permute.xlu0 %750
      %753 = vrot.lane.b32.xlu0 %v295, 8
      %v754 = vpop.permute.xlu0 %753
      %755 = vrot.lane.b32.xlu0 %v303, 8
      %v756 = vpop.permute.xlu0 %755
      %757 = vrot.lane.b32.xlu0 %v296, 8
      %v758 = vpop.permute.xlu0 %757
      %vm759 = vcmask 64512
      %v760 = vsel %vm759, %v754, %v756
      %v761 = vsel %vm759, %v756, %v758
      %v762 = vsel %vm759, %v758, %v751
      %v767 = vsel %vm759, %v751, %v754
      %s768 = scalar_lea.vmem %s4, 34
      %v769 = vld [vmem:[%s768] ss:$8 sm:$0xf]
      %v771 = vlaneseq
      %v772 = vshrl.u32 %v771, 7
      %v773 = vsub.s32 0, %v772
      %v774 = vrot.slane %v769, %v773
      %v775 = vlaneseq
      %v776 = vshrl.u32 %v775, 7
      %v777 = vsub.s32 1, %v776
      %v778 = vrot.slane %v769, %v777
      %v779 = vlaneseq
      %v780 = vshrl.u32 %v779, 7
      %v781 = vsub.s32 2, %v780
      %v782 = vrot.slane %v769, %v781
      %v783 = vlaneseq
      %v784 = vshrl.u32 %v783, 7
      %v785 = vsub.s32 3, %v784
      %v786 = vrot.slane %v769, %v785
      %v791 = vmul.f32 %v767, %v774
      %v792 = vmul.f32 %v760, %v778
      %v793 = vmul.f32 %v761, %v782
      %v794 = vmul.f32 %v762, %v786
      %795 = vrot.lane.b32.xlu0 %v298, 7
      %v796 = vpop.permute.xlu0 %795
      %798 = vrot.lane.b32.xlu0 %v295, 7
      %v799 = vpop.permute.xlu0 %798
      %800 = vrot.lane.b32.xlu0 %v303, 7
      %v801 = vpop.permute.xlu0 %800
      %802 = vrot.lane.b32.xlu0 %v296, 7
      %v803 = vpop.permute.xlu0 %802
      %vm804 = vcmask 56320
      %v805 = vsel %vm804, %v799, %v801
      %v806 = vsel %vm804, %v801, %v803
      %v807 = vsel %vm804, %v803, %v796
      %v812 = vsel %vm804, %v796, %v799
      %s813 = scalar_lea.vmem %s4, 35
      %v814 = vld [vmem:[%s813] ss:$8 sm:$0xf]
      %v816 = vlaneseq
      %v817 = vshrl.u32 %v816, 7
      %v818 = vsub.s32 0, %v817
      %v819 = vrot.slane %v814, %v818
      %v820 = vlaneseq
      %v821 = vshrl.u32 %v820, 7
      %v822 = vsub.s32 1, %v821
      %v823 = vrot.slane %v814, %v822
      %v824 = vlaneseq
      %v825 = vshrl.u32 %v824, 7
      %v826 = vsub.s32 2, %v825
      %v827 = vrot.slane %v814, %v826
      %v828 = vlaneseq
      %v829 = vshrl.u32 %v828, 7
      %v830 = vsub.s32 3, %v829
      %v831 = vrot.slane %v814, %v830
      %v836 = vmul.f32 %v812, %v819
      %v837 = vmul.f32 %v805, %v823
      %v838 = vmul.f32 %v806, %v827
      %v839 = vmul.f32 %v807, %v831
      %840 = vrot.lane.b32.xlu0 %v298, 1
      %v841 = vpop.permute.xlu0 %840
      %843 = vrot.lane.b32.xlu0 %v295, 1
      %v844 = vpop.permute.xlu0 %843
      %845 = vrot.lane.b32.xlu0 %v303, 1
      %v846 = vpop.permute.xlu0 %845
      %847 = vrot.lane.b32.xlu0 %v296, 1
      %v848 = vpop.permute.xlu0 %847
      %vm849 = vcmask 7168
      %v850 = vsel %vm849, %v844, %v846
      %v851 = vsel %vm849, %v846, %v848
      %v852 = vsel %vm849, %v848, %v841
      %v857 = vsel %vm849, %v841, %v844
      %s858 = scalar_lea.vmem %s4, 36
      %v859 = vld [vmem:[%s858] ss:$8 sm:$0xf]
      %v861 = vlaneseq
      %v862 = vshrl.u32 %v861, 7
      %v863 = vsub.s32 0, %v862
      %v864 = vrot.slane %v859, %v863
      %v865 = vlaneseq
      %v866 = vshrl.u32 %v865, 7
      %v867 = vsub.s32 1, %v866
      %v868 = vrot.slane %v859, %v867
      %v869 = vlaneseq
      %v870 = vshrl.u32 %v869, 7
      %v871 = vsub.s32 2, %v870
      %v872 = vrot.slane %v859, %v871
      %v873 = vlaneseq
      %v874 = vshrl.u32 %v873, 7
      %v875 = vsub.s32 3, %v874
      %v876 = vrot.slane %v859, %v875
      %v881 = vmul.f32 %v857, %v864
      %v882 = vmul.f32 %v850, %v868
      %v883 = vmul.f32 %v851, %v872
      %v884 = vmul.f32 %v852, %v876
      %885 = vrot.lane.b32.xlu0 %v295, 127
      %v886 = vpop.permute.xlu0 %885
      %887 = vrot.lane.b32.xlu0 %v303, 127
      %v888 = vpop.permute.xlu0 %887
      %889 = vrot.lane.b32.xlu0 %v296, 127
      %v890 = vpop.permute.xlu0 %889
      %891 = vrot.lane.b32.xlu0 %v298, 127
      %v892 = vpop.permute.xlu0 %891
      %vm893 = vcmask 1039360
      %v894 = vsel %vm893, %v886, %v888
      %v895 = vsel %vm893, %v888, %v890
      %v896 = vsel %vm893, %v890, %v892
      %v902 = vsel %vm893, %v892, %v886
      %s903 = scalar_lea.vmem %s4, 38
      %v904 = vld [vmem:[%s903] ss:$8 sm:$0xf]
      %v906 = vlaneseq
      %v907 = vshrl.u32 %v906, 7
      %v908 = vsub.s32 0, %v907
      %v909 = vrot.slane %v904, %v908
      %v910 = vlaneseq
      %v911 = vshrl.u32 %v910, 7
      %v912 = vsub.s32 1, %v911
      %v913 = vrot.slane %v904, %v912
      %v914 = vlaneseq
      %v915 = vshrl.u32 %v914, 7
      %v916 = vsub.s32 2, %v915
      %v917 = vrot.slane %v904, %v916
      %v918 = vlaneseq
      %v919 = vshrl.u32 %v918, 7
      %v920 = vsub.s32 3, %v919
      %v921 = vrot.slane %v904, %v920
      %v926 = vmul.f32 %v894, %v909
      %v927 = vmul.f32 %v895, %v913
      %v928 = vmul.f32 %v896, %v917
      %v929 = vmul.f32 %v902, %v921
      %930 = vrot.lane.b32.xlu0 %v295, 121
      %v931 = vpop.permute.xlu0 %930
      %932 = vrot.lane.b32.xlu0 %v303, 121
      %v933 = vpop.permute.xlu0 %932
      %934 = vrot.lane.b32.xlu0 %v296, 121
      %v935 = vpop.permute.xlu0 %934
      %936 = vrot.lane.b32.xlu0 %v298, 121
      %v937 = vpop.permute.xlu0 %936
      %vm938 = vcmask 990208
      %v939 = vsel %vm938, %v931, %v933
      %v940 = vsel %vm938, %v933, %v935
      %v941 = vsel %vm938, %v935, %v937
      %v947 = vsel %vm938, %v937, %v931
      %s948 = scalar_lea.vmem %s4, 39
      %v949 = vld [vmem:[%s948] ss:$8 sm:$0xf]
      %v951 = vlaneseq
      %v952 = vshrl.u32 %v951, 7
      %v953 = vsub.s32 0, %v952
      %v954 = vrot.slane %v949, %v953
      %v955 = vlaneseq
      %v956 = vshrl.u32 %v955, 7
      %v957 = vsub.s32 1, %v956
      %v958 = vrot.slane %v949, %v957
      %v959 = vlaneseq
      %v960 = vshrl.u32 %v959, 7
      %v961 = vsub.s32 2, %v960
      %v962 = vrot.slane %v949, %v961
      %v963 = vlaneseq
      %v964 = vshrl.u32 %v963, 7
      %v965 = vsub.s32 3, %v964
      %v966 = vrot.slane %v949, %v965
      %v971 = vmul.f32 %v939, %v954
      %v972 = vmul.f32 %v940, %v958
      %v973 = vmul.f32 %v941, %v962
      %v974 = vmul.f32 %v947, %v966
      %975 = vrot.lane.b32.xlu0 %v295, 120
      %v976 = vpop.permute.xlu0 %975
      %977 = vrot.lane.b32.xlu0 %v303, 120
      %v978 = vpop.permute.xlu0 %977
      %979 = vrot.lane.b32.xlu0 %v296, 120
      %v980 = vpop.permute.xlu0 %979
      %981 = vrot.lane.b32.xlu0 %v298, 120
      %v982 = vpop.permute.xlu0 %981
      %vm983 = vcmask 982016
      %v984 = vsel %vm983, %v976, %v978
      %v985 = vsel %vm983, %v978, %v980
      %v986 = vsel %vm983, %v980, %v982
      %v992 = vsel %vm983, %v982, %v976
      %s993 = scalar_lea.vmem %s4, 64
      %v994 = vld [vmem:[%s993] ss:$8 sm:$0xf]
      %v996 = vlaneseq
      %v997 = vshrl.u32 %v996, 7
      %v998 = vsub.s32 0, %v997
      %v999 = vrot.slane %v994, %v998
      %v1000 = vlaneseq
      %v1001 = vshrl.u32 %v1000, 7
      %v1002 = vsub.s32 1, %v1001
      %v1003 = vrot.slane %v994, %v1002
      %v1004 = vlaneseq
      %v1005 = vshrl.u32 %v1004, 7
      %v1006 = vsub.s32 2, %v1005
      %v1007 = vrot.slane %v994, %v1006
      %v1008 = vlaneseq
      %v1009 = vshrl.u32 %v1008, 7
      %v1010 = vsub.s32 3, %v1009
      %v1011 = vrot.slane %v994, %v1010
      %v1016 = vmul.f32 %v984, %v999
      %v1017 = vmul.f32 %v985, %v1003
      %v1018 = vmul.f32 %v986, %v1007
      %v1019 = vmul.f32 %v992, %v1011
      %1020 = vrot.lane.b32.xlu0 %v295, 119
      %v1021 = vpop.permute.xlu0 %1020
      %1022 = vrot.lane.b32.xlu0 %v303, 119
      %v1023 = vpop.permute.xlu0 %1022
      %1024 = vrot.lane.b32.xlu0 %v296, 119
      %v1025 = vpop.permute.xlu0 %1024
      %1026 = vrot.lane.b32.xlu0 %v298, 119
      %v1027 = vpop.permute.xlu0 %1026
      %vm1028 = vcmask 973824
      %v1029 = vsel %vm1028, %v1021, %v1023
      %v1030 = vsel %vm1028, %v1023, %v1025
      %v1031 = vsel %vm1028, %v1025, %v1027
      %v1037 = vsel %vm1028, %v1027, %v1021
      %s1038 = scalar_lea.vmem %s4, 65
      %v1039 = vld [vmem:[%s1038] ss:$8 sm:$0xf]
      %v1041 = vlaneseq
      %v1042 = vshrl.u32 %v1041, 7
      %v1043 = vsub.s32 0, %v1042
      %v1044 = vrot.slane %v1039, %v1043
      %v1045 = vlaneseq
      %v1046 = vshrl.u32 %v1045, 7
      %v1047 = vsub.s32 1, %v1046
      %v1048 = vrot.slane %v1039, %v1047
      %v1049 = vlaneseq
      %v1050 = vshrl.u32 %v1049, 7
      %v1051 = vsub.s32 2, %v1050
      %v1052 = vrot.slane %v1039, %v1051
      %v1053 = vlaneseq
      %v1054 = vshrl.u32 %v1053, 7
      %v1055 = vsub.s32 3, %v1054
      %v1056 = vrot.slane %v1039, %v1055
      %v1061 = vmul.f32 %v1029, %v1044
      %v1062 = vmul.f32 %v1030, %v1048
      %v1063 = vmul.f32 %v1031, %v1052
      %v1064 = vmul.f32 %v1037, %v1056
      %s1065 = scalar_lea.vmem %s4, 66
      %v1066 = vld [vmem:[%s1065] ss:$8 sm:$0xf]
      %v1068 = vlaneseq
      %v1069 = vshrl.u32 %v1068, 7
      %v1070 = vsub.s32 0, %v1069
      %v1071 = vrot.slane %v1066, %v1070
      %v1072 = vlaneseq
      %v1073 = vshrl.u32 %v1072, 7
      %v1074 = vsub.s32 1, %v1073
      %v1075 = vrot.slane %v1066, %v1074
      %v1076 = vlaneseq
      %v1077 = vshrl.u32 %v1076, 7
      %v1078 = vsub.s32 2, %v1077
      %v1079 = vrot.slane %v1066, %v1078
      %v1080 = vlaneseq
      %v1081 = vshrl.u32 %v1080, 7
      %v1082 = vsub.s32 3, %v1081
      %v1083 = vrot.slane %v1066, %v1082
      %v1088 = vmul.f32 %v311, %v1071
      %v1089 = vmul.f32 %v312, %v1075
      %v1090 = vmul.f32 %v313, %v1079
      %v1091 = vmul.f32 %v318, %v1083
      %s1092 = scalar_lea.vmem %s4, 67
      %v1093 = vld [vmem:[%s1092] ss:$8 sm:$0xf]
      %v1095 = vlaneseq
      %v1096 = vshrl.u32 %v1095, 7
      %v1097 = vsub.s32 0, %v1096
      %v1098 = vrot.slane %v1093, %v1097
      %v1099 = vlaneseq
      %v1100 = vshrl.u32 %v1099, 7
      %v1101 = vsub.s32 1, %v1100
      %v1102 = vrot.slane %v1093, %v1101
      %v1103 = vlaneseq
      %v1104 = vshrl.u32 %v1103, 7
      %v1105 = vsub.s32 2, %v1104
      %v1106 = vrot.slane %v1093, %v1105
      %v1107 = vlaneseq
      %v1108 = vshrl.u32 %v1107, 7
      %v1109 = vsub.s32 3, %v1108
      %v1110 = vrot.slane %v1093, %v1109
      %v1115 = vmul.f32 %v355, %v1098
      %v1116 = vmul.f32 %v356, %v1102
      %v1117 = vmul.f32 %v357, %v1106
      %v1118 = vmul.f32 %v362, %v1110
      %s1119 = scalar_lea.vmem %s4, 68
      %v1120 = vld [vmem:[%s1119] ss:$8 sm:$0xf]
      %v1122 = vlaneseq
      %v1123 = vshrl.u32 %v1122, 7
      %v1124 = vsub.s32 0, %v1123
      %v1125 = vrot.slane %v1120, %v1124
      %v1126 = vlaneseq
      %v1127 = vshrl.u32 %v1126, 7
      %v1128 = vsub.s32 1, %v1127
      %v1129 = vrot.slane %v1120, %v1128
      %v1130 = vlaneseq
      %v1131 = vshrl.u32 %v1130, 7
      %v1132 = vsub.s32 2, %v1131
      %v1133 = vrot.slane %v1120, %v1132
      %v1134 = vlaneseq
      %v1135 = vshrl.u32 %v1134, 7
      %v1136 = vsub.s32 3, %v1135
      %v1137 = vrot.slane %v1120, %v1136
      %v1142 = vmul.f32 %v400, %v1125
      %v1143 = vmul.f32 %v401, %v1129
      %v1144 = vmul.f32 %v402, %v1133
      %v1145 = vmul.f32 %v407, %v1137
      %s1146 = scalar_lea.vmem %s4, 69
      %v1147 = vld [vmem:[%s1146] ss:$8 sm:$0xf]
      %v1149 = vlaneseq
      %v1150 = vshrl.u32 %v1149, 7
      %v1151 = vsub.s32 0, %v1150
      %v1152 = vrot.slane %v1147, %v1151
      %v1153 = vlaneseq
      %v1154 = vshrl.u32 %v1153, 7
      %v1155 = vsub.s32 1, %v1154
      %v1156 = vrot.slane %v1147, %v1155
      %v1157 = vlaneseq
      %v1158 = vshrl.u32 %v1157, 7
      %v1159 = vsub.s32 2, %v1158
      %v1160 = vrot.slane %v1147, %v1159
      %v1161 = vlaneseq
      %v1162 = vshrl.u32 %v1161, 7
      %v1163 = vsub.s32 3, %v1162
      %v1164 = vrot.slane %v1147, %v1163
      %v1169 = vmul.f32 %v445, %v1152
      %v1170 = vmul.f32 %v446, %v1156
      %v1171 = vmul.f32 %v447, %v1160
      %v1172 = vmul.f32 %v452, %v1164
      %s1173 = scalar_lea.vmem %s4, 70
      %v1174 = vld [vmem:[%s1173] ss:$8 sm:$0xf]
      %v1176 = vlaneseq
      %v1177 = vshrl.u32 %v1176, 7
      %v1178 = vsub.s32 0, %v1177
      %v1179 = vrot.slane %v1174, %v1178
      %v1180 = vlaneseq
      %v1181 = vshrl.u32 %v1180, 7
      %v1182 = vsub.s32 1, %v1181
      %v1183 = vrot.slane %v1174, %v1182
      %v1184 = vlaneseq
      %v1185 = vshrl.u32 %v1184, 7
      %v1186 = vsub.s32 2, %v1185
      %v1187 = vrot.slane %v1174, %v1186
      %v1188 = vlaneseq
      %v1189 = vshrl.u32 %v1188, 7
      %v1190 = vsub.s32 3, %v1189
      %v1191 = vrot.slane %v1174, %v1190
      %v1196 = vmul.f32 %v490, %v1179
      %v1197 = vmul.f32 %v491, %v1183
      %v1198 = vmul.f32 %v492, %v1187
      %v1199 = vmul.f32 %v497, %v1191
      %s1200 = scalar_lea.vmem %s4, 71
      %v1201 = vld [vmem:[%s1200] ss:$8 sm:$0xf]
      %v1203 = vlaneseq
      %v1204 = vshrl.u32 %v1203, 7
      %v1205 = vsub.s32 0, %v1204
      %v1206 = vrot.slane %v1201, %v1205
      %v1207 = vlaneseq
      %v1208 = vshrl.u32 %v1207, 7
      %v1209 = vsub.s32 1, %v1208
      %v1210 = vrot.slane %v1201, %v1209
      %v1211 = vlaneseq
      %v1212 = vshrl.u32 %v1211, 7
      %v1213 = vsub.s32 2, %v1212
      %v1214 = vrot.slane %v1201, %v1213
      %v1215 = vlaneseq
      %v1216 = vshrl.u32 %v1215, 7
      %v1217 = vsub.s32 3, %v1216
      %v1218 = vrot.slane %v1201, %v1217
      %v1223 = vmul.f32 %v535, %v1206
      %v1224 = vmul.f32 %v536, %v1210
      %v1225 = vmul.f32 %v537, %v1214
      %v1226 = vmul.f32 %v542, %v1218
      %s1227 = scalar_lea.vmem %s4, 96
      %v1228 = vld [vmem:[%s1227] ss:$8 sm:$0xf]
      %v1230 = vlaneseq
      %v1231 = vshrl.u32 %v1230, 7
      %v1232 = vsub.s32 0, %v1231
      %v1233 = vrot.slane %v1228, %v1232
      %v1234 = vlaneseq
      %v1235 = vshrl.u32 %v1234, 7
      %v1236 = vsub.s32 1, %v1235
      %v1237 = vrot.slane %v1228, %v1236
      %v1238 = vlaneseq
      %v1239 = vshrl.u32 %v1238, 7
      %v1240 = vsub.s32 2, %v1239
      %v1241 = vrot.slane %v1228, %v1240
      %v1242 = vlaneseq
      %v1243 = vshrl.u32 %v1242, 7
      %v1244 = vsub.s32 3, %v1243
      %v1245 = vrot.slane %v1228, %v1244
      %v1250 = vmul.f32 %v580, %v1233
      %v1251 = vmul.f32 %v581, %v1237
      %v1252 = vmul.f32 %v582, %v1241
      %v1253 = vmul.f32 %v587, %v1245
      %s1254 = scalar_lea.vmem %s4, 97
      %v1255 = vld [vmem:[%s1254] ss:$8 sm:$0xf]
      %v1257 = vlaneseq
      %v1258 = vshrl.u32 %v1257, 7
      %v1259 = vsub.s32 0, %v1258
      %v1260 = vrot.slane %v1255, %v1259
      %v1261 = vlaneseq
      %v1262 = vshrl.u32 %v1261, 7
      %v1263 = vsub.s32 1, %v1262
      %v1264 = vrot.slane %v1255, %v1263
      %v1265 = vlaneseq
      %v1266 = vshrl.u32 %v1265, 7
      %v1267 = vsub.s32 2, %v1266
      %v1268 = vrot.slane %v1255, %v1267
      %v1269 = vlaneseq
      %v1270 = vshrl.u32 %v1269, 7
      %v1271 = vsub.s32 3, %v1270
      %v1272 = vrot.slane %v1255, %v1271
      %v1277 = vmul.f32 %v625, %v1260
      %v1278 = vmul.f32 %v626, %v1264
      %v1279 = vmul.f32 %v627, %v1268
      %v1280 = vmul.f32 %v632, %v1272
      %s1281 = scalar_lea.vmem %s4, 98
      %v1282 = vld [vmem:[%s1281] ss:$8 sm:$0xf]
      %v1284 = vlaneseq
      %v1285 = vshrl.u32 %v1284, 7
      %v1286 = vsub.s32 0, %v1285
      %v1287 = vrot.slane %v1282, %v1286
      %v1288 = vlaneseq
      %v1289 = vshrl.u32 %v1288, 7
      %v1290 = vsub.s32 1, %v1289
      %v1291 = vrot.slane %v1282, %v1290
      %v1292 = vlaneseq
      %v1293 = vshrl.u32 %v1292, 7
      %v1294 = vsub.s32 2, %v1293
      %v1295 = vrot.slane %v1282, %v1294
      %v1296 = vlaneseq
      %v1297 = vshrl.u32 %v1296, 7
      %v1298 = vsub.s32 3, %v1297
      %v1299 = vrot.slane %v1282, %v1298
      %v1304 = vmul.f32 %v670, %v1287
      %v1305 = vmul.f32 %v671, %v1291
      %v1306 = vmul.f32 %v672, %v1295
      %v1307 = vmul.f32 %v677, %v1299
      %v1312 = vrot.slane %v386, 4
      %v1313 = vrot.slane %v387, 4
      %v1314 = vrot.slane %v388, 4
      %v1315 = vrot.slane %v389, 4
      %v1324 = vrot.slane %v476, 4
      %v1325 = vrot.slane %v477, 4
      %v1326 = vrot.slane %v478, 4
      %v1327 = vrot.slane %v479, 4
      %v1336 = vrot.slane %v566, 4
      %v1337 = vrot.slane %v567, 4
      %v1338 = vrot.slane %v568, 4
      %v1339 = vrot.slane %v569, 4
      %v1348 = vrot.slane %v656, 4
      %v1349 = vrot.slane %v657, 4
      %v1350 = vrot.slane %v658, 4
      %v1351 = vrot.slane %v659, 4
      %v1360 = vrot.slane %v746, 4
      %v1361 = vrot.slane %v747, 4
      %v1362 = vrot.slane %v748, 4
      %v1363 = vrot.slane %v749, 4
      %v1372 = vrot.slane %v836, 4
      %v1373 = vrot.slane %v837, 4
      %v1374 = vrot.slane %v838, 4
      %v1375 = vrot.slane %v839, 4
      %v1380 = vcombine.low %v295, %v295
      %v1381 = vcombine.low %v296, %v296
      %v1388 = vrot.slane %v971, 4
      %v1389 = vrot.slane %v972, 4
      %v1390 = vrot.slane %v973, 4
      %v1391 = vrot.slane %v974, 4
      %vm1396 = vcmask 1043456
      %v1397 = vsel %vm1396, %v341, %v1312
      %v1398 = vsel %vm1396, %v342, %v1313
      %v1399 = vsel %vm1396, %v343, %v1314
      %v1400 = vsel %vm1396, %v344, %v1315
      %v1401 = vsel %vm1396, %v431, %v1324
      %v1402 = vsel %vm1396, %v432, %v1325
      %v1403 = vsel %vm1396, %v433, %v1326
      %v1404 = vsel %vm1396, %v434, %v1327
      %v1405 = vsel %vm1396, %v521, %v1336
      %v1406 = vsel %vm1396, %v522, %v1337
      %v1407 = vsel %vm1396, %v523, %v1338
      %v1408 = vsel %vm1396, %v524, %v1339
      %v1409 = vsel %vm1396, %v611, %v1348
      %v1410 = vsel %vm1396, %v612, %v1349
      %v1411 = vsel %vm1396, %v613, %v1350
      %v1412 = vsel %vm1396, %v614, %v1351
      %v1413 = vsel %vm1396, %v701, %v1360
      %v1414 = vsel %vm1396, %v702, %v1361
      %v1415 = vsel %vm1396, %v703, %v1362
      %v1416 = vsel %vm1396, %v704, %v1363
      %v1417 = vsel %vm1396, %v791, %v1372
      %v1418 = vsel %vm1396, %v792, %v1373
      %v1419 = vsel %vm1396, %v793, %v1374
      %v1420 = vsel %vm1396, %v794, %v1375
      %v1421 = vsel %vm1396, %v881, %v1380
      %v1422 = vsel %vm1396, %v882, %v295
      %v1423 = vsel %vm1396, %v883, %v1381
      %v1424 = vsel %vm1396, %v884, %v296
      %v1425 = vsel %vm1396, %v926, %v1388
      %v1426 = vsel %vm1396, %v927, %v1389
      %v1427 = vsel %vm1396, %v928, %v1390
      %v1428 = vsel %vm1396, %v929, %v1391
      %v1433 = vrot.slane %v1061, 4
      %v1434 = vrot.slane %v1062, 4
      %v1435 = vrot.slane %v1063, 4
      %v1436 = vrot.slane %v1064, 4
      %v1445 = vrot.slane %v1115, 4
      %v1446 = vrot.slane %v1116, 4
      %v1447 = vrot.slane %v1117, 4
      %v1448 = vrot.slane %v1118, 4
      %v1457 = vrot.slane %v1169, 4
      %v1458 = vrot.slane %v1170, 4
      %v1459 = vrot.slane %v1171, 4
      %v1460 = vrot.slane %v1172, 4
      %v1469 = vrot.slane %v1223, 4
      %v1470 = vrot.slane %v1224, 4
      %v1471 = vrot.slane %v1225, 4
      %v1472 = vrot.slane %v1226, 4
      %v1481 = vrot.slane %v1277, 4
      %v1482 = vrot.slane %v1278, 4
      %v1483 = vrot.slane %v1279, 4
      %v1484 = vrot.slane %v1280, 4
      %v1489 = vsel %vm1396, %v1016, %v1433
      %v1490 = vsel %vm1396, %v1017, %v1434
      %v1491 = vsel %vm1396, %v1018, %v1435
      %v1492 = vsel %vm1396, %v1019, %v1436
      %v1493 = vsel %vm1396, %v1088, %v1445
      %v1494 = vsel %vm1396, %v1089, %v1446
      %v1495 = vsel %vm1396, %v1090, %v1447
      %v1496 = vsel %vm1396, %v1091, %v1448
      %v1497 = vsel %vm1396, %v1142, %v1457
      %v1498 = vsel %vm1396, %v1143, %v1458
      %v1499 = vsel %vm1396, %v1144, %v1459
      %v1500 = vsel %vm1396, %v1145, %v1460
      %v1501 = vsel %vm1396, %v1196, %v1469
      %v1502 = vsel %vm1396, %v1197, %v1470
      %v1503 = vsel %vm1396, %v1198, %v1471
      %v1504 = vsel %vm1396, %v1199, %v1472
      %v1505 = vsel %vm1396, %v1250, %v1481
      %v1506 = vsel %vm1396, %v1251, %v1482
      %v1507 = vsel %vm1396, %v1252, %v1483
      %v1508 = vsel %vm1396, %v1253, %v1484
      %v1509 = vld [vmem:[%s3] sm:$0xf]
      %vm1510 = vcmask 883712
      %v1512 = vsel %vm1510, %v1509, 0
      %v1515 = vsel %vm1396, %v1304, 0
      %v1518 = vsel %vm1396, %v1305, 0
      %v1521 = vsel %vm1396, %v1306, 0
      %v1524 = vsel %vm1396, %v1307, 0
      %1526 = vmatprep.subr.mxu0 0.0
      %1527 = vmatpush1.msra.mxu0 0.0
      %1528 = vmatprep.subr.mxu0 0.0
      %1529 = vmatpush1.msra.mxu0 0.0
      %1530 = vmatprep.subr.mxu0 %v1518
      %1531 = vmatpush1.msra.mxu0 %v1515
      %1532 = vmatprep.subr.mxu0 %v1506
      %1533 = vmatpush1.msra.mxu0 %v1505
      %1534 = vmatprep.subr.mxu0 %v1502
      %1535 = vmatpush1.msra.mxu0 %v1501
      %1536 = vmatprep.subr.mxu0 %v1498
      %1537 = vmatpush1.msra.mxu0 %v1497
      %1538 = vmatprep.subr.mxu0 %v1494
      %1539 = vmatpush1.msra.mxu0 %v1493
      %1540 = vmatprep.subr.mxu0 %v1490
      %1541 = vmatpush1.msra.mxu0 %v1489
      %1542 = vmatprep.subr.mxu0 %v1426
      %1543 = vmatpush1.msra.mxu0 %v1425
      %1544 = vmatprep.subr.mxu0 %v1422
      %1545 = vmatpush1.msra.mxu0 %v1421
      %1546 = vmatprep.subr.mxu0 %v1418
      %1547 = vmatpush1.msra.mxu0 %v1417
      %1548 = vmatprep.subr.mxu0 %v1414
      %1549 = vmatpush1.msra.mxu0 %v1413
      %1550 = vmatprep.subr.mxu0 %v1410
      %1551 = vmatpush1.msra.mxu0 %v1409
      %1552 = vmatprep.subr.mxu0 %v1406
      %1553 = vmatpush1.msra.mxu0 %v1405
      %1554 = vmatprep.subr.mxu0 %v1402
      %1555 = vmatpush1.msra.mxu0 %v1401
      %1556 = vmatprep.subr.mxu0 %v1398
      %1557 = vmatpush1.msra.mxu0 %v1397
      %1558 = vmatprep.subr.mxu0 0.0
      %1559 = vmatpush2.msra.mxu0 0.0
      %1560 = vmatprep.subr.mxu0 0.0
      %1561 = vmatpush2.msra.mxu0 0.0
      %1562 = vmatprep.subr.mxu0 0.0
      %1563 = vmatpush2.msra.mxu0 0.0
      %1564 = vmatprep.subr.mxu0 0.0
      %1565 = vmatpush2.msra.mxu0 0.0
      %1566 = vmatprep.subr.mxu0 0.0
      %1567 = vmatpush2.msra.mxu0 0.0
      %1568 = vmatprep.subr.mxu0 0.0
      %1569 = vmatpush2.msra.mxu0 0.0
      %1570 = vmatprep.subr.mxu0 0.0
      %1571 = vmatpush2.msra.mxu0 0.0
      %1572 = vmatprep.subr.mxu0 0.0
      %1573 = vmatpush2.msra.mxu0 0.0
      %1574 = vmatprep.subr.mxu0 0.0
      %1575 = vmatpush2.msra.mxu0 0.0
      %1576 = vmatprep.subr.mxu0 0.0
      %1577 = vmatpush2.msra.mxu0 0.0
      %1578 = vmatprep.subr.mxu0 0.0
      %1579 = vmatpush2.msra.mxu0 0.0
      %1580 = vmatprep.subr.mxu0 0.0
      %1581 = vmatpush2.msra.mxu0 0.0
      %1582 = vmatprep.subr.mxu0 0.0
      %1583 = vmatpush2.msra.mxu0 0.0
      %1584 = vmatprep.subr.mxu0 0.0
      %1585 = vmatpush2.msra.mxu0 0.0
      %1586 = vmatprep.subr.mxu0 0.0
      %1587 = vmatpush2.msra.mxu0 0.0
      %1588 = vmatprep.subr.mxu0 0.0
      %1589 = vmatpush2.msra.mxu0 0.0
      %1590 = vmatprep.mubr.f32.mxu0 0.0
      %1591 = vmatmul.mubr.f32.gmra.mxu0 %v1512
      %v1592 = vpop.f32.mrf.mxu0
      %v1593 = vadd.f32 0.0, %v1592
      %v1594 = vpop.f32.mrf.mxu0
      %v1595 = vadd.f32 0.0, %v1594
      %1596 = vdwg.mxu0
      %1597 = vmatprep.subr.mxu0 0.0
      %1598 = vmatpush1.msra.mxu0 0.0
      %1599 = vmatprep.subr.mxu0 0.0
      %1600 = vmatpush1.msra.mxu0 0.0
      %1601 = vmatprep.subr.mxu0 %v1524
      %1602 = vmatpush1.msra.mxu0 %v1521
      %1603 = vmatprep.subr.mxu0 %v1508
      %1604 = vmatpush1.msra.mxu0 %v1507
      %1605 = vmatprep.subr.mxu0 %v1504
      %1606 = vmatpush1.msra.mxu0 %v1503
      %1607 = vmatprep.subr.mxu0 %v1500
      %1608 = vmatpush1.msra.mxu0 %v1499
      %1609 = vmatprep.subr.mxu0 %v1496
      %1610 = vmatpush1.msra.mxu0 %v1495
      %1611 = vmatprep.subr.mxu0 %v1492
      %1612 = vmatpush1.msra.mxu0 %v1491
      %1613 = vmatprep.subr.mxu0 %v1428
      %1614 = vmatpush1.msra.mxu0 %v1427
      %1615 = vmatprep.subr.mxu0 %v1424
      %1616 = vmatpush1.msra.mxu0 %v1423
      %1617 = vmatprep.subr.mxu0 %v1420
      %1618 = vmatpush1.msra.mxu0 %v1419
      %1619 = vmatprep.subr.mxu0 %v1416
      %1620 = vmatpush1.msra.mxu0 %v1415
      %1621 = vmatprep.subr.mxu0 %v1412
      %1622 = vmatpush1.msra.mxu0 %v1411
      %1623 = vmatprep.subr.mxu0 %v1408
      %1624 = vmatpush1.msra.mxu0 %v1407
      %1625 = vmatprep.subr.mxu0 %v1404
      %1626 = vmatpush1.msra.mxu0 %v1403
      %1627 = vmatprep.subr.mxu0 %v1400
      %1628 = vmatpush1.msra.mxu0 %v1399
      %1629 = vmatprep.subr.mxu0 0.0
      %1630 = vmatpush2.msra.mxu0 0.0
      %1631 = vmatprep.subr.mxu0 0.0
      %1632 = vmatpush2.msra.mxu0 0.0
      %1633 = vmatprep.subr.mxu0 0.0
      %1634 = vmatpush2.msra.mxu0 0.0
      %1635 = vmatprep.subr.mxu0 0.0
      %1636 = vmatpush2.msra.mxu0 0.0
      %1637 = vmatprep.subr.mxu0 0.0
      %1638 = vmatpush2.msra.mxu0 0.0
      %1639 = vmatprep.subr.mxu0 0.0
      %1640 = vmatpush2.msra.mxu0 0.0
      %1641 = vmatprep.subr.mxu0 0.0
      %1642 = vmatpush2.msra.mxu0 0.0
      %1643 = vmatprep.subr.mxu0 0.0
      %1644 = vmatpush2.msra.mxu0 0.0
      %1645 = vmatprep.subr.mxu0 0.0
      %1646 = vmatpush2.msra.mxu0 0.0
      %1647 = vmatprep.subr.mxu0 0.0
      %1648 = vmatpush2.msra.mxu0 0.0
      %1649 = vmatprep.subr.mxu0 0.0
      %1650 = vmatpush2.msra.mxu0 0.0
      %1651 = vmatprep.subr.mxu0 0.0
      %1652 = vmatpush2.msra.mxu0 0.0
      %1653 = vmatprep.subr.mxu0 0.0
      %1654 = vmatpush2.msra.mxu0 0.0
      %1655 = vmatprep.subr.mxu0 0.0
      %1656 = vmatpush2.msra.mxu0 0.0
      %1657 = vmatprep.subr.mxu0 0.0
      %1658 = vmatpush2.msra.mxu0 0.0
      %1659 = vmatprep.subr.mxu0 0.0
      %1660 = vmatpush2.msra.mxu0 0.0
      %1661 = vmatprep.mubr.f32.mxu0 0.0
      %1662 = vmatmul.mubr.f32.gmra.mxu0 %v1512
      %v1663 = vpop.f32.mrf.mxu0
      %v1664 = vadd.f32 0.0, %v1663
      %v1665 = vpop.f32.mrf.mxu0
      %v1666 = vadd.f32 0.0, %v1665
      %1667 = vdwg.mxu0
      %v1668 = vsel %vm1396, %v1593, 0.0
      %v1669 = vsel %vm1396, %v1595, 0.0
      %v1670 = vadd.f32 %v1668, %v1669
      %v1671 = vsel %vm1396, %v1664, 0.0
      %v1672 = vadd.f32 %v1670, %v1671
      %v1673 = vsel %vm1396, %v1666, 0.0
      %v1674 = vadd.f32 %v1672, %v1673
      %1675 = vadd.xlane.f32.xlu0 %v1674
      %v1676 = vpop.xlane.xlu0 %1675
      %v1677 = vmul.f32 %v1593, %v1593
      %v1678 = vmul.f32 %v1595, %v1595
      %v1679 = vmul.f32 %v1664, %v1664
      %v1680 = vmul.f32 %v1666, %v1666
      %v1681 = vsel %vm1396, %v1677, 0.0
      %v1682 = vsel %vm1396, %v1678, 0.0
      %v1683 = vadd.f32 %v1681, %v1682
      %v1684 = vsel %vm1396, %v1679, 0.0
      %v1685 = vadd.f32 %v1683, %v1684
      %v1686 = vsel %vm1396, %v1680, 0.0
      %v1687 = vadd.f32 %v1685, %v1686
      %1688 = vadd.xlane.f32.xlu0 %v1687
      %v1689 = vpop.xlane.xlu0 %1688
      %v1690 = vsel %vm849, %v1676, %v1689
      %vm1691 = vcmask 11264
      %1692 = vst.msk [vmem:[%s262] sm:$0xf] %vm1691, %v1690
      %v1697 = vcombine.low %v1593, %v1595
      %v1698 = vcombine.low %v1664, %v1666
      %1701 = vst [vmem:[%s258] sm:$0xff] %v1697
      %1702 = vst [vmem:[%s258 + $0x8] sm:$0xff] %v1698
      %p1703 = scmp.lt.s32.totalorder %s18, 1
      %s1704 = scalar_select %p1703, %s18, 1
      %s1705 = smul.addr %s1704, 4
      %s1706 = smul.addr %s1705, 4
      %s1707 = scalar_lea.vmem %s5, %s1706
      %p1708 = scmp.lt.s32.totalorder %s18, 1
      %s1709 = scalar_select %p1708, %s18, 1
      %s1710 = smul.addr %s1709, 4
      %s1711 = scalar_lea.vmem %s6, %s1710
      // Predicated region
      $region41: #{resblock3d.4} parent=39 // pred_check
        %p1712 = pneg %p146
      $region42: #{resblock3d.4} parent=39 // pred_check_branch
        %1714 = sbr.rel (%p1712) target = $region44
      $region43: #{resblock3d.4} parent=39 // pred_region
        _
      $region44: #{resblock3d.4} parent=39 // pred_fallthru
        _
      // Predicated region
      $region45: #{resblock3d.4} parent=39 // pred_check
        %p1715 = pneg %p172
      $region46: #{resblock3d.4} parent=39 // pred_check_branch
        %1717 = sbr.rel (%p1715) target = $region48
      $region47: #{resblock3d.4} parent=39 // pred_region
        _
      $region48: #{resblock3d.4} parent=39 // pred_fallthru
        _
    $region40: #{resblock3d.4} parent=5 // pred_fallthru
      _
    %p1718 = scmp.le.s32.totalorder 2, %s13
    // Predicated region
    $region49: #{resblock3d.4} parent=5 // pred_check
      %p1719 = pneg %p1718
    $region50: #{resblock3d.4} parent=5 // pred_check_branch
      %1721 = sbr.rel (%p1719) target = $region52
    $region51: #{resblock3d.4} parent=5 // pred_region
      %s1722 = ssub.s32 %s13, 2
      // Predicated region
      $region53: #{resblock3d.4} parent=51 // pred_check
        %p1723 = pneg %p152
      $region54: #{resblock3d.4} parent=51 // pred_check_branch
        %1725 = sbr.rel (%p1723) target = $region56
      $region55: #{resblock3d.4} parent=51 // pred_region
        %p1726 = scmp.lt.s32.totalorder %s19, 1
        %s1727 = scalar_select %p1726, %s19, 1
        %s1728 = smul.addr %s1727, 4
        %s1729 = smul.addr %s1728, 4
        %s1730 = scalar_lea.vmem %s5, %s1729
      $region56: #{resblock3d.4} parent=51 // pred_fallthru
        _
      // Predicated region
      $region57: #{resblock3d.4} parent=51 // pred_check
        %p1731 = pneg %p178
      $region58: #{resblock3d.4} parent=51 // pred_check_branch
        %1733 = sbr.rel (%p1731) target = $region60
      $region59: #{resblock3d.4} parent=51 // pred_region
        %p1734 = scmp.lt.s32.totalorder %s19, 1
        %s1735 = scalar_select %p1734, %s19, 1
        %s1736 = smul.addr %s1735, 4
        %s1737 = scalar_lea.vmem %s6, %s1736
      $region60: #{resblock3d.4} parent=51 // pred_fallthru
        _
    $region52: #{resblock3d.4} parent=5 // pred_fallthru
      _
  $region6: #{resblock3d.4} parent=0 // loop_footer
    %s17 = sadd.s32 1, %s13
  $region7: #{resblock3d.4} parent=0 // loop_footer_branch
    %12 = sbr.rel target = $region3
  $region8: #{resblock3d.4} parent=0 // loop_exit
    _

</llo_original>
